<compile_context>
chip_gen: v6e
topology: v6e:2x2x1
jax: 0.10.0
libtpu: 0.0.40
codegen_flags: <defaults>
</compile_context>

<pallas_src>
import jax
import jax.numpy as jnp
from jax.experimental import pallas as pl
from jax.experimental.pallas import tpu as pltpu

K = 3            # conv kernel size (padding = 1 -> "same")
EPS = 1e-5       # torch.nn.InstanceNorm2d default eps
NHIDDEN = 128    # nhidden is hard-coded to 128 in the PyTorch module
MATMUL_DTYPE = jnp.bfloat16   # MXU operand dtype (accumulation stays f32)


def spade_kernel(x_ref, seg_ref, mean_ref, rstd_ref, w1_ref, b1_ref,
                 w2_ref, b2_ref, o_ref, actv_ref):
    """One grid step = (batch element b, row tile t) of TH output rows.

    x_ref    : (1, nc, TH*W)            x, channels-first, lane-dense flat spatial
    seg_ref  : (1, TH+4, W+2, Cseg)     resized segmap rows for this tile (2-row /
                                        1-col zero halo), channels-last, bf16
    mean_ref : (1, nc, 1)               per-(instance, channel) mean of x        (f32)
    rstd_ref : (1, nc, 1)               per-(instance, channel) rsqrt(var + eps) (f32)
    w1_ref   : (9*Cseg, 128)            shared conv: all 9 taps folded into contraction
    b1_ref   : (1, 128)                 shared conv bias (f32)
    w2_ref   : (3, 2*nc, 3*128)         gamma & beta conv: kx folded into contraction
    b2_ref   : (2*nc, 1)                gamma & beta conv bias (f32)
    o_ref    : (1, nc, TH*W)            output block, channels-first, lane-dense
    actv_ref : (TH+2, W+2, 128)         bf16 VMEM scratch: hidden activation + halo
    """
    thp, wp, nh = actv_ref.shape
    th, w = thp - 2, wp - 2
    c_seg = seg_ref.shape[-1]
    nc = o_ref.shape[1]
    s_t = th * w
    t = pl.program_id(1)
    nt = pl.num_programs(1)

    # ---- mlp_shared 3x3 conv: ONE matmul, all 9 taps folded into the contraction.
    # Computes TH+2 rows (1-row overlap on each side) so conv2's row halo is local.
    seg = seg_ref[0]                                              # (TH+4, W+2, Cseg) bf16
    taps = []
    for ky in range(K):
        for kx in range(K):
            taps.append(seg[ky:ky + th + 2, kx:kx + w, :].reshape((th + 2) * w, c_seg))
    patch1 = jnp.concatenate(taps, axis=-1)                       # ((TH+2)*W, 9*Cseg)
    acc1 = jnp.dot(patch1, w1_ref[...], preferred_element_type=jnp.float32)
    actv = jnp.maximum(acc1 + b1_ref[...], 0.0)                   # bias + ReLU (f32)
    actv_ref[0:th + 2, 1:w + 1, :] = actv.reshape(th + 2, w, nh).astype(actv_ref.dtype)

    # Only the halo needs zeroing (interior is fully overwritten every step).
    # Column halo: always zero.  Row halo: the rows just *outside* the image
    # (top of first tile / bottom of last tile) must be exactly zero -- they are
    # conv2's "same" padding, not conv1 evaluated outside the image.
    zcol = jnp.zeros((th + 2, 1, nh), actv_ref.dtype)
    actv_ref[:, 0:1, :] = zcol
    actv_ref[:, w + 1:w + 2, :] = zcol

    @pl.when(t == 0)
    def _():
        actv_ref[0:1, :, :] = jnp.zeros((1, wp, nh), actv_ref.dtype)

    @pl.when(t == nt - 1)
    def _():
        actv_ref[th + 1:th + 2, :, :] = jnp.zeros((1, wp, nh), actv_ref.dtype)

    # ---- mlp_gamma & mlp_beta fused (2*nc outputs): loop over ky only, kx folded
    # into the contraction -> (TH*W, 384) patches, 384-deep MXU contraction.
    # Output computed directly in (2*nc, TH*W) orientation (A @ B^T), bias folded
    # into the accumulator init.
    acc2 = jnp.broadcast_to(b2_ref[...], (2 * nc, s_t)).astype(jnp.float32)
    for ky in range(K):
        cols = [actv_ref[ky:ky + th, kx:kx + w, :].reshape(s_t, nh) for kx in range(K)]
        patch2 = jnp.concatenate(cols, axis=-1)                   # (TH*W, 3*128) bf16
        acc2 = acc2 + jax.lax.dot_general(
            w2_ref[ky], patch2,                                   # (2*nc, 384) x (TH*W, 384)
            dimension_numbers=(((1,), (1,)), ((), ())),
            preferred_element_type=jnp.float32)                   # -> (2*nc, TH*W)
    gamma = acc2[:nc, :]
    beta = acc2[nc:, :]

    # ---- fused InstanceNorm (precomputed per-channel stats) + SPADE affine, f32 VPU.
    xb = x_ref[0].astype(jnp.float32)                             # (nc, TH*W)
    normalized = (xb - mean_ref[0]) * rstd_ref[0]
    o_ref[0] = (normalized * (1.0 + gamma) + beta).astype(o_ref.dtype)


def spade(x, segmap, w_shared, b_shared, w_gamma, b_gamma, w_beta, b_beta,
          *, row_tile=8):
    """x: (B, norm_nc, H, W).  segmap: (B, label_nc, Hs, Ws).  Conv params in OIHW."""
    b_, nc, h, w = x.shape
    label_nc = segmap.shape[1]
    nh = w_shared.shape[0]
    s = h * w

    # Row tile: keep TH*W a multiple of 128 where possible; fall back to full H.
    th = row_tile if (h % row_tile == 0) else h
    nt = h // th

    # ---- F.interpolate(mode='nearest'): src = floor(dst * in/out), one fused gather.
    hin, win = segmap.shape[2], segmap.shape[3]
    ridx = (jnp.arange(h) * hin) // h
    cidx = (jnp.arange(w) * win) // w
    seg = segmap[:, :, ridx[:, None], cidx[None, :]]              # (B, Cseg, H, W)

    # Channels-last, bf16, zero halo (2 rows for the conv1 overlap recompute,
    # 1 col), then gather disjoint per-tile row slabs (cheap glue on the tiny segmap).
    seg_cl = jnp.transpose(seg, (0, 2, 3, 1)).astype(MATMUL_DTYPE)
    seg_pad = jnp.pad(seg_cl, ((0, 0), (2, 2), (1, 1), (0, 0)))   # (B, H+4, W+2, Cseg)
    rows = (jnp.arange(nt) * th)[:, None] + jnp.arange(th + 4)[None, :]
    seg_tiles = seg_pad[:, rows].reshape(b_ * nt, th + 4, w + 2, label_nc)

    # ---- InstanceNorm2d statistics: global spatial reduction (one fused f32 XLA
    # pass), folded into the kernel's final affine expression.
    # TODO(synk): per-(instance, channel) mean/var cannot live inside the
    # spatially-tiled kernel; they are the only compute done outside Pallas.
    xf = x.reshape(b_, nc, s).astype(jnp.float32)
    mean = jnp.mean(xf, axis=-1, keepdims=True)                   # (B, nc, 1)
    var = jnp.mean(jnp.square(xf - mean), axis=-1, keepdims=True)
    rstd = jax.lax.rsqrt(var + EPS)

    x_flat = x.reshape(b_, nc, s)                                 # free reshape, lane-dense

    # ---- conv weights pre-shaped for the in-kernel matmuls (bf16 operands) ----
    # conv1: (ky, kx, cin) folded contraction order matches the in-kernel concat.
    w1 = jnp.transpose(w_shared, (2, 3, 1, 0)).reshape(K * K * label_nc, nh)
    w1 = w1.astype(MATMUL_DTYPE)
    b1 = b_shared.reshape(1, nh).astype(jnp.float32)
    # conv2 (gamma & beta fused along C_out): per-ky weight with (kx, cin) folded.
    w_gb = jnp.concatenate([w_gamma, w_beta], axis=0)             # (2*nc, 128, 3, 3)
    w2 = jnp.transpose(w_gb, (2, 0, 3, 1)).reshape(K, 2 * nc, K * nh)
    w2 = w2.astype(MATMUL_DTYPE)
    b2 = jnp.concatenate([b_gamma, b_beta]).reshape(2 * nc, 1).astype(jnp.float32)

    def run(single_buffer_weights):
        # Grid-invariant operands do not need double buffers.
        const_kw = dict(pipeline_mode=pl.Buffered(1)) if single_buffer_weights else {}
        grid_spec = pltpu.PrefetchScalarGridSpec(
            num_scalar_prefetch=0,
            grid=(b_, nt),
            in_specs=[
                pl.BlockSpec((1, nc, th * w), lambda b, t: (b, 0, t)),
                pl.BlockSpec((1, th + 4, w + 2, label_nc),
                             lambda b, t: (b * nt + t, 0, 0, 0)),
                pl.BlockSpec((1, nc, 1), lambda b, t: (b, 0, 0)),
                pl.BlockSpec((1, nc, 1), lambda b, t: (b, 0, 0)),
                pl.BlockSpec((K * K * label_nc, nh), lambda b, t: (0, 0), **const_kw),
                pl.BlockSpec((1, nh), lambda b, t: (0, 0), **const_kw),
                pl.BlockSpec((K, 2 * nc, K * nh), lambda b, t: (0, 0, 0), **const_kw),
                pl.BlockSpec((2 * nc, 1), lambda b, t: (0, 0), **const_kw),
            ],
            out_specs=pl.BlockSpec((1, nc, th * w), lambda b, t: (b, 0, t)),
            scratch_shapes=[pltpu.VMEM((th + 2, w + 2, nh), MATMUL_DTYPE)],
        )
        return pl.pallas_call(
            spade_kernel,
            out_shape=jax.ShapeDtypeStruct((b_, nc, s), x.dtype),
            grid_spec=grid_spec,
            compiler_params=pltpu.CompilerParams(
                dimension_semantics=("parallel", "parallel"),
                vmem_limit_bytes=48 * 1024 * 1024),
        )(x_flat, seg_tiles, mean, rstd, w1, b1, w2, b2)

    try:
        out_flat = run(True)
    except Exception:
        # Fallback if this JAX/Mosaic build rejects single-buffered BlockSpecs.
        out_flat = run(False)

    return out_flat.reshape(b_, nc, h, w)


def reference(x, segmap, w_shared, b_shared, w_gamma, b_gamma, w_beta, b_beta):
    """Pure-JAX reference matching PyTorch SPADE semantics."""
    b_, nc, h, w = x.shape
    hin, win = segmap.shape[2], segmap.shape[3]
    ridx = (jnp.arange(h) * hin) // h
    cidx = (jnp.arange(w) * win) // w
    seg = segmap[:, :, ridx, :][:, :, :, cidx]

    mean = x.mean(axis=(2, 3), keepdims=True)
    var = ((x - mean) ** 2).mean(axis=(2, 3), keepdims=True)
    normalized = (x - mean) * jax.lax.rsqrt(var + EPS)

    def conv(a, wt, bias):
        out = jax.lax.conv_general_dilated(
            a, wt, window_strides=(1, 1), padding=((1, 1), (1, 1)),
            dimension_numbers=("NCHW", "OIHW", "NCHW"),
            precision=jax.lax.Precision.HIGHEST)
        return out + bias[None, :, None, None]

    actv = jnp.maximum(conv(seg, w_shared, b_shared), 0.0)
    gamma = conv(actv, w_gamma, b_gamma)
    beta = conv(actv, w_beta, b_beta)
    return normalized * (1.0 + gamma) + beta


if __name__ == "__main__":
    B, NORM_NC, LABEL_NC = 2, 8, 4
    H, W = 16, 16
    SEG_H, SEG_W = 8, 8   # segmap at lower resolution -> exercises the nearest resize

    key = jax.random.PRNGKey(0)
    kx_, ks_, k1, k2, k3, k4, k5, k6 = jax.random.split(key, 8)

    x = jax.random.normal(kx_, (B, NORM_NC, H, W), dtype=jnp.float32)
    segmap = jax.random.normal(ks_, (B, LABEL_NC, SEG_H, SEG_W), dtype=jnp.float32)

    def conv_init(kw, kb, c_out, c_in):
        bound = 1.0 / (c_in * K * K) ** 0.5
        wt = jax.random.uniform(kw, (c_out, c_in, K, K), jnp.float32, -bound, bound)
        bs = jax.random.uniform(kb, (c_out,), jnp.float32, -bound, bound)
        return wt, bs

    w_shared, b_shared = conv_init(k1, k2, NHIDDEN, LABEL_NC)
    w_gamma, b_gamma = conv_init(k3, k4, NORM_NC, NHIDDEN)
    w_beta, b_beta = conv_init(k5, k6, NORM_NC, NHIDDEN)

    out = spade(x, segmap, w_shared, b_shared, w_gamma, b_gamma, w_beta, b_beta)
    out = jax.block_until_ready(out)

    ref = reference(x, segmap, w_shared, b_shared, w_gamma, b_gamma, w_beta, b_beta)
    assert out.shape == (B, NORM_NC, H, W)
    max_err = float(jnp.abs(out - ref).max())
    # bf16 MXU operands with f32 accumulation -> tolerance loosened accordingly.
    assert jnp.allclose(out, ref, atol=5e-2, rtol=5e-2), max_err

    print("KERNEL_OK")
</pallas_src>

<mosaic_0001>
module attributes {stable_mosaic.version = 11 : i64} {
  func.func @spade_kernel(%arg0: i32, %arg1: i32, %arg2: memref<1x8x128xf32, #tpu.memory_space<vmem>>, %arg3: memref<1x12x18x4xbf16, #tpu.memory_space<vmem>>, %arg4: memref<1x8x1xf32, #tpu.memory_space<vmem>>, %arg5: memref<1x8x1xf32, #tpu.memory_space<vmem>>, %arg6: memref<36x128xbf16, #tpu.memory_space<vmem>>, %arg7: memref<1x128xf32, #tpu.memory_space<vmem>>, %arg8: memref<3x16x384xbf16, #tpu.memory_space<vmem>>, %arg9: memref<16x1xf32, #tpu.memory_space<vmem>>, %arg10: memref<1x8x128xf32, #tpu.memory_space<vmem>>, %arg11: memref<10x18x128xbf16, #tpu.memory_space<vmem>>) attributes {dimension_semantics = [#tpu.dimension_semantics<parallel>, #tpu.dimension_semantics<parallel>], iteration_bounds = array<i64: 2, 2>, scalar_prefetch = 0 : i64, scratch_operands = 1 : i64, tpu.core_type = #tpu.core_type<tc>, window_params = [{transform_indices = @transform_0, window_bounds = array<i64: 1, 8, 128>}, {transform_indices = @transform_1, window_bounds = array<i64: 1, 12, 18, 4>}, {transform_indices = @transform_2, window_bounds = array<i64: 1, 8, 1>}, {transform_indices = @transform_3, window_bounds = array<i64: 1, 8, 1>}, {pipeline_mode = #tpu.pipeline_mode<synchronous>, transform_indices = @transform_4, window_bounds = array<i64: 36, 128>}, {pipeline_mode = #tpu.pipeline_mode<synchronous>, transform_indices = @transform_5, window_bounds = array<i64: 1, 128>}, {pipeline_mode = #tpu.pipeline_mode<synchronous>, transform_indices = @transform_6, window_bounds = array<i64: 3, 16, 384>}, {pipeline_mode = #tpu.pipeline_mode<synchronous>, transform_indices = @transform_7, window_bounds = array<i64: 16, 1>}, {transform_indices = @transform_8, window_bounds = array<i64: 1, 8, 128>}]} {
    %c0 = arith.constant 0 : index
    %c0_0 = arith.constant 0 : index
    %c0_1 = arith.constant 0 : index
    %c0_2 = arith.constant 0 : index
    %0 = vector.load %arg3[%c0, %c0_0, %c0_1, %c0_2] : memref<1x12x18x4xbf16, #tpu.memory_space<vmem>>, vector<1x12x18x4xbf16>
    %1 = vector.shape_cast %0 : vector<1x12x18x4xbf16> to vector<12x18x4xbf16>
    %2 = vector.extract_strided_slice %1 {offsets = [0, 0, 0], sizes = [10, 16, 4], strides = [1, 1, 1]} : vector<12x18x4xbf16> to vector<10x16x4xbf16>
    %3 = vector.shape_cast %2 : vector<10x16x4xbf16> to vector<160x4xbf16>
    %4 = vector.extract_strided_slice %1 {offsets = [0, 1, 0], sizes = [10, 16, 4], strides = [1, 1, 1]} : vector<12x18x4xbf16> to vector<10x16x4xbf16>
    %5 = vector.shape_cast %4 : vector<10x16x4xbf16> to vector<160x4xbf16>
    %6 = vector.extract_strided_slice %1 {offsets = [0, 2, 0], sizes = [10, 16, 4], strides = [1, 1, 1]} : vector<12x18x4xbf16> to vector<10x16x4xbf16>
    %7 = vector.shape_cast %6 : vector<10x16x4xbf16> to vector<160x4xbf16>
    %8 = vector.extract_strided_slice %1 {offsets = [1, 0, 0], sizes = [10, 16, 4], strides = [1, 1, 1]} : vector<12x18x4xbf16> to vector<10x16x4xbf16>
    %9 = vector.shape_cast %8 : vector<10x16x4xbf16> to vector<160x4xbf16>
    %10 = vector.extract_strided_slice %1 {offsets = [1, 1, 0], sizes = [10, 16, 4], strides = [1, 1, 1]} : vector<12x18x4xbf16> to vector<10x16x4xbf16>
    %11 = vector.shape_cast %10 : vector<10x16x4xbf16> to vector<160x4xbf16>
    %12 = vector.extract_strided_slice %1 {offsets = [1, 2, 0], sizes = [10, 16, 4], strides = [1, 1, 1]} : vector<12x18x4xbf16> to vector<10x16x4xbf16>
    %13 = vector.shape_cast %12 : vector<10x16x4xbf16> to vector<160x4xbf16>
    %14 = vector.extract_strided_slice %1 {offsets = [2, 0, 0], sizes = [10, 16, 4], strides = [1, 1, 1]} : vector<12x18x4xbf16> to vector<10x16x4xbf16>
    %15 = vector.shape_cast %14 : vector<10x16x4xbf16> to vector<160x4xbf16>
    %16 = vector.extract_strided_slice %1 {offsets = [2, 1, 0], sizes = [10, 16, 4], strides = [1, 1, 1]} : vector<12x18x4xbf16> to vector<10x16x4xbf16>
    %17 = vector.shape_cast %16 : vector<10x16x4xbf16> to vector<160x4xbf16>
    %18 = vector.extract_strided_slice %1 {offsets = [2, 2, 0], sizes = [10, 16, 4], strides = [1, 1, 1]} : vector<12x18x4xbf16> to vector<10x16x4xbf16>
    %19 = vector.shape_cast %18 : vector<10x16x4xbf16> to vector<160x4xbf16>
    %20 = tpu.concatenate %3, %5, %7, %9, %11, %13, %15, %17, %19 in 1 : vector<160x4xbf16>, vector<160x4xbf16>, vector<160x4xbf16>, vector<160x4xbf16>, vector<160x4xbf16>, vector<160x4xbf16>, vector<160x4xbf16>, vector<160x4xbf16>, vector<160x4xbf16> -> vector<160x36xbf16>
    %c0_3 = arith.constant 0 : index
    %c0_4 = arith.constant 0 : index
    %21 = vector.load %arg6[%c0_3, %c0_4] : memref<36x128xbf16, #tpu.memory_space<vmem>>, vector<36x128xbf16>
    %cst = arith.constant dense<0.000000e+00> : vector<160x128xf32>
    %22 = tpu.matmul %20, %21, %cst {dimension_numbers = #tpu.dot_dimension_numbers<[1], [0], [0], [1], [0, 0, 1, 1], [], []>} : vector<160x36xbf16>, vector<36x128xbf16>, vector<160x128xf32> -> vector<160x128xf32>
    %c0_5 = arith.constant 0 : index
    %c0_6 = arith.constant 0 : index
    %23 = vector.load %arg7[%c0_5, %c0_6] : memref<1x128xf32, #tpu.memory_space<vmem>>, vector<1x128xf32>
    %24 = vector.broadcast %23 : vector<1x128xf32> to vector<160x128xf32>
    %25 = arith.addf %22, %24 : vector<160x128xf32>
    %cst_7 = arith.constant 0.000000e+00 : f32
    %26 = vector.broadcast %cst_7 : f32 to vector<160x128xf32>
    %27 = arith.maximumf %25, %26 : vector<160x128xf32>
    %28 = vector.shape_cast %27 : vector<160x128xf32> to vector<10x16x128xf32>
    %29 = arith.truncf %28 : vector<10x16x128xf32> to vector<10x16x128xbf16>
    %c0_8 = arith.constant 0 : index
    %c1 = arith.constant 1 : index
    %c0_9 = arith.constant 0 : index
    %30 = vector.load %arg11[%c0_8, %c1, %c0_9] : memref<10x18x128xbf16, #tpu.memory_space<vmem>>, vector<10x16x128xbf16>
    tpu.vector_store %arg11[%c0_8, %c1, %c0_9], %29 {strides = array<i32>} : memref<10x18x128xbf16, #tpu.memory_space<vmem>>, vector<10x16x128xbf16>,
    %cst_10 = arith.constant 0.000000e+00 : bf16
    %31 = vector.broadcast %cst_10 : bf16 to vector<10x1x128xbf16>
    %c0_11 = arith.constant 0 : index
    %c0_12 = arith.constant 0 : index
    %c0_13 = arith.constant 0 : index
    %32 = vector.load %arg11[%c0_11, %c0_12, %c0_13] : memref<10x18x128xbf16, #tpu.memory_space<vmem>>, vector<10x1x128xbf16>
    tpu.vector_store %arg11[%c0_11, %c0_12, %c0_13], %31 {strides = array<i32>} : memref<10x18x128xbf16, #tpu.memory_space<vmem>>, vector<10x1x128xbf16>,
    %c0_14 = arith.constant 0 : index
    %c17 = arith.constant 17 : index
    %c0_15 = arith.constant 0 : index
    %33 = vector.load %arg11[%c0_14, %c17, %c0_15] : memref<10x18x128xbf16, #tpu.memory_space<vmem>>, vector<10x1x128xbf16>
    tpu.vector_store %arg11[%c0_14, %c17, %c0_15], %31 {strides = array<i32>} : memref<10x18x128xbf16, #tpu.memory_space<vmem>>, vector<10x1x128xbf16>,
    %c0_i32 = arith.constant 0 : i32
    %34 = arith.cmpi eq, %arg1, %c0_i32 : i32
    %35 = arith.extui %34 : i1 to i32
    %c0_i32_16 = arith.constant 0 : i32
    %36 = arith.cmpi ne, %35, %c0_i32_16 : i32
    scf.if %36 {
      %cst_71 = arith.constant 0.000000e+00 : bf16
      %95 = vector.broadcast %cst_71 : bf16 to vector<1x18x128xbf16>
      %c0_72 = arith.constant 0 : index
      %c0_73 = arith.constant 0 : index
      %c0_74 = arith.constant 0 : index
      %96 = vector.load %arg11[%c0_72, %c0_73, %c0_74] : memref<10x18x128xbf16, #tpu.memory_space<vmem>>, vector<1x18x128xbf16>
      tpu.vector_store %arg11[%c0_72, %c0_73, %c0_74], %95 {strides = array<i32>} : memref<10x18x128xbf16, #tpu.memory_space<vmem>>, vector<1x18x128xbf16>,
    } else {
    }
    %c1_i32 = arith.constant 1 : i32
    %37 = arith.cmpi eq, %arg1, %c1_i32 : i32
    %38 = arith.extui %37 : i1 to i32
    %c0_i32_17 = arith.constant 0 : i32
    %39 = arith.cmpi ne, %38, %c0_i32_17 : i32
    scf.if %39 {
      %cst_71 = arith.constant 0.000000e+00 : bf16
      %95 = vector.broadcast %cst_71 : bf16 to vector<1x18x128xbf16>
      %c9 = arith.constant 9 : index
      %c0_72 = arith.constant 0 : index
      %c0_73 = arith.constant 0 : index
      %96 = vector.load %arg11[%c9, %c0_72, %c0_73] : memref<10x18x128xbf16, #tpu.memory_space<vmem>>, vector<1x18x128xbf16>
      tpu.vector_store %arg11[%c9, %c0_72, %c0_73], %95 {strides = array<i32>} : memref<10x18x128xbf16, #tpu.memory_space<vmem>>, vector<1x18x128xbf16>,
    } else {
    }
    %c0_18 = arith.constant 0 : index
    %c0_19 = arith.constant 0 : index
    %40 = vector.load %arg9[%c0_18, %c0_19] : memref<16x1xf32, #tpu.memory_space<vmem>>, vector<16x1xf32>
    %41 = vector.shape_cast %40 : vector<16x1xf32> to vector<16x1xf32>
    %42 = vector.broadcast %41 : vector<16x1xf32> to vector<16x128xf32>
    %c0_20 = arith.constant 0 : index
    %c0_21 = arith.constant 0 : index
    %c0_22 = arith.constant 0 : index
    %43 = vector.load %arg11[%c0_20, %c0_21, %c0_22] : memref<10x18x128xbf16, #tpu.memory_space<vmem>>, vector<8x16x128xbf16>
    %44 = vector.shape_cast %43 : vector<8x16x128xbf16> to vector<128x128xbf16>
    %c0_23 = arith.constant 0 : index
    %c1_24 = arith.constant 1 : index
    %c0_25 = arith.constant 0 : index
    %45 = vector.load %arg11[%c0_23, %c1_24, %c0_25] : memref<10x18x128xbf16, #tpu.memory_space<vmem>>, vector<8x16x128xbf16>
    %46 = vector.shape_cast %45 : vector<8x16x128xbf16> to vector<128x128xbf16>
    %c0_26 = arith.constant 0 : index
    %c2 = arith.constant 2 : index
    %c0_27 = arith.constant 0 : index
    %47 = vector.load %arg11[%c0_26, %c2, %c0_27] : memref<10x18x128xbf16, #tpu.memory_space<vmem>>, vector<8x16x128xbf16>
    %48 = vector.shape_cast %47 : vector<8x16x128xbf16> to vector<128x128xbf16>
    %49 = tpu.concatenate %44, %46, %48 in 1 : vector<128x128xbf16>, vector<128x128xbf16>, vector<128x128xbf16> -> vector<128x384xbf16>
    %c0_28 = arith.constant 0 : index
    %c0_29 = arith.constant 0 : index
    %c0_30 = arith.constant 0 : index
    %50 = vector.load %arg8[%c0_28, %c0_29, %c0_30] : memref<3x16x384xbf16, #tpu.memory_space<vmem>>, vector<1x16x384xbf16>
    %51 = vector.shape_cast %50 : vector<1x16x384xbf16> to vector<16x384xbf16>
    %cst_31 = arith.constant dense<0.000000e+00> : vector<16x128xf32>
    %52 = tpu.matmul %51, %49, %cst_31 {dimension_numbers = #tpu.dot_dimension_numbers<[1], [1], [0], [0], [0, 0, 1, 0], [], []>} : vector<16x384xbf16>, vector<128x384xbf16>, vector<16x128xf32> -> vector<16x128xf32>
    %53 = arith.addf %42, %52 : vector<16x128xf32>
    %c1_32 = arith.constant 1 : index
    %c0_33 = arith.constant 0 : index
    %c0_34 = arith.constant 0 : index
    %54 = vector.load %arg11[%c1_32, %c0_33, %c0_34] : memref<10x18x128xbf16, #tpu.memory_space<vmem>>, vector<8x16x128xbf16>
    %55 = vector.shape_cast %54 : vector<8x16x128xbf16> to vector<128x128xbf16>
    %c1_35 = arith.constant 1 : index
    %c1_36 = arith.constant 1 : index
    %c0_37 = arith.constant 0 : index
    %56 = vector.load %arg11[%c1_35, %c1_36, %c0_37] : memref<10x18x128xbf16, #tpu.memory_space<vmem>>, vector<8x16x128xbf16>
    %57 = vector.shape_cast %56 : vector<8x16x128xbf16> to vector<128x128xbf16>
    %c1_38 = arith.constant 1 : index
    %c2_39 = arith.constant 2 : index
    %c0_40 = arith.constant 0 : index
    %58 = vector.load %arg11[%c1_38, %c2_39, %c0_40] : memref<10x18x128xbf16, #tpu.memory_space<vmem>>, vector<8x16x128xbf16>
    %59 = vector.shape_cast %58 : vector<8x16x128xbf16> to vector<128x128xbf16>
    %60 = tpu.concatenate %55, %57, %59 in 1 : vector<128x128xbf16>, vector<128x128xbf16>, vector<128x128xbf16> -> vector<128x384xbf16>
    %c1_41 = arith.constant 1 : index
    %c0_42 = arith.constant 0 : index
    %c0_43 = arith.constant 0 : index
    %61 = vector.load %arg8[%c1_41, %c0_42, %c0_43] : memref<3x16x384xbf16, #tpu.memory_space<vmem>>, vector<1x16x384xbf16>
    %62 = vector.shape_cast %61 : vector<1x16x384xbf16> to vector<16x384xbf16>
    %cst_44 = arith.constant dense<0.000000e+00> : vector<16x128xf32>
    %63 = tpu.matmul %62, %60, %cst_44 {dimension_numbers = #tpu.dot_dimension_numbers<[1], [1], [0], [0], [0, 0, 1, 0], [], []>} : vector<16x384xbf16>, vector<128x384xbf16>, vector<16x128xf32> -> vector<16x128xf32>
    %64 = arith.addf %53, %63 : vector<16x128xf32>
    %c2_45 = arith.constant 2 : index
    %c0_46 = arith.constant 0 : index
    %c0_47 = arith.constant 0 : index
    %65 = vector.load %arg11[%c2_45, %c0_46, %c0_47] : memref<10x18x128xbf16, #tpu.memory_space<vmem>>, vector<8x16x128xbf16>
    %66 = vector.shape_cast %65 : vector<8x16x128xbf16> to vector<128x128xbf16>
    %c2_48 = arith.constant 2 : index
    %c1_49 = arith.constant 1 : index
    %c0_50 = arith.constant 0 : index
    %67 = vector.load %arg11[%c2_48, %c1_49, %c0_50] : memref<10x18x128xbf16, #tpu.memory_space<vmem>>, vector<8x16x128xbf16>
    %68 = vector.shape_cast %67 : vector<8x16x128xbf16> to vector<128x128xbf16>
    %c2_51 = arith.constant 2 : index
    %c2_52 = arith.constant 2 : index
    %c0_53 = arith.constant 0 : index
    %69 = vector.load %arg11[%c2_51, %c2_52, %c0_53] : memref<10x18x128xbf16, #tpu.memory_space<vmem>>, vector<8x16x128xbf16>
    %70 = vector.shape_cast %69 : vector<8x16x128xbf16> to vector<128x128xbf16>
    %71 = tpu.concatenate %66, %68, %70 in 1 : vector<128x128xbf16>, vector<128x128xbf16>, vector<128x128xbf16> -> vector<128x384xbf16>
    %c2_54 = arith.constant 2 : index
    %c0_55 = arith.constant 0 : index
    %c0_56 = arith.constant 0 : index
    %72 = vector.load %arg8[%c2_54, %c0_55, %c0_56] : memref<3x16x384xbf16, #tpu.memory_space<vmem>>, vector<1x16x384xbf16>
    %73 = vector.shape_cast %72 : vector<1x16x384xbf16> to vector<16x384xbf16>
    %cst_57 = arith.constant dense<0.000000e+00> : vector<16x128xf32>
    %74 = tpu.matmul %73, %71, %cst_57 {dimension_numbers = #tpu.dot_dimension_numbers<[1], [1], [0], [0], [0, 0, 1, 0], [], []>} : vector<16x384xbf16>, vector<128x384xbf16>, vector<16x128xf32> -> vector<16x128xf32>
    %75 = arith.addf %64, %74 : vector<16x128xf32>
    %76 = vector.extract_strided_slice %75 {offsets = [0, 0], sizes = [8, 128], strides = [1, 1]} : vector<16x128xf32> to vector<8x128xf32>
    %77 = vector.extract_strided_slice %75 {offsets = [8, 0], sizes = [8, 128], strides = [1, 1]} : vector<16x128xf32> to vector<8x128xf32>
    %c0_58 = arith.constant 0 : index
    %c0_59 = arith.constant 0 : index
    %c0_60 = arith.constant 0 : index
    %78 = vector.load %arg2[%c0_58, %c0_59, %c0_60] : memref<1x8x128xf32, #tpu.memory_space<vmem>>, vector<1x8x128xf32>
    %79 = vector.shape_cast %78 : vector<1x8x128xf32> to vector<8x128xf32>
    %c0_61 = arith.constant 0 : index
    %c0_62 = arith.constant 0 : index
    %c0_63 = arith.constant 0 : index
    %80 = vector.load %arg4[%c0_61, %c0_62, %c0_63] : memref<1x8x1xf32, #tpu.memory_space<vmem>>, vector<1x8x1xf32>
    %81 = vector.shape_cast %80 : vector<1x8x1xf32> to vector<8x1xf32>
    %82 = vector.broadcast %81 : vector<8x1xf32> to vector<8x128xf32>
    %83 = arith.subf %79, %82 : vector<8x128xf32>
    %c0_64 = arith.constant 0 : index
    %c0_65 = arith.constant 0 : index
    %c0_66 = arith.constant 0 : index
    %84 = vector.load %arg5[%c0_64, %c0_65, %c0_66] : memref<1x8x1xf32, #tpu.memory_space<vmem>>, vector<1x8x1xf32>
    %85 = vector.shape_cast %84 : vector<1x8x1xf32> to vector<8x1xf32>
    %86 = vector.broadcast %85 : vector<8x1xf32> to vector<8x128xf32>
    %87 = arith.mulf %83, %86 : vector<8x128xf32>
    %cst_67 = arith.constant 1.000000e+00 : f32
    %88 = vector.broadcast %cst_67 : f32 to vector<8x128xf32>
    %89 = arith.addf %88, %76 : vector<8x128xf32>
    %90 = arith.mulf %87, %89 : vector<8x128xf32>
    %91 = arith.addf %90, %77 : vector<8x128xf32>
    %c0_68 = arith.constant 0 : index
    %c0_69 = arith.constant 0 : index
    %c0_70 = arith.constant 0 : index
    %92 = vector.load %arg10[%c0_68, %c0_69, %c0_70] : memref<1x8x128xf32, #tpu.memory_space<vmem>>, vector<1x8x128xf32>
    %93 = vector.shape_cast %92 : vector<1x8x128xf32> to vector<8x128xf32>
    %94 = vector.shape_cast %91 : vector<8x128xf32> to vector<1x8x128xf32>
    tpu.vector_store %arg10[%c0_68, %c0_69, %c0_70], %94 {strides = array<i32>} : memref<1x8x128xf32, #tpu.memory_space<vmem>>, vector<1x8x128xf32>,
    return
  }
  func.func @transform_0(%arg0: i32, %arg1: i32) -> (i32, i32, i32) {
    %c0_i32 = arith.constant 0 : i32
    %c0_i32_0 = arith.constant 0 : i32
    return %arg0, %c0_i32, %arg1 : i32, i32, i32
  }
  func.func @transform_1(%arg0: i32, %arg1: i32) -> (i32, i32, i32, i32) {
    %c2_i32 = arith.constant 2 : i32
    %0 = arith.muli %arg0, %c2_i32 : i32
    %1 = arith.addi %0, %arg1 : i32
    %c0_i32 = arith.constant 0 : i32
    %c0_i32_0 = arith.constant 0 : i32
    %c0_i32_1 = arith.constant 0 : i32
    %c0_i32_2 = arith.constant 0 : i32
    return %1, %c0_i32, %c0_i32_0, %c0_i32_1 : i32, i32, i32, i32
  }
  func.func @transform_2(%arg0: i32, %arg1: i32) -> (i32, i32, i32) {
    %c0_i32 = arith.constant 0 : i32
    %c0_i32_0 = arith.constant 0 : i32
    %c0_i32_1 = arith.constant 0 : i32
    return %arg0, %c0_i32, %c0_i32_0 : i32, i32, i32
  }
  func.func @transform_3(%arg0: i32, %arg1: i32) -> (i32, i32, i32) {
    %c0_i32 = arith.constant 0 : i32
    %c0_i32_0 = arith.constant 0 : i32
    %c0_i32_1 = arith.constant 0 : i32
    return %arg0, %c0_i32, %c0_i32_0 : i32, i32, i32
  }
  func.func @transform_4(%arg0: i32, %arg1: i32) -> (i32, i32) {
    %c0_i32 = arith.constant 0 : i32
    %c0_i32_0 = arith.constant 0 : i32
    %c0_i32_1 = arith.constant 0 : i32
    return %c0_i32, %c0_i32_0 : i32, i32
  }
  func.func @transform_5(%arg0: i32, %arg1: i32) -> (i32, i32) {
    %c0_i32 = arith.constant 0 : i32
    %c0_i32_0 = arith.constant 0 : i32
    %c0_i32_1 = arith.constant 0 : i32
    return %c0_i32, %c0_i32_0 : i32, i32
  }
  func.func @transform_6(%arg0: i32, %arg1: i32) -> (i32, i32, i32) {
    %c0_i32 = arith.constant 0 : i32
    %c0_i32_0 = arith.constant 0 : i32
    %c0_i32_1 = arith.constant 0 : i32
    %c0_i32_2 = arith.constant 0 : i32
    return %c0_i32, %c0_i32_0, %c0_i32_1 : i32, i32, i32
  }
  func.func @transform_7(%arg0: i32, %arg1: i32) -> (i32, i32) {
    %c0_i32 = arith.constant 0 : i32
    %c0_i32_0 = arith.constant 0 : i32
    %c0_i32_1 = arith.constant 0 : i32
    return %c0_i32, %c0_i32_0 : i32, i32
  }
  func.func @transform_8(%arg0: i32, %arg1: i32) -> (i32, i32, i32) {
    %c0_i32 = arith.constant 0 : i32
    %c0_i32_0 = arith.constant 0 : i32
    return %arg0, %c0_i32, %arg1 : i32, i32, i32
  }
}

module attributes {stable_mosaic.version = 11 : i64} {
  func.func @spade_kernel(%arg0: i32, %arg1: i32, %arg2: memref<1x8x128xf32, #tpu.memory_space<vmem>>, %arg3: memref<1x12x18x4xbf16, #tpu.memory_space<vmem>>, %arg4: memref<1x8x1xf32, #tpu.memory_space<vmem>>, %arg5: memref<1x8x1xf32, #tpu.memory_space<vmem>>, %arg6: memref<36x128xbf16, #tpu.memory_space<vmem>>, %arg7: memref<1x128xf32, #tpu.memory_space<vmem>>, %arg8: memref<3x16x384xbf16, #tpu.memory_space<vmem>>, %arg9: memref<16x1xf32, #tpu.memory_space<vmem>>, %arg10: memref<1x8x128xf32, #tpu.memory_space<vmem>>, %arg11: memref<10x18x128xbf16, #tpu.memory_space<vmem>>) attributes {dimension_semantics = [#tpu.dimension_semantics<parallel>, #tpu.dimension_semantics<parallel>], iteration_bounds = array<i64: 2, 2>, scalar_prefetch = 0 : i64, scratch_operands = 1 : i64, tpu.core_type = #tpu.core_type<tc>, window_params = [{transform_indices = @transform_0, window_bounds = array<i64: 1, 8, 128>}, {transform_indices = @transform_1, window_bounds = array<i64: 1, 12, 18, 4>}, {transform_indices = @transform_2, window_bounds = array<i64: 1, 8, 1>}, {transform_indices = @transform_3, window_bounds = array<i64: 1, 8, 1>}, {pipeline_mode = #tpu.pipeline_mode<synchronous>, transform_indices = @transform_4, window_bounds = array<i64: 36, 128>}, {pipeline_mode = #tpu.pipeline_mode<synchronous>, transform_indices = @transform_5, window_bounds = array<i64: 1, 128>}, {pipeline_mode = #tpu.pipeline_mode<synchronous>, transform_indices = @transform_6, window_bounds = array<i64: 3, 16, 384>}, {pipeline_mode = #tpu.pipeline_mode<synchronous>, transform_indices = @transform_7, window_bounds = array<i64: 16, 1>}, {transform_indices = @transform_8, window_bounds = array<i64: 1, 8, 128>}]} {
    %c0 = arith.constant 0 : index
    %c0_0 = arith.constant 0 : index
    %c0_1 = arith.constant 0 : index
    %c0_2 = arith.constant 0 : index
    %0 = vector.load %arg3[%c0, %c0_0, %c0_1, %c0_2] : memref<1x12x18x4xbf16, #tpu.memory_space<vmem>>, vector<1x12x18x4xbf16>
    %1 = vector.shape_cast %0 : vector<1x12x18x4xbf16> to vector<12x18x4xbf16>
    %2 = vector.extract_strided_slice %1 {offsets = [0, 0, 0], sizes = [10, 16, 4], strides = [1, 1, 1]} : vector<12x18x4xbf16> to vector<10x16x4xbf16>
    %3 = vector.shape_cast %2 : vector<10x16x4xbf16> to vector<160x4xbf16>
    %4 = vector.extract_strided_slice %1 {offsets = [0, 1, 0], sizes = [10, 16, 4], strides = [1, 1, 1]} : vector<12x18x4xbf16> to vector<10x16x4xbf16>
    %5 = vector.shape_cast %4 : vector<10x16x4xbf16> to vector<160x4xbf16>
    %6 = vector.extract_strided_slice %1 {offsets = [0, 2, 0], sizes = [10, 16, 4], strides = [1, 1, 1]} : vector<12x18x4xbf16> to vector<10x16x4xbf16>
    %7 = vector.shape_cast %6 : vector<10x16x4xbf16> to vector<160x4xbf16>
    %8 = vector.extract_strided_slice %1 {offsets = [1, 0, 0], sizes = [10, 16, 4], strides = [1, 1, 1]} : vector<12x18x4xbf16> to vector<10x16x4xbf16>
    %9 = vector.shape_cast %8 : vector<10x16x4xbf16> to vector<160x4xbf16>
    %10 = vector.extract_strided_slice %1 {offsets = [1, 1, 0], sizes = [10, 16, 4], strides = [1, 1, 1]} : vector<12x18x4xbf16> to vector<10x16x4xbf16>
    %11 = vector.shape_cast %10 : vector<10x16x4xbf16> to vector<160x4xbf16>
    %12 = vector.extract_strided_slice %1 {offsets = [1, 2, 0], sizes = [10, 16, 4], strides = [1, 1, 1]} : vector<12x18x4xbf16> to vector<10x16x4xbf16>
    %13 = vector.shape_cast %12 : vector<10x16x4xbf16> to vector<160x4xbf16>
    %14 = vector.extract_strided_slice %1 {offsets = [2, 0, 0], sizes = [10, 16, 4], strides = [1, 1, 1]} : vector<12x18x4xbf16> to vector<10x16x4xbf16>
    %15 = vector.shape_cast %14 : vector<10x16x4xbf16> to vector<160x4xbf16>
    %16 = vector.extract_strided_slice %1 {offsets = [2, 1, 0], sizes = [10, 16, 4], strides = [1, 1, 1]} : vector<12x18x4xbf16> to vector<10x16x4xbf16>
    %17 = vector.shape_cast %16 : vector<10x16x4xbf16> to vector<160x4xbf16>
    %18 = vector.extract_strided_slice %1 {offsets = [2, 2, 0], sizes = [10, 16, 4], strides = [1, 1, 1]} : vector<12x18x4xbf16> to vector<10x16x4xbf16>
    %19 = vector.shape_cast %18 : vector<10x16x4xbf16> to vector<160x4xbf16>
    %20 = tpu.concatenate %3, %5, %7, %9, %11, %13, %15, %17, %19 in 1 : vector<160x4xbf16>, vector<160x4xbf16>, vector<160x4xbf16>, vector<160x4xbf16>, vector<160x4xbf16>, vector<160x4xbf16>, vector<160x4xbf16>, vector<160x4xbf16>, vector<160x4xbf16> -> vector<160x36xbf16>
    %c0_3 = arith.constant 0 : index
    %c0_4 = arith.constant 0 : index
    %21 = vector.load %arg6[%c0_3, %c0_4] : memref<36x128xbf16, #tpu.memory_space<vmem>>, vector<36x128xbf16>
    %cst = arith.constant dense<0.000000e+00> : vector<160x128xf32>
    %22 = tpu.matmul %20, %21, %cst {dimension_numbers = #tpu.dot_dimension_numbers<[1], [0], [0], [1], [0, 0, 1, 1], [], []>} : vector<160x36xbf16>, vector<36x128xbf16>, vector<160x128xf32> -> vector<160x128xf32>
    %c0_5 = arith.constant 0 : index
    %c0_6 = arith.constant 0 : index
    %23 = vector.load %arg7[%c0_5, %c0_6] : memref<1x128xf32, #tpu.memory_space<vmem>>, vector<1x128xf32>
    %24 = vector.broadcast %23 : vector<1x128xf32> to vector<160x128xf32>
    %25 = arith.addf %22, %24 : vector<160x128xf32>
    %cst_7 = arith.constant 0.000000e+00 : f32
    %26 = vector.broadcast %cst_7 : f32 to vector<160x128xf32>
    %27 = arith.maximumf %25, %26 : vector<160x128xf32>
    %28 = vector.shape_cast %27 : vector<160x128xf32> to vector<10x16x128xf32>
    %29 = arith.truncf %28 : vector<10x16x128xf32> to vector<10x16x128xbf16>
    %c0_8 = arith.constant 0 : index
    %c1 = arith.constant 1 : index
    %c0_9 = arith.constant 0 : index
    %30 = vector.load %arg11[%c0_8, %c1, %c0_9] : memref<10x18x128xbf16, #tpu.memory_space<vmem>>, vector<10x16x128xbf16>
    tpu.vector_store %arg11[%c0_8, %c1, %c0_9], %29 {strides = array<i32>} : memref<10x18x128xbf16, #tpu.memory_space<vmem>>, vector<10x16x128xbf16>,
    %cst_10 = arith.constant 0.000000e+00 : bf16
    %31 = vector.broadcast %cst_10 : bf16 to vector<10x1x128xbf16>
    %c0_11 = arith.constant 0 : index
    %c0_12 = arith.constant 0 : index
    %c0_13 = arith.constant 0 : index
    %32 = vector.load %arg11[%c0_11, %c0_12, %c0_13] : memref<10x18x128xbf16, #tpu.memory_space<vmem>>, vector<10x1x128xbf16>
    tpu.vector_store %arg11[%c0_11, %c0_12, %c0_13], %31 {strides = array<i32>} : memref<10x18x128xbf16, #tpu.memory_space<vmem>>, vector<10x1x128xbf16>,
    %c0_14 = arith.constant 0 : index
    %c17 = arith.constant 17 : index
    %c0_15 = arith.constant 0 : index
    %33 = vector.load %arg11[%c0_14, %c17, %c0_15] : memref<10x18x128xbf16, #tpu.memory_space<vmem>>, vector<10x1x128xbf16>
    tpu.vector_store %arg11[%c0_14, %c17, %c0_15], %31 {strides = array<i32>} : memref<10x18x128xbf16, #tpu.memory_space<vmem>>, vector<10x1x128xbf16>,
    %c0_i32 = arith.constant 0 : i32
    %34 = arith.cmpi eq, %arg1, %c0_i32 : i32
    %35 = arith.extui %34 : i1 to i32
    %c0_i32_16 = arith.constant 0 : i32
    %36 = arith.cmpi ne, %35, %c0_i32_16 : i32
    scf.if %36 {
      %cst_71 = arith.constant 0.000000e+00 : bf16
      %95 = vector.broadcast %cst_71 : bf16 to vector<1x18x128xbf16>
      %c0_72 = arith.constant 0 : index
      %c0_73 = arith.constant 0 : index
      %c0_74 = arith.constant 0 : index
      %96 = vector.load %arg11[%c0_72, %c0_73, %c0_74] : memref<10x18x128xbf16, #tpu.memory_space<vmem>>, vector<1x18x128xbf16>
      tpu.vector_store %arg11[%c0_72, %c0_73, %c0_74], %95 {strides = array<i32>} : memref<10x18x128xbf16, #tpu.memory_space<vmem>>, vector<1x18x128xbf16>,
    } else {
    }
    %c1_i32 = arith.constant 1 : i32
    %37 = arith.cmpi eq, %arg1, %c1_i32 : i32
    %38 = arith.extui %37 : i1 to i32
    %c0_i32_17 = arith.constant 0 : i32
    %39 = arith.cmpi ne, %38, %c0_i32_17 : i32
    scf.if %39 {
      %cst_71 = arith.constant 0.000000e+00 : bf16
      %95 = vector.broadcast %cst_71 : bf16 to vector<1x18x128xbf16>
      %c9 = arith.constant 9 : index
      %c0_72 = arith.constant 0 : index
      %c0_73 = arith.constant 0 : index
      %96 = vector.load %arg11[%c9, %c0_72, %c0_73] : memref<10x18x128xbf16, #tpu.memory_space<vmem>>, vector<1x18x128xbf16>
      tpu.vector_store %arg11[%c9, %c0_72, %c0_73], %95 {strides = array<i32>} : memref<10x18x128xbf16, #tpu.memory_space<vmem>>, vector<1x18x128xbf16>,
    } else {
    }
    %c0_18 = arith.constant 0 : index
    %c0_19 = arith.constant 0 : index
    %40 = vector.load %arg9[%c0_18, %c0_19] : memref<16x1xf32, #tpu.memory_space<vmem>>, vector<16x1xf32>
    %41 = vector.shape_cast %40 : vector<16x1xf32> to vector<16x1xf32>
    %42 = vector.broadcast %41 : vector<16x1xf32> to vector<16x128xf32>
    %c0_20 = arith.constant 0 : index
    %c0_21 = arith.constant 0 : index
    %c0_22 = arith.constant 0 : index
    %43 = vector.load %arg11[%c0_20, %c0_21, %c0_22] : memref<10x18x128xbf16, #tpu.memory_space<vmem>>, vector<8x16x128xbf16>
    %44 = vector.shape_cast %43 : vector<8x16x128xbf16> to vector<128x128xbf16>
    %c0_23 = arith.constant 0 : index
    %c1_24 = arith.constant 1 : index
    %c0_25 = arith.constant 0 : index
    %45 = vector.load %arg11[%c0_23, %c1_24, %c0_25] : memref<10x18x128xbf16, #tpu.memory_space<vmem>>, vector<8x16x128xbf16>
    %46 = vector.shape_cast %45 : vector<8x16x128xbf16> to vector<128x128xbf16>
    %c0_26 = arith.constant 0 : index
    %c2 = arith.constant 2 : index
    %c0_27 = arith.constant 0 : index
    %47 = vector.load %arg11[%c0_26, %c2, %c0_27] : memref<10x18x128xbf16, #tpu.memory_space<vmem>>, vector<8x16x128xbf16>
    %48 = vector.shape_cast %47 : vector<8x16x128xbf16> to vector<128x128xbf16>
    %49 = tpu.concatenate %44, %46, %48 in 1 : vector<128x128xbf16>, vector<128x128xbf16>, vector<128x128xbf16> -> vector<128x384xbf16>
    %c0_28 = arith.constant 0 : index
    %c0_29 = arith.constant 0 : index
    %c0_30 = arith.constant 0 : index
    %50 = vector.load %arg8[%c0_28, %c0_29, %c0_30] : memref<3x16x384xbf16, #tpu.memory_space<vmem>>, vector<1x16x384xbf16>
    %51 = vector.shape_cast %50 : vector<1x16x384xbf16> to vector<16x384xbf16>
    %cst_31 = arith.constant dense<0.000000e+00> : vector<16x128xf32>
    %52 = tpu.matmul %51, %49, %cst_31 {dimension_numbers = #tpu.dot_dimension_numbers<[1], [1], [0], [0], [0, 0, 1, 0], [], []>} : vector<16x384xbf16>, vector<128x384xbf16>, vector<16x128xf32> -> vector<16x128xf32>
    %53 = arith.addf %42, %52 : vector<16x128xf32>
    %c1_32 = arith.constant 1 : index
    %c0_33 = arith.constant 0 : index
    %c0_34 = arith.constant 0 : index
    %54 = vector.load %arg11[%c1_32, %c0_33, %c0_34] : memref<10x18x128xbf16, #tpu.memory_space<vmem>>, vector<8x16x128xbf16>
    %55 = vector.shape_cast %54 : vector<8x16x128xbf16> to vector<128x128xbf16>
    %c1_35 = arith.constant 1 : index
    %c1_36 = arith.constant 1 : index
    %c0_37 = arith.constant 0 : index
    %56 = vector.load %arg11[%c1_35, %c1_36, %c0_37] : memref<10x18x128xbf16, #tpu.memory_space<vmem>>, vector<8x16x128xbf16>
    %57 = vector.shape_cast %56 : vector<8x16x128xbf16> to vector<128x128xbf16>
    %c1_38 = arith.constant 1 : index
    %c2_39 = arith.constant 2 : index
    %c0_40 = arith.constant 0 : index
    %58 = vector.load %arg11[%c1_38, %c2_39, %c0_40] : memref<10x18x128xbf16, #tpu.memory_space<vmem>>, vector<8x16x128xbf16>
    %59 = vector.shape_cast %58 : vector<8x16x128xbf16> to vector<128x128xbf16>
    %60 = tpu.concatenate %55, %57, %59 in 1 : vector<128x128xbf16>, vector<128x128xbf16>, vector<128x128xbf16> -> vector<128x384xbf16>
    %c1_41 = arith.constant 1 : index
    %c0_42 = arith.constant 0 : index
    %c0_43 = arith.constant 0 : index
    %61 = vector.load %arg8[%c1_41, %c0_42, %c0_43] : memref<3x16x384xbf16, #tpu.memory_space<vmem>>, vector<1x16x384xbf16>
    %62 = vector.shape_cast %61 : vector<1x16x384xbf16> to vector<16x384xbf16>
    %cst_44 = arith.constant dense<0.000000e+00> : vector<16x128xf32>
    %63 = tpu.matmul %62, %60, %cst_44 {dimension_numbers = #tpu.dot_dimension_numbers<[1], [1], [0], [0], [0, 0, 1, 0], [], []>} : vector<16x384xbf16>, vector<128x384xbf16>, vector<16x128xf32> -> vector<16x128xf32>
    %64 = arith.addf %53, %63 : vector<16x128xf32>
    %c2_45 = arith.constant 2 : index
    %c0_46 = arith.constant 0 : index
    %c0_47 = arith.constant 0 : index
    %65 = vector.load %arg11[%c2_45, %c0_46, %c0_47] : memref<10x18x128xbf16, #tpu.memory_space<vmem>>, vector<8x16x128xbf16>
    %66 = vector.shape_cast %65 : vector<8x16x128xbf16> to vector<128x128xbf16>
    %c2_48 = arith.constant 2 : index
    %c1_49 = arith.constant 1 : index
    %c0_50 = arith.constant 0 : index
    %67 = vector.load %arg11[%c2_48, %c1_49, %c0_50] : memref<10x18x128xbf16, #tpu.memory_space<vmem>>, vector<8x16x128xbf16>
    %68 = vector.shape_cast %67 : vector<8x16x128xbf16> to vector<128x128xbf16>
    %c2_51 = arith.constant 2 : index
    %c2_52 = arith.constant 2 : index
    %c0_53 = arith.constant 0 : index
    %69 = vector.load %arg11[%c2_51, %c2_52, %c0_53] : memref<10x18x128xbf16, #tpu.memory_space<vmem>>, vector<8x16x128xbf16>
    %70 = vector.shape_cast %69 : vector<8x16x128xbf16> to vector<128x128xbf16>
    %71 = tpu.concatenate %66, %68, %70 in 1 : vector<128x128xbf16>, vector<128x128xbf16>, vector<128x128xbf16> -> vector<128x384xbf16>
    %c2_54 = arith.constant 2 : index
    %c0_55 = arith.constant 0 : index
    %c0_56 = arith.constant 0 : index
    %72 = vector.load %arg8[%c2_54, %c0_55, %c0_56] : memref<3x16x384xbf16, #tpu.memory_space<vmem>>, vector<1x16x384xbf16>
    %73 = vector.shape_cast %72 : vector<1x16x384xbf16> to vector<16x384xbf16>
    %cst_57 = arith.constant dense<0.000000e+00> : vector<16x128xf32>
    %74 = tpu.matmul %73, %71, %cst_57 {dimension_numbers = #tpu.dot_dimension_numbers<[1], [1], [0], [0], [0, 0, 1, 0], [], []>} : vector<16x384xbf16>, vector<128x384xbf16>, vector<16x128xf32> -> vector<16x128xf32>
    %75 = arith.addf %64, %74 : vector<16x128xf32>
    %76 = vector.extract_strided_slice %75 {offsets = [0, 0], sizes = [8, 128], strides = [1, 1]} : vector<16x128xf32> to vector<8x128xf32>
    %77 = vector.extract_strided_slice %75 {offsets = [8, 0], sizes = [8, 128], strides = [1, 1]} : vector<16x128xf32> to vector<8x128xf32>
    %c0_58 = arith.constant 0 : index
    %c0_59 = arith.constant 0 : index
    %c0_60 = arith.constant 0 : index
    %78 = vector.load %arg2[%c0_58, %c0_59, %c0_60] : memref<1x8x128xf32, #tpu.memory_space<vmem>>, vector<1x8x128xf32>
    %79 = vector.shape_cast %78 : vector<1x8x128xf32> to vector<8x128xf32>
    %c0_61 = arith.constant 0 : index
    %c0_62 = arith.constant 0 : index
    %c0_63 = arith.constant 0 : index
    %80 = vector.load %arg4[%c0_61, %c0_62, %c0_63] : memref<1x8x1xf32, #tpu.memory_space<vmem>>, vector<1x8x1xf32>
    %81 = vector.shape_cast %80 : vector<1x8x1xf32> to vector<8x1xf32>
    %82 = vector.broadcast %81 : vector<8x1xf32> to vector<8x128xf32>
    %83 = arith.subf %79, %82 : vector<8x128xf32>
    %c0_64 = arith.constant 0 : index
    %c0_65 = arith.constant 0 : index
    %c0_66 = arith.constant 0 : index
    %84 = vector.load %arg5[%c0_64, %c0_65, %c0_66] : memref<1x8x1xf32, #tpu.memory_space<vmem>>, vector<1x8x1xf32>
    %85 = vector.shape_cast %84 : vector<1x8x1xf32> to vector<8x1xf32>
    %86 = vector.broadcast %85 : vector<8x1xf32> to vector<8x128xf32>
    %87 = arith.mulf %83, %86 : vector<8x128xf32>
    %cst_67 = arith.constant 1.000000e+00 : f32
    %88 = vector.broadcast %cst_67 : f32 to vector<8x128xf32>
    %89 = arith.addf %88, %76 : vector<8x128xf32>
    %90 = arith.mulf %87, %89 : vector<8x128xf32>
    %91 = arith.addf %90, %77 : vector<8x128xf32>
    %c0_68 = arith.constant 0 : index
    %c0_69 = arith.constant 0 : index
    %c0_70 = arith.constant 0 : index
    %92 = vector.load %arg10[%c0_68, %c0_69, %c0_70] : memref<1x8x128xf32, #tpu.memory_space<vmem>>, vector<1x8x128xf32>
    %93 = vector.shape_cast %92 : vector<1x8x128xf32> to vector<8x128xf32>
    %94 = vector.shape_cast %91 : vector<8x128xf32> to vector<1x8x128xf32>
    tpu.vector_store %arg10[%c0_68, %c0_69, %c0_70], %94 {strides = array<i32>} : memref<1x8x128xf32, #tpu.memory_space<vmem>>, vector<1x8x128xf32>,
    return
  }
  func.func @transform_0(%arg0: i32, %arg1: i32) -> (i32, i32, i32) {
    %c0_i32 = arith.constant 0 : i32
    %c0_i32_0 = arith.constant 0 : i32
    return %arg0, %c0_i32, %arg1 : i32, i32, i32
  }
  func.func @transform_1(%arg0: i32, %arg1: i32) -> (i32, i32, i32, i32) {
    %c2_i32 = arith.constant 2 : i32
    %0 = arith.muli %arg0, %c2_i32 : i32
    %1 = arith.addi %0, %arg1 : i32
    %c0_i32 = arith.constant 0 : i32
    %c0_i32_0 = arith.constant 0 : i32
    %c0_i32_1 = arith.constant 0 : i32
    %c0_i32_2 = arith.constant 0 : i32
    return %1, %c0_i32, %c0_i32_0, %c0_i32_1 : i32, i32, i32, i32
  }
  func.func @transform_2(%arg0: i32, %arg1: i32) -> (i32, i32, i32) {
    %c0_i32 = arith.constant 0 : i32
    %c0_i32_0 = arith.constant 0 : i32
    %c0_i32_1 = arith.constant 0 : i32
    return %arg0, %c0_i32, %c0_i32_0 : i32, i32, i32
  }
  func.func @transform_3(%arg0: i32, %arg1: i32) -> (i32, i32, i32) {
    %c0_i32 = arith.constant 0 : i32
    %c0_i32_0 = arith.constant 0 : i32
    %c0_i32_1 = arith.constant 0 : i32
    return %arg0, %c0_i32, %c0_i32_0 : i32, i32, i32
  }
  func.func @transform_4(%arg0: i32, %arg1: i32) -> (i32, i32) {
    %c0_i32 = arith.constant 0 : i32
    %c0_i32_0 = arith.constant 0 : i32
    %c0_i32_1 = arith.constant 0 : i32
    return %c0_i32, %c0_i32_0 : i32, i32
  }
  func.func @transform_5(%arg0: i32, %arg1: i32) -> (i32, i32) {
    %c0_i32 = arith.constant 0 : i32
    %c0_i32_0 = arith.constant 0 : i32
    %c0_i32_1 = arith.constant 0 : i32
    return %c0_i32, %c0_i32_0 : i32, i32
  }
  func.func @transform_6(%arg0: i32, %arg1: i32) -> (i32, i32, i32) {
    %c0_i32 = arith.constant 0 : i32
    %c0_i32_0 = arith.constant 0 : i32
    %c0_i32_1 = arith.constant 0 : i32
    %c0_i32_2 = arith.constant 0 : i32
    return %c0_i32, %c0_i32_0, %c0_i32_1 : i32, i32, i32
  }
  func.func @transform_7(%arg0: i32, %arg1: i32) -> (i32, i32) {
    %c0_i32 = arith.constant 0 : i32
    %c0_i32_0 = arith.constant 0 : i32
    %c0_i32_1 = arith.constant 0 : i32
    return %c0_i32, %c0_i32_0 : i32, i32
  }
  func.func @transform_8(%arg0: i32, %arg1: i32) -> (i32, i32, i32) {
    %c0_i32 = arith.constant 0 : i32
    %c0_i32_0 = arith.constant 0 : i32
    return %arg0, %c0_i32, %arg1 : i32, i32, i32
  }
}

</mosaic_0001>

<llo_original>
// kernel: tpu_custom_call.1
$region0: #{tpu_custom_call.1}
  #allocation0 [shape = 'u32[]', space=smem, size = 0x4, offset = 0x4, fixed_abs, tag = 'smem constant byte address 0x4 - core index']
  #allocation1 [shape = 'u32[144,128]{1,0:T(1,128)}', space=vmem, size = 0x12000, scoped, tag = 'internal scratch']
  #allocation2 [shape = 'bf16[10,18,128]{2,1,0:T(8,128)(2,1)}', space=vmem, size = 0xf000, scoped, tag = 'scratch operand']
  %s0 = inlined_call_operand.vmem [shape: f32[2,8,256], index: 0, kind: input, shape index: {}]
  %s1 = inlined_call_operand.vmem [shape: bf16[4,12,18,4], index: 1, kind: input, shape index: {}]
  %s2 = inlined_call_operand.vmem [shape: f32[2,8,1], index: 2, kind: input, shape index: {}]
  %s3 = inlined_call_operand.vmem [shape: f32[2,8,1], index: 3, kind: input, shape index: {}]
  %s4 = inlined_call_operand.vmem [shape: bf16[36,128], index: 4, kind: input, shape index: {}]
  %s5 = inlined_call_operand.vmem [shape: f32[1,128], index: 5, kind: input, shape index: {}]
  %s6 = inlined_call_operand.vmem [shape: bf16[3,16,384], index: 6, kind: input, shape index: {}]
  %s7 = inlined_call_operand.vmem [shape: f32[16,1], index: 7, kind: input, shape index: {}]
  %s8 = inlined_call_operand.hbm [shape: f32[2,8,256], index: 8, kind: output, shape index: {}]
  %s9 = sld [smem:[#allocation0]]
  $region73: #{tpu_custom_call.1} parent=0
    _
  %s11 = ssub.s32 1, %s9
  %s12 = scalar_select 0, %s11, %s9
  $region1: #{tpu_custom_call.1} parent=0
    #allocation3 [shape = 'u8[8192]{0}', space=vmem, size = 0x2000, scoped, tag = 'output window, operand 0']
    #allocation4 [shape = 's32[2]{0}', space=sflag, size = 0x8, scoped, tag = 'scoped memory for tpu_custom_call.1']
    %13 = vsyncpa [#allocation4], 0
    %s14 = scalar_lea.sflag [#allocation4], 1
    %15 = vsyncpa %s14, 0
    loop: start=0, step=1, limit=6
    $region2: #{tpu_custom_call.1} parent=1 // loop_pre_header
      _
    $region3: #{tpu_custom_call.1} parent=1 // loop_header
      %s17 = sphi 0, %s21
      %p18 = scmp.ge.s32.totalorder %s17, 6
      %s24 = sphi 0, %s36
      %s25 = sphi 0, %s32
      %s26 = sphi 0, %s24
      %s27 = sphi 0, %s25
      %s28 = sphi 0, %s26
      %s29 = sphi 0, %s27
      %s41 = sphi 0, %s43
      %s44 = sphi 0, %s41
      %s45 = sphi 0, %s44
      %s61 = sphi 0, %s45
      %s71 = sphi 0, %s73
      %s74 = sphi 0, %s71
      %s75 = sphi 0, %s74
      %s91 = sphi 0, %s75
      %s97 = sphi 0, %s99
      %s100 = sphi 0, %s97
      %s101 = sphi 0, %s100
      %s117 = sphi 0, %s101
      %s123 = sphi 0, %s125
      %s126 = sphi 0, %s123
      %s127 = sphi 0, %s126
      %s143 = sphi 0, %s127
      %s147 = sphi 0, %s147
      %s149 = sphi 0, %s147
      %s150 = sphi 0, %s149
      %s164 = sphi 0, %s150
      %s168 = sphi 0, %s168
      %s170 = sphi 0, %s168
      %s171 = sphi 0, %s170
      %s185 = sphi 0, %s171
      %s189 = sphi 0, %s189
      %s191 = sphi 0, %s189
      %s192 = sphi 0, %s191
      %s206 = sphi 0, %s192
      %s210 = sphi 0, %s210
      %s212 = sphi 0, %s210
      %s213 = sphi 0, %s212
      %s227 = sphi 0, %s213
      %s235 = sphi 0, %s237
      %s238 = sphi 0, %s235
      %s239 = sphi 0, %s238
      %s255 = sphi 0, %s239
    $region4: #{tpu_custom_call.1} parent=1 // loop_header_branch
      %20 = sbr.rel (%p18) target = $region8
    $region5: #{tpu_custom_call.1} parent=1 // loop_body
      %s22 = ssub.s32 %s17, 1
      %s23 = ssub.s32 %s17, 2
      %s30 = sadd.s32 1, %s25
      %p31 = scmp.ge.s32.totalorder %s30, 2
      %s32 = scalar_select %p31, 0, %s30
      %s33 = sadd.s32 1, %s24
      %s34 = scalar_select %p31, %s33, %s24
      %p35 = scmp.ge.s32.totalorder %s34, 2
      %s36 = scalar_select %p35, 0, %s34
      %s37 = ssub.s32 %s24, %s36
      %s38 = ssub.s32 %s25, %s32
      %s39 = sor.u32 %s37, %s38
      %p40 = scmp.eq.s32.totalorder %s39, 0
      %s42 = sadd.s32 %s41, 1
      %s43 = scalar_select %p40, %s41, %s42
      %p46 = pneg %p40
      %p47 = scmp.eq.s32.totalorder %s17, 3
      %p48 = por %p46, %p47
      %p49 = scmp.ne.s32.totalorder %s41, %s44
      %p50 = scmp.eq.s32.totalorder %s17, 0
      %p51 = por %p49, %p50
      %p52 = scmp.ne.s32.totalorder %s41, %s44
      %p53 = scmp.eq.s32.totalorder %s22, 3
      %p54 = por %p52, %p53
      %p55 = scmp.ne.s32.totalorder %s44, %s45
      %p56 = scmp.eq.s32.totalorder %s22, 0
      %p57 = por %p55, %p56
      %p58 = scmp.ne.s32.totalorder %s44, %s45
      %p59 = scmp.eq.s32.totalorder %s23, 3
      %p60 = por %p58, %p59
      %p62 = scmp.ne.s32.totalorder %s45, %s61
      %p63 = scmp.eq.s32.totalorder %s23, 0
      %p64 = por %p62, %p63
      %s65 = smul.u32 %s24, 2
      %s66 = sadd.s32 %s65, %s25
      %s67 = smul.u32 %s36, 2
      %s68 = sadd.s32 %s67, %s32
      %s69 = ssub.s32 %s66, %s68
      %p70 = scmp.eq.s32.totalorder %s69, 0
      %s72 = sadd.s32 %s71, 1
      %s73 = scalar_select %p70, %s71, %s72
      %p76 = pneg %p70
      %p77 = scmp.eq.s32.totalorder %s17, 3
      %p78 = por %p76, %p77
      %p79 = scmp.ne.s32.totalorder %s71, %s74
      %p80 = scmp.eq.s32.totalorder %s17, 0
      %p81 = por %p79, %p80
      %p82 = scmp.ne.s32.totalorder %s71, %s74
      %p83 = scmp.eq.s32.totalorder %s22, 3
      %p84 = por %p82, %p83
      %p85 = scmp.ne.s32.totalorder %s74, %s75
      %p86 = scmp.eq.s32.totalorder %s22, 0
      %p87 = por %p85, %p86
      %p88 = scmp.ne.s32.totalorder %s74, %s75
      %p89 = scmp.eq.s32.totalorder %s23, 3
      %p90 = por %p88, %p89
      %p92 = scmp.ne.s32.totalorder %s75, %s91
      %p93 = scmp.eq.s32.totalorder %s23, 0
      %p94 = por %p92, %p93
      %s95 = ssub.s32 %s24, %s36
      %p96 = scmp.eq.s32.totalorder %s95, 0
      %s98 = sadd.s32 %s97, 1
      %s99 = scalar_select %p96, %s97, %s98
      %p102 = pneg %p96
      %p103 = scmp.eq.s32.totalorder %s17, 3
      %p104 = por %p102, %p103
      %p105 = scmp.ne.s32.totalorder %s97, %s100
      %p106 = scmp.eq.s32.totalorder %s17, 0
      %p107 = por %p105, %p106
      %p108 = scmp.ne.s32.totalorder %s97, %s100
      %p109 = scmp.eq.s32.totalorder %s22, 3
      %p110 = por %p108, %p109
      %p111 = scmp.ne.s32.totalorder %s100, %s101
      %p112 = scmp.eq.s32.totalorder %s22, 0
      %p113 = por %p111, %p112
      %p114 = scmp.ne.s32.totalorder %s100, %s101
      %p115 = scmp.eq.s32.totalorder %s23, 3
      %p116 = por %p114, %p115
      %p118 = scmp.ne.s32.totalorder %s101, %s117
      %p119 = scmp.eq.s32.totalorder %s23, 0
      %p120 = por %p118, %p119
      %s121 = ssub.s32 %s24, %s36
      %p122 = scmp.eq.s32.totalorder %s121, 0
      %s124 = sadd.s32 %s123, 1
      %s125 = scalar_select %p122, %s123, %s124
      %p128 = pneg %p122
      %p129 = scmp.eq.s32.totalorder %s17, 3
      %p130 = por %p128, %p129
      %p131 = scmp.ne.s32.totalorder %s123, %s126
      %p132 = scmp.eq.s32.totalorder %s17, 0
      %p133 = por %p131, %p132
      %p134 = scmp.ne.s32.totalorder %s123, %s126
      %p135 = scmp.eq.s32.totalorder %s22, 3
      %p136 = por %p134, %p135
      %p137 = scmp.ne.s32.totalorder %s126, %s127
      %p138 = scmp.eq.s32.totalorder %s22, 0
      %p139 = por %p137, %p138
      %p140 = scmp.ne.s32.totalorder %s126, %s127
      %p141 = scmp.eq.s32.totalorder %s23, 3
      %p142 = por %p140, %p141
      %p144 = scmp.ne.s32.totalorder %s127, %s143
      %p145 = scmp.eq.s32.totalorder %s23, 0
      %p146 = por %p144, %p145
      %s148 = sadd.s32 %s147, 1
      %p151 = scmp.eq.s32.totalorder %s17, 3
      %p152 = scmp.ne.s32.totalorder %s147, %s149
      %p153 = scmp.eq.s32.totalorder %s17, 0
      %p154 = por %p152, %p153
      %p155 = scmp.ne.s32.totalorder %s147, %s149
      %p156 = scmp.eq.s32.totalorder %s22, 3
      %p157 = por %p155, %p156
      %p158 = scmp.ne.s32.totalorder %s149, %s150
      %p159 = scmp.eq.s32.totalorder %s22, 0
      %p160 = por %p158, %p159
      %p161 = scmp.ne.s32.totalorder %s149, %s150
      %p162 = scmp.eq.s32.totalorder %s23, 3
      %p163 = por %p161, %p162
      %p165 = scmp.ne.s32.totalorder %s150, %s164
      %p166 = scmp.eq.s32.totalorder %s23, 0
      %p167 = por %p165, %p166
      %s169 = sadd.s32 %s168, 1
      %p172 = scmp.eq.s32.totalorder %s17, 3
      %p173 = scmp.ne.s32.totalorder %s168, %s170
      %p174 = scmp.eq.s32.totalorder %s17, 0
      %p175 = por %p173, %p174
      %p176 = scmp.ne.s32.totalorder %s168, %s170
      %p177 = scmp.eq.s32.totalorder %s22, 3
      %p178 = por %p176, %p177
      %p179 = scmp.ne.s32.totalorder %s170, %s171
      %p180 = scmp.eq.s32.totalorder %s22, 0
      %p181 = por %p179, %p180
      %p182 = scmp.ne.s32.totalorder %s170, %s171
      %p183 = scmp.eq.s32.totalorder %s23, 3
      %p184 = por %p182, %p183
      %p186 = scmp.ne.s32.totalorder %s171, %s185
      %p187 = scmp.eq.s32.totalorder %s23, 0
      %p188 = por %p186, %p187
      %s190 = sadd.s32 %s189, 1
      %p193 = scmp.eq.s32.totalorder %s17, 3
      %p194 = scmp.ne.s32.totalorder %s189, %s191
      %p195 = scmp.eq.s32.totalorder %s17, 0
      %p196 = por %p194, %p195
      %p197 = scmp.ne.s32.totalorder %s189, %s191
      %p198 = scmp.eq.s32.totalorder %s22, 3
      %p199 = por %p197, %p198
      %p200 = scmp.ne.s32.totalorder %s191, %s192
      %p201 = scmp.eq.s32.totalorder %s22, 0
      %p202 = por %p200, %p201
      %p203 = scmp.ne.s32.totalorder %s191, %s192
      %p204 = scmp.eq.s32.totalorder %s23, 3
      %p205 = por %p203, %p204
      %p207 = scmp.ne.s32.totalorder %s192, %s206
      %p208 = scmp.eq.s32.totalorder %s23, 0
      %p209 = por %p207, %p208
      %s211 = sadd.s32 %s210, 1
      %p214 = scmp.eq.s32.totalorder %s17, 3
      %p215 = scmp.ne.s32.totalorder %s210, %s212
      %p216 = scmp.eq.s32.totalorder %s17, 0
      %p217 = por %p215, %p216
      %p218 = scmp.ne.s32.totalorder %s210, %s212
      %p219 = scmp.eq.s32.totalorder %s22, 3
      %p220 = por %p218, %p219
      %p221 = scmp.ne.s32.totalorder %s212, %s213
      %p222 = scmp.eq.s32.totalorder %s22, 0
      %p223 = por %p221, %p222
      %p224 = scmp.ne.s32.totalorder %s212, %s213
      %p225 = scmp.eq.s32.totalorder %s23, 3
      %p226 = por %p224, %p225
      %p228 = scmp.ne.s32.totalorder %s213, %s227
      %p229 = scmp.eq.s32.totalorder %s23, 0
      %p230 = por %p228, %p229
      %s231 = ssub.s32 %s24, %s36
      %s232 = ssub.s32 %s25, %s32
      %s233 = sor.u32 %s231, %s232
      %p234 = scmp.eq.s32.totalorder %s233, 0
      %s236 = sadd.s32 %s235, 1
      %s237 = scalar_select %p234, %s235, %s236
      %p240 = pneg %p234
      %p241 = scmp.eq.s32.totalorder %s17, 3
      %p242 = por %p240, %p241
      %p243 = scmp.ne.s32.totalorder %s235, %s238
      %p244 = scmp.eq.s32.totalorder %s17, 0
      %p245 = por %p243, %p244
      %p246 = scmp.ne.s32.totalorder %s235, %s238
      %p247 = scmp.eq.s32.totalorder %s22, 3
      %p248 = por %p246, %p247
      %p249 = scmp.ne.s32.totalorder %s238, %s239
      %p250 = scmp.eq.s32.totalorder %s22, 0
      %p251 = por %p249, %p250
      %p252 = scmp.ne.s32.totalorder %s238, %s239
      %p253 = scmp.eq.s32.totalorder %s23, 3
      %p254 = por %p252, %p253
      %p256 = scmp.ne.s32.totalorder %s239, %s255
      %p257 = scmp.eq.s32.totalorder %s23, 0
      %p258 = por %p256, %p257
      %p259 = scmp.le.s32.totalorder 1, %s17
      %p260 = scmp.lt.s32.totalorder %s17, 5
      %p261 = pnand %p259, %p260
      %p262 = pneg %p261
      // Predicated region
      $region9: #{tpu_custom_call.1} parent=5 // pred_check
        _
      $region10: #{tpu_custom_call.1} parent=5 // pred_check_branch
        %264 = sbr.rel (%p261) target = $region12
      $region11: #{tpu_custom_call.1} parent=5 // pred_region
        %s265 = ssub.s32 %s17, 1
        // Predicated region
        $region13: #{tpu_custom_call.1} parent=11 // pred_check
          %p266 = pneg %p160
        $region14: #{tpu_custom_call.1} parent=11 // pred_check_branch
          %268 = sbr.rel (%p266) target = $region16
        $region15: #{tpu_custom_call.1} parent=11 // pred_region
          _
        $region16: #{tpu_custom_call.1} parent=11 // pred_fallthru
          _
        // Predicated region
        $region17: #{tpu_custom_call.1} parent=11 // pred_check
          %p269 = pneg %p181
        $region18: #{tpu_custom_call.1} parent=11 // pred_check_branch
          %271 = sbr.rel (%p269) target = $region20
        $region19: #{tpu_custom_call.1} parent=11 // pred_region
          _
        $region20: #{tpu_custom_call.1} parent=11 // pred_fallthru
          _
        // Predicated region
        $region21: #{tpu_custom_call.1} parent=11 // pred_check
          %p272 = pneg %p202
        $region22: #{tpu_custom_call.1} parent=11 // pred_check_branch
          %274 = sbr.rel (%p272) target = $region24
        $region23: #{tpu_custom_call.1} parent=11 // pred_region
          _
        $region24: #{tpu_custom_call.1} parent=11 // pred_fallthru
          _
        // Predicated region
        $region25: #{tpu_custom_call.1} parent=11 // pred_check
          %p275 = pneg %p223
        $region26: #{tpu_custom_call.1} parent=11 // pred_check_branch
          %277 = sbr.rel (%p275) target = $region28
        $region27: #{tpu_custom_call.1} parent=11 // pred_region
          _
        $region28: #{tpu_custom_call.1} parent=11 // pred_fallthru
          _
      $region12: #{tpu_custom_call.1} parent=5 // pred_fallthru
        _
      %p278 = scmp.lt.s32.totalorder %s17, 4
      // Predicated region
      $region29: #{tpu_custom_call.1} parent=5 // pred_check
        %p279 = pneg %p278
      $region30: #{tpu_custom_call.1} parent=5 // pred_check_branch
        %281 = sbr.rel (%p279) target = $region32
      $region31: #{tpu_custom_call.1} parent=5 // pred_region
        // Predicated region
        $region33: #{tpu_custom_call.1} parent=31 // pred_check
          %p282 = pneg %p51
        $region34: #{tpu_custom_call.1} parent=31 // pred_check_branch
          %284 = sbr.rel (%p282) target = $region36
        $region35: #{tpu_custom_call.1} parent=31 // pred_region
          %p285 = scmp.lt.s32.totalorder %s24, 1
          %s286 = scalar_select %p285, %s24, 1
          %p287 = scmp.lt.s32.totalorder %s25, 1
          %s288 = scalar_select %p287, %s25, 1
          %s289 = smul.addr %s286, 2
          %s290 = sadd.s32 %s288, %s289
          %s291 = smul.addr %s290, 8
          %s292 = scalar_lea.vmem %s0, %s291
        $region36: #{tpu_custom_call.1} parent=31 // pred_fallthru
          _
        // Predicated region
        $region37: #{tpu_custom_call.1} parent=31 // pred_check
          %p293 = pneg %p81
        $region38: #{tpu_custom_call.1} parent=31 // pred_check_branch
          %295 = sbr.rel (%p293) target = $region40
        $region39: #{tpu_custom_call.1} parent=31 // pred_region
          %s296 = smul.u32 %s24, 2
          %s297 = sadd.s32 %s296, %s25
          %p298 = scmp.lt.s32.totalorder %s297, 3
          %s299 = scalar_select %p298, %s297, 3
          %s300 = smul.addr %s299, 36
          %s301 = smul.addr %s300, 4
          %s302 = scalar_lea.vmem %s1, %s301
          %s303 = smul.u32 %s24, 2
          %s304 = sadd.s32 %s303, %s25
        $region40: #{tpu_custom_call.1} parent=31 // pred_fallthru
          _
        // Predicated region
        $region41: #{tpu_custom_call.1} parent=31 // pred_check
          %p305 = pneg %p107
        $region42: #{tpu_custom_call.1} parent=31 // pred_check_branch
          %307 = sbr.rel (%p305) target = $region44
        $region43: #{tpu_custom_call.1} parent=31 // pred_region
          %p308 = scmp.lt.s32.totalorder %s24, 1
          %s309 = scalar_select %p308, %s24, 1
          %s310 = smul.addr %s309, 8
          %s311 = scalar_lea.vmem %s2, %s310
        $region44: #{tpu_custom_call.1} parent=31 // pred_fallthru
          _
        // Predicated region
        $region45: #{tpu_custom_call.1} parent=31 // pred_check
          %p312 = pneg %p133
        $region46: #{tpu_custom_call.1} parent=31 // pred_check_branch
          %314 = sbr.rel (%p312) target = $region48
        $region47: #{tpu_custom_call.1} parent=31 // pred_region
          %p315 = scmp.lt.s32.totalorder %s24, 1
          %s316 = scalar_select %p315, %s24, 1
          %s317 = smul.addr %s316, 8
          %s318 = scalar_lea.vmem %s3, %s317
        $region48: #{tpu_custom_call.1} parent=31 // pred_fallthru
          _
      $region32: #{tpu_custom_call.1} parent=5 // pred_fallthru
        _
      %p319 = scmp.le.s32.totalorder 1, %s17
      %p320 = scmp.lt.s32.totalorder %s17, 5
      %p321 = pnand %p319, %p320
      %p322 = pneg %p321
      // Predicated region
      $region49: #{tpu_custom_call.1} parent=5 // pred_check
        _
      $region50: #{tpu_custom_call.1} parent=5 // pred_check_branch
        %324 = sbr.rel (%p321) target = $region52
      $region51: #{tpu_custom_call.1} parent=5 // pred_region
        %s325 = ssub.s32 %s17, 1
        %p326 = scmp.lt.s32.totalorder %s26, 1
        %s327 = scalar_select %p326, %s26, 1
        %p328 = scmp.lt.s32.totalorder %s27, 1
        %s329 = scalar_select %p328, %s27, 1
        %s330 = smul.addr %s327, 2
        %s331 = sadd.s32 %s329, %s330
        %s332 = smul.addr %s331, 8
        %s333 = scalar_lea.vmem %s0, %s332
        %p334 = pneg %p57
        %p335 = pneg %p54
        %s336 = smul.u32 %s26, 2
        %s337 = sadd.s32 %s336, %s27
        %p338 = scmp.lt.s32.totalorder %s337, 3
        %s339 = scalar_select %p338, %s337, 3
        %s340 = smul.addr %s339, 36
        %s341 = smul.addr %s340, 4
        %s342 = scalar_lea.vmem %s1, %s341
        %p343 = pneg %p87
        %p344 = pneg %p84
        %p345 = scmp.lt.s32.totalorder %s26, 1
        %s346 = scalar_select %p345, %s26, 1
        %s347 = smul.addr %s346, 8
        %s348 = scalar_lea.vmem %s2, %s347
        %p349 = pneg %p113
        %p350 = pneg %p110
        %p351 = scmp.lt.s32.totalorder %s26, 1
        %s352 = scalar_select %p351, %s26, 1
        %s353 = smul.addr %s352, 8
        %s354 = scalar_lea.vmem %s3, %s353
        %p355 = pneg %p139
        %p356 = pneg %p136
        %p357 = pneg %p160
        %p358 = pneg %p157
        %p359 = pneg %p181
        %p360 = pneg %p178
        %p361 = pneg %p202
        %p362 = pneg %p199
        %p363 = pneg %p223
        %p364 = pneg %p220
        %p365 = pneg %p251
        %p366 = pneg %p248
        %s367 = sand.u32 %s238, 1
        %s368 = scalar_lea.sflag [#allocation4], %s367
        %s369 = sand.u32 %s238, 1
        %s370 = smul.addr %s369, 8
        %s371 = scalar_lea.vmem [#allocation3], %s370
        %p372 = scmp.lt.s32.totalorder %s26, 1
        %s373 = scalar_select %p372, %s26, 1
        %p374 = scmp.lt.s32.totalorder %s27, 1
        %s375 = scalar_select %p374, %s27, 1
        %s376 = smul.addr %s373, 2
        %s377 = sadd.s32 %s375, %s376
        %s378 = smul.addr %s377, 8
        %s379 = scalar_lea.vmem %s0, %s378
        %s380 = smul.u32 %s26, 2
        %s381 = sadd.s32 %s380, %s27
        %p382 = scmp.lt.s32.totalorder %s381, 3
        %s383 = scalar_select %p382, %s381, 3
        %s384 = smul.addr %s383, 36
        %s385 = smul.addr %s384, 4
        %s386 = scalar_lea.vmem %s1, %s385
        %s387 = smul.u32 %s26, 2
        %s388 = sadd.s32 %s387, %s27
        %p389 = scmp.lt.s32.totalorder %s26, 1
        %s390 = scalar_select %p389, %s26, 1
        %s391 = smul.addr %s390, 8
        %s392 = scalar_lea.vmem %s2, %s391
        %p393 = scmp.lt.s32.totalorder %s26, 1
        %s394 = scalar_select %p393, %s26, 1
        %s395 = smul.addr %s394, 8
        %s396 = scalar_lea.vmem %s3, %s395
        %v398 = vld [vmem:[%s386] sm:$0xf]
        %v399 = vld [vmem:[%s386 + $0x4] sm:$0xf]
        %v400 = vld [vmem:[%s386 + $0x8] sm:$0x1]
        %v401 = vld [vmem:[%s386 + $0xc] sm:$0xf]
        %v402 = vld [vmem:[%s386 + $0x10] sm:$0xf]
        %v403 = vld [vmem:[%s386 + $0x14] sm:$0x1]
        %v404 = vld [vmem:[%s386 + $0x18] sm:$0xf]
        %v405 = vld [vmem:[%s386 + $0x1c] sm:$0xf]
        %v406 = vld [vmem:[%s386 + $0x20] sm:$0x1]
        %v407 = vld [vmem:[%s386 + $0x24] sm:$0xf]
        %v408 = vld [vmem:[%s386 + $0x28] sm:$0xf]
        %v409 = vld [vmem:[%s386 + $0x2c] sm:$0x1]
        %v410 = vld [vmem:[%s386 + $0x30] sm:$0xf]
        %v411 = vld [vmem:[%s386 + $0x34] sm:$0xf]
        %v412 = vld [vmem:[%s386 + $0x38] sm:$0x1]
        %v413 = vld [vmem:[%s386 + $0x3c] sm:$0xf]
        %v414 = vld [vmem:[%s386 + $0x40] sm:$0xf]
        %v415 = vld [vmem:[%s386 + $0x44] sm:$0x1]
        %v416 = vld [vmem:[%s386 + $0x48] sm:$0xf]
        %v417 = vld [vmem:[%s386 + $0x4c] sm:$0xf]
        %v418 = vld [vmem:[%s386 + $0x50] sm:$0x1]
        %v419 = vld [vmem:[%s386 + $0x54] sm:$0xf]
        %v420 = vld [vmem:[%s386 + $0x58] sm:$0xf]
        %v421 = vld [vmem:[%s386 + $0x5c] sm:$0x1]
        %v422 = vld [vmem:[%s386 + $0x60] sm:$0xf]
        %v423 = vld [vmem:[%s386 + $0x64] sm:$0xf]
        %v424 = vld [vmem:[%s386 + $0x68] sm:$0x1]
        %v425 = vld [vmem:[%s386 + $0x6c] sm:$0xf]
        %v426 = vld [vmem:[%s386 + $0x70] sm:$0xf]
        %v427 = vld [vmem:[%s386 + $0x74] sm:$0x1]
        %v428 = vld [vmem:[%s386 + $0x78] sm:$0xf]
        %v429 = vld [vmem:[%s386 + $0x7c] sm:$0xf]
        %v430 = vld [vmem:[%s386 + $0x80] sm:$0x1]
        %v431 = vld [vmem:[%s386 + $0x84] sm:$0xf]
        %v432 = vld [vmem:[%s386 + $0x88] sm:$0xf]
        %v433 = vld [vmem:[%s386 + $0x8c] sm:$0x1]
        %vm434 = vsmask.f32 3328
        %vm435 = vsmask.f32 7440
        %vm436 = vmor %vm434, %vm435
        %v438 = vshrl.u32 %v398, 16
        %v440 = vrot.slane %v438, 4
        %v441 = vshll.u32 %v398, 16
        %v443 = vrot.slane %v441, 5
        %v444 = vor.u32 %v440, %v443
        %v445 = vrot.slane %v444, 4
        %v447 = vshll.u32 %v399, 16
        %v449 = vrot.slane %v447, 5
        %v450 = vsel %vm436, %v445, %v449
        %v451 = vshrl.u32 %v399, 16
        %v453 = vrot.slane %v451, 4
        %v454 = vor.u32 %v453, %v449
        %v455 = vrot.slane %v454, 4
        %v457 = vshll.u32 %v400, 16
        %v459 = vrot.slane %v457, 5
        %v460 = vsel %vm436, %v455, %v459
        %v462 = vshrl.u32 %v401, 16
        %v464 = vrot.slane %v462, 4
        %v465 = vshll.u32 %v401, 16
        %v467 = vrot.slane %v465, 5
        %v468 = vor.u32 %v464, %v467
        %v469 = vrot.slane %v468, 4
        %v471 = vshll.u32 %v402, 16
        %v473 = vrot.slane %v471, 5
        %v474 = vsel %vm436, %v469, %v473
        %v475 = vshrl.u32 %v402, 16
        %v477 = vrot.slane %v475, 4
        %v478 = vor.u32 %v477, %v473
        %v479 = vrot.slane %v478, 4
        %v481 = vshll.u32 %v403, 16
        %v483 = vrot.slane %v481, 5
        %v484 = vsel %vm436, %v479, %v483
        %v486 = vshrl.u32 %v404, 16
        %v488 = vrot.slane %v486, 4
        %v489 = vshll.u32 %v404, 16
        %v491 = vrot.slane %v489, 5
        %v492 = vor.u32 %v488, %v491
        %v493 = vrot.slane %v492, 4
        %v495 = vshll.u32 %v405, 16
        %v497 = vrot.slane %v495, 5
        %v498 = vsel %vm436, %v493, %v497
        %v499 = vshrl.u32 %v405, 16
        %v501 = vrot.slane %v499, 4
        %v502 = vor.u32 %v501, %v497
        %v503 = vrot.slane %v502, 4
        %v505 = vshll.u32 %v406, 16
        %v507 = vrot.slane %v505, 5
        %v508 = vsel %vm436, %v503, %v507
        %v510 = vshrl.u32 %v407, 16
        %v512 = vrot.slane %v510, 4
        %v513 = vshll.u32 %v407, 16
        %v515 = vrot.slane %v513, 5
        %v516 = vor.u32 %v512, %v515
        %v517 = vrot.slane %v516, 4
        %v519 = vshll.u32 %v408, 16
        %v521 = vrot.slane %v519, 5
        %v522 = vsel %vm436, %v517, %v521
        %v523 = vshrl.u32 %v408, 16
        %v525 = vrot.slane %v523, 4
        %v526 = vor.u32 %v525, %v521
        %v527 = vrot.slane %v526, 4
        %v529 = vshll.u32 %v409, 16
        %v531 = vrot.slane %v529, 5
        %v532 = vsel %vm436, %v527, %v531
        %v534 = vshrl.u32 %v410, 16
        %v536 = vrot.slane %v534, 4
        %v537 = vshll.u32 %v410, 16
        %v539 = vrot.slane %v537, 5
        %v540 = vor.u32 %v536, %v539
        %v541 = vrot.slane %v540, 4
        %v543 = vshll.u32 %v411, 16
        %v545 = vrot.slane %v543, 5
        %v546 = vsel %vm436, %v541, %v545
        %v547 = vshrl.u32 %v411, 16
        %v549 = vrot.slane %v547, 4
        %v550 = vor.u32 %v549, %v545
        %v551 = vrot.slane %v550, 4
        %v553 = vshll.u32 %v412, 16
        %v555 = vrot.slane %v553, 5
        %v556 = vsel %vm436, %v551, %v555
        %v558 = vshrl.u32 %v413, 16
        %v560 = vrot.slane %v558, 4
        %v561 = vshll.u32 %v413, 16
        %v563 = vrot.slane %v561, 5
        %v564 = vor.u32 %v560, %v563
        %v565 = vrot.slane %v564, 4
        %v567 = vshll.u32 %v414, 16
        %v569 = vrot.slane %v567, 5
        %v570 = vsel %vm436, %v565, %v569
        %v571 = vshrl.u32 %v414, 16
        %v573 = vrot.slane %v571, 4
        %v574 = vor.u32 %v573, %v569
        %v575 = vrot.slane %v574, 4
        %v577 = vshll.u32 %v415, 16
        %v579 = vrot.slane %v577, 5
        %v580 = vsel %vm436, %v575, %v579
        %v582 = vshrl.u32 %v416, 16
        %v584 = vrot.slane %v582, 4
        %v585 = vshll.u32 %v416, 16
        %v587 = vrot.slane %v585, 5
        %v588 = vor.u32 %v584, %v587
        %v589 = vrot.slane %v588, 4
        %v591 = vshll.u32 %v417, 16
        %v593 = vrot.slane %v591, 5
        %v594 = vsel %vm436, %v589, %v593
        %v595 = vshrl.u32 %v417, 16
        %v597 = vrot.slane %v595, 4
        %v598 = vor.u32 %v597, %v593
        %v599 = vrot.slane %v598, 4
        %v601 = vshll.u32 %v418, 16
        %v603 = vrot.slane %v601, 5
        %v604 = vsel %vm436, %v599, %v603
        %v606 = vshrl.u32 %v419, 16
        %v608 = vrot.slane %v606, 4
        %v609 = vshll.u32 %v419, 16
        %v611 = vrot.slane %v609, 5
        %v612 = vor.u32 %v608, %v611
        %v613 = vrot.slane %v612, 4
        %v615 = vshll.u32 %v420, 16
        %v617 = vrot.slane %v615, 5
        %v618 = vsel %vm436, %v613, %v617
        %v619 = vshrl.u32 %v420, 16
        %v621 = vrot.slane %v619, 4
        %v622 = vor.u32 %v621, %v617
        %v623 = vrot.slane %v622, 4
        %v625 = vshll.u32 %v421, 16
        %v627 = vrot.slane %v625, 5
        %v628 = vsel %vm436, %v623, %v627
        %v630 = vshrl.u32 %v422, 16
        %v632 = vrot.slane %v630, 4
        %v633 = vshll.u32 %v422, 16
        %v635 = vrot.slane %v633, 5
        %v636 = vor.u32 %v632, %v635
        %v637 = vrot.slane %v636, 4
        %v639 = vshll.u32 %v423, 16
        %v641 = vrot.slane %v639, 5
        %v642 = vsel %vm436, %v637, %v641
        %v643 = vshrl.u32 %v423, 16
        %v645 = vrot.slane %v643, 4
        %v646 = vor.u32 %v645, %v641
        %v647 = vrot.slane %v646, 4
        %v649 = vshll.u32 %v424, 16
        %v651 = vrot.slane %v649, 5
        %v652 = vsel %vm436, %v647, %v651
        %v654 = vshrl.u32 %v425, 16
        %v656 = vrot.slane %v654, 4
        %v657 = vshll.u32 %v425, 16
        %v659 = vrot.slane %v657, 5
        %v660 = vor.u32 %v656, %v659
        %v661 = vrot.slane %v660, 4
        %v663 = vshll.u32 %v426, 16
        %v665 = vrot.slane %v663, 5
        %v666 = vsel %vm436, %v661, %v665
        %v667 = vshrl.u32 %v426, 16
        %v669 = vrot.slane %v667, 4
        %v670 = vor.u32 %v669, %v665
        %v671 = vrot.slane %v670, 4
        %v673 = vshll.u32 %v427, 16
        %v675 = vrot.slane %v673, 5
        %v676 = vsel %vm436, %v671, %v675
        %vm707 = vcmask 1042432
        %vm708 = vcmask 1046532
        %vm709 = vmor %vm707, %vm708
        %v710 = vrot.slane %v398, 5
        %v711 = vrot.slane %v710, 4
        %v712 = vrot.slane %v399, 5
        %v713 = vsel %vm709, %v711, %v712
        %v714 = vrot.slane %v712, 4
        %v715 = vrot.slane %v400, 5
        %v716 = vsel %vm709, %v714, %v715
        %v717 = vrot.slane %v401, 5
        %v718 = vrot.slane %v717, 4
        %v719 = vrot.slane %v402, 5
        %v720 = vsel %vm709, %v718, %v719
        %v721 = vrot.slane %v719, 4
        %v722 = vrot.slane %v403, 5
        %v723 = vsel %vm709, %v721, %v722
        %v724 = vrot.slane %v404, 5
        %v725 = vrot.slane %v724, 4
        %v726 = vrot.slane %v405, 5
        %v727 = vsel %vm709, %v725, %v726
        %v728 = vrot.slane %v726, 4
        %v729 = vrot.slane %v406, 5
        %v730 = vsel %vm709, %v728, %v729
        %v731 = vrot.slane %v407, 5
        %v732 = vrot.slane %v731, 4
        %v733 = vrot.slane %v408, 5
        %v734 = vsel %vm709, %v732, %v733
        %v735 = vrot.slane %v733, 4
        %v736 = vrot.slane %v409, 5
        %v737 = vsel %vm709, %v735, %v736
        %v738 = vrot.slane %v410, 5
        %v739 = vrot.slane %v738, 4
        %v740 = vrot.slane %v411, 5
        %v741 = vsel %vm709, %v739, %v740
        %v742 = vrot.slane %v740, 4
        %v743 = vrot.slane %v412, 5
        %v744 = vsel %vm709, %v742, %v743
        %v745 = vrot.slane %v413, 5
        %v746 = vrot.slane %v745, 4
        %v747 = vrot.slane %v414, 5
        %v748 = vsel %vm709, %v746, %v747
        %v749 = vrot.slane %v747, 4
        %v750 = vrot.slane %v415, 5
        %v751 = vsel %vm709, %v749, %v750
        %v752 = vrot.slane %v416, 5
        %v753 = vrot.slane %v752, 4
        %v754 = vrot.slane %v417, 5
        %v755 = vsel %vm709, %v753, %v754
        %v756 = vrot.slane %v754, 4
        %v757 = vrot.slane %v418, 5
        %v758 = vsel %vm709, %v756, %v757
        %v759 = vrot.slane %v419, 5
        %v760 = vrot.slane %v759, 4
        %v761 = vrot.slane %v420, 5
        %v762 = vsel %vm709, %v760, %v761
        %v763 = vrot.slane %v761, 4
        %v764 = vrot.slane %v421, 5
        %v765 = vsel %vm709, %v763, %v764
        %v766 = vrot.slane %v422, 5
        %v767 = vrot.slane %v766, 4
        %v768 = vrot.slane %v423, 5
        %v769 = vsel %vm709, %v767, %v768
        %v770 = vrot.slane %v768, 4
        %v771 = vrot.slane %v424, 5
        %v772 = vsel %vm709, %v770, %v771
        %v773 = vrot.slane %v425, 5
        %v774 = vrot.slane %v773, 4
        %v775 = vrot.slane %v426, 5
        %v776 = vsel %vm709, %v774, %v775
        %v777 = vrot.slane %v775, 4
        %v778 = vrot.slane %v427, 5
        %v779 = vsel %vm709, %v777, %v778
        %v781 = vshrl.u32 %v428, 16
        %v783 = vrot.slane %v781, 4
        %v784 = vshll.u32 %v428, 16
        %v786 = vrot.slane %v784, 5
        %v787 = vor.u32 %v783, %v786
        %v788 = vrot.slane %v787, 4
        %v790 = vshll.u32 %v429, 16
        %v792 = vrot.slane %v790, 5
        %v793 = vsel %vm436, %v788, %v792
        %v794 = vshrl.u32 %v429, 16
        %v796 = vrot.slane %v794, 4
        %v797 = vor.u32 %v796, %v792
        %v798 = vrot.slane %v797, 4
        %v800 = vshll.u32 %v430, 16
        %v802 = vrot.slane %v800, 5
        %v803 = vsel %vm436, %v798, %v802
        %v807 = vrot.slane %v428, 5
        %v808 = vrot.slane %v807, 4
        %v809 = vrot.slane %v429, 5
        %v810 = vsel %vm709, %v808, %v809
        %v811 = vrot.slane %v809, 4
        %v812 = vrot.slane %v430, 5
        %v813 = vsel %vm709, %v811, %v812
        %v815 = vshrl.u32 %v431, 16
        %v817 = vrot.slane %v815, 4
        %v818 = vshll.u32 %v431, 16
        %v820 = vrot.slane %v818, 5
        %v821 = vor.u32 %v817, %v820
        %v822 = vrot.slane %v821, 4
        %v824 = vshll.u32 %v432, 16
        %v826 = vrot.slane %v824, 5
        %v827 = vsel %vm436, %v822, %v826
        %v828 = vshrl.u32 %v432, 16
        %v830 = vrot.slane %v828, 4
        %v831 = vor.u32 %v830, %v826
        %v832 = vrot.slane %v831, 4
        %v834 = vshll.u32 %v433, 16
        %v836 = vrot.slane %v834, 5
        %v837 = vsel %vm436, %v832, %v836
        %v841 = vrot.slane %v431, 5
        %v842 = vrot.slane %v841, 4
        %v843 = vrot.slane %v432, 5
        %v844 = vsel %vm709, %v842, %v843
        %v845 = vrot.slane %v843, 4
        %v846 = vrot.slane %v433, 5
        %v847 = vsel %vm709, %v845, %v846
        %v848 = vunpack.c.l.b16 %v398
        %v849 = vunpack.c.l.b16 %v399
        %v850 = vunpack.c.l.b16 %v401
        %v851 = vunpack.c.l.b16 %v402
        %v852 = vunpack.c.l.b16 %v404
        %v853 = vunpack.c.l.b16 %v405
        %v854 = vunpack.c.l.b16 %v407
        %v855 = vunpack.c.l.b16 %v408
        %v856 = vunpack.c.l.b16 %v410
        %v857 = vunpack.c.l.b16 %v411
        %v858 = vunpack.c.l.b16 %v413
        %v859 = vunpack.c.l.b16 %v414
        %v860 = vunpack.c.l.b16 %v416
        %v861 = vunpack.c.l.b16 %v417
        %v862 = vunpack.c.l.b16 %v419
        %v863 = vunpack.c.l.b16 %v420
        %v864 = vunpack.c.l.b16 %v422
        %v865 = vunpack.c.l.b16 %v423
        %v866 = vunpack.c.l.b16 %v425
        %v867 = vunpack.c.l.b16 %v426
        %v868 = vpack.c.b16 %v849, %v848
        %v869 = vpack.c.b16 %v851, %v850
        %v870 = vpack.c.b16 %v853, %v852
        %v871 = vpack.c.b16 %v855, %v854
        %v872 = vpack.c.b16 %v857, %v856
        %v873 = vpack.c.b16 %v859, %v858
        %v874 = vpack.c.b16 %v861, %v860
        %v875 = vpack.c.b16 %v863, %v862
        %v876 = vpack.c.b16 %v865, %v864
        %v877 = vpack.c.b16 %v867, %v866
        %v878 = vunpack.c.l.b16 %v450
        %v879 = vunpack.c.l.b16 %v460
        %v880 = vunpack.c.l.b16 %v474
        %v881 = vunpack.c.l.b16 %v484
        %v882 = vunpack.c.l.b16 %v498
        %v883 = vunpack.c.l.b16 %v508
        %v884 = vunpack.c.l.b16 %v522
        %v885 = vunpack.c.l.b16 %v532
        %v886 = vunpack.c.l.b16 %v546
        %v887 = vunpack.c.l.b16 %v556
        %v888 = vunpack.c.l.b16 %v570
        %v889 = vunpack.c.l.b16 %v580
        %v890 = vunpack.c.l.b16 %v594
        %v891 = vunpack.c.l.b16 %v604
        %v892 = vunpack.c.l.b16 %v618
        %v893 = vunpack.c.l.b16 %v628
        %v894 = vunpack.c.l.b16 %v642
        %v895 = vunpack.c.l.b16 %v652
        %v896 = vunpack.c.l.b16 %v666
        %v897 = vunpack.c.l.b16 %v676
        %v898 = vpack.c.b16 %v879, %v878
        %v899 = vpack.c.b16 %v881, %v880
        %v900 = vpack.c.b16 %v883, %v882
        %v901 = vpack.c.b16 %v885, %v884
        %v902 = vpack.c.b16 %v887, %v886
        %v903 = vpack.c.b16 %v889, %v888
        %v904 = vpack.c.b16 %v891, %v890
        %v905 = vpack.c.b16 %v893, %v892
        %v906 = vpack.c.b16 %v895, %v894
        %v907 = vpack.c.b16 %v897, %v896
        %908 = vrot.lane.b32.xlu0 %v898, 4
        %v909 = vpop.permute.xlu0 %908
        %910 = vrot.lane.b32.xlu0 %v899, 4
        %v911 = vpop.permute.xlu0 %910
        %912 = vrot.lane.b32.xlu0 %v900, 4
        %v913 = vpop.permute.xlu0 %912
        %914 = vrot.lane.b32.xlu0 %v901, 4
        %v915 = vpop.permute.xlu0 %914
        %916 = vrot.lane.b32.xlu0 %v902, 4
        %v917 = vpop.permute.xlu0 %916
        %918 = vrot.lane.b32.xlu0 %v903, 4
        %v919 = vpop.permute.xlu0 %918
        %920 = vrot.lane.b32.xlu0 %v904, 4
        %v921 = vpop.permute.xlu0 %920
        %922 = vrot.lane.b32.xlu0 %v905, 4
        %v923 = vpop.permute.xlu0 %922
        %924 = vrot.lane.b32.xlu0 %v906, 4
        %v925 = vpop.permute.xlu0 %924
        %926 = vrot.lane.b32.xlu0 %v907, 4
        %v927 = vpop.permute.xlu0 %926
        %v928 = vunpack.c.l.b16 %v713
        %v929 = vunpack.c.l.b16 %v716
        %v930 = vunpack.c.l.b16 %v720
        %v931 = vunpack.c.l.b16 %v723
        %v932 = vunpack.c.l.b16 %v727
        %v933 = vunpack.c.l.b16 %v730
        %v934 = vunpack.c.l.b16 %v734
        %v935 = vunpack.c.l.b16 %v737
        %v936 = vunpack.c.l.b16 %v741
        %v937 = vunpack.c.l.b16 %v744
        %v938 = vunpack.c.l.b16 %v748
        %v939 = vunpack.c.l.b16 %v751
        %v940 = vunpack.c.l.b16 %v755
        %v941 = vunpack.c.l.b16 %v758
        %v942 = vunpack.c.l.b16 %v762
        %v943 = vunpack.c.l.b16 %v765
        %v944 = vunpack.c.l.b16 %v769
        %v945 = vunpack.c.l.b16 %v772
        %v946 = vunpack.c.l.b16 %v776
        %v947 = vunpack.c.l.b16 %v779
        %v948 = vpack.c.b16 %v929, %v928
        %v949 = vpack.c.b16 %v931, %v930
        %v950 = vpack.c.b16 %v933, %v932
        %v951 = vpack.c.b16 %v935, %v934
        %v952 = vpack.c.b16 %v937, %v936
        %v953 = vpack.c.b16 %v939, %v938
        %v954 = vpack.c.b16 %v941, %v940
        %v955 = vpack.c.b16 %v943, %v942
        %v956 = vpack.c.b16 %v945, %v944
        %v957 = vpack.c.b16 %v947, %v946
        %958 = vrot.lane.b32.xlu0 %v948, 8
        %v959 = vpop.permute.xlu0 %958
        %960 = vrot.lane.b32.xlu0 %v949, 8
        %v961 = vpop.permute.xlu0 %960
        %962 = vrot.lane.b32.xlu0 %v950, 8
        %v963 = vpop.permute.xlu0 %962
        %964 = vrot.lane.b32.xlu0 %v951, 8
        %v965 = vpop.permute.xlu0 %964
        %966 = vrot.lane.b32.xlu0 %v952, 8
        %v967 = vpop.permute.xlu0 %966
        %968 = vrot.lane.b32.xlu0 %v953, 8
        %v969 = vpop.permute.xlu0 %968
        %970 = vrot.lane.b32.xlu0 %v954, 8
        %v971 = vpop.permute.xlu0 %970
        %972 = vrot.lane.b32.xlu0 %v955, 8
        %v973 = vpop.permute.xlu0 %972
        %974 = vrot.lane.b32.xlu0 %v956, 8
        %v975 = vpop.permute.xlu0 %974
        %976 = vrot.lane.b32.xlu0 %v957, 8
        %v977 = vpop.permute.xlu0 %976
        %v978 = vunpack.c.l.b16 %v428
        %v979 = vunpack.c.l.b16 %v429
        %v980 = vpack.c.b16 %v979, %v978
        %981 = vrot.lane.b32.xlu0 %v869, 12
        %v982 = vpop.permute.xlu0 %981
        %983 = vrot.lane.b32.xlu0 %v870, 12
        %v984 = vpop.permute.xlu0 %983
        %985 = vrot.lane.b32.xlu0 %v871, 12
        %v986 = vpop.permute.xlu0 %985
        %987 = vrot.lane.b32.xlu0 %v872, 12
        %v988 = vpop.permute.xlu0 %987
        %989 = vrot.lane.b32.xlu0 %v873, 12
        %v990 = vpop.permute.xlu0 %989
        %991 = vrot.lane.b32.xlu0 %v874, 12
        %v992 = vpop.permute.xlu0 %991
        %993 = vrot.lane.b32.xlu0 %v875, 12
        %v994 = vpop.permute.xlu0 %993
        %995 = vrot.lane.b32.xlu0 %v876, 12
        %v996 = vpop.permute.xlu0 %995
        %997 = vrot.lane.b32.xlu0 %v877, 12
        %v998 = vpop.permute.xlu0 %997
        %999 = vrot.lane.b32.xlu0 %v980, 12
        %v1000 = vpop.permute.xlu0 %999
        %v1001 = vunpack.c.l.b16 %v793
        %v1002 = vunpack.c.l.b16 %v803
        %v1003 = vpack.c.b16 %v1002, %v1001
        %1004 = vrot.lane.b32.xlu0 %v899, 16
        %v1005 = vpop.permute.xlu0 %1004
        %1006 = vrot.lane.b32.xlu0 %v900, 16
        %v1007 = vpop.permute.xlu0 %1006
        %1008 = vrot.lane.b32.xlu0 %v901, 16
        %v1009 = vpop.permute.xlu0 %1008
        %1010 = vrot.lane.b32.xlu0 %v902, 16
        %v1011 = vpop.permute.xlu0 %1010
        %1012 = vrot.lane.b32.xlu0 %v903, 16
        %v1013 = vpop.permute.xlu0 %1012
        %1014 = vrot.lane.b32.xlu0 %v904, 16
        %v1015 = vpop.permute.xlu0 %1014
        %1016 = vrot.lane.b32.xlu0 %v905, 16
        %v1017 = vpop.permute.xlu0 %1016
        %1018 = vrot.lane.b32.xlu0 %v906, 16
        %v1019 = vpop.permute.xlu0 %1018
        %1020 = vrot.lane.b32.xlu0 %v907, 16
        %v1021 = vpop.permute.xlu0 %1020
        %1022 = vrot.lane.b32.xlu0 %v1003, 16
        %v1023 = vpop.permute.xlu0 %1022
        %v1024 = vunpack.c.l.b16 %v810
        %v1025 = vunpack.c.l.b16 %v813
        %v1026 = vpack.c.b16 %v1025, %v1024
        %1027 = vrot.lane.b32.xlu0 %v949, 20
        %v1028 = vpop.permute.xlu0 %1027
        %1029 = vrot.lane.b32.xlu0 %v950, 20
        %v1030 = vpop.permute.xlu0 %1029
        %1031 = vrot.lane.b32.xlu0 %v951, 20
        %v1032 = vpop.permute.xlu0 %1031
        %1033 = vrot.lane.b32.xlu0 %v952, 20
        %v1034 = vpop.permute.xlu0 %1033
        %1035 = vrot.lane.b32.xlu0 %v953, 20
        %v1036 = vpop.permute.xlu0 %1035
        %1037 = vrot.lane.b32.xlu0 %v954, 20
        %v1038 = vpop.permute.xlu0 %1037
        %1039 = vrot.lane.b32.xlu0 %v955, 20
        %v1040 = vpop.permute.xlu0 %1039
        %1041 = vrot.lane.b32.xlu0 %v956, 20
        %v1042 = vpop.permute.xlu0 %1041
        %1043 = vrot.lane.b32.xlu0 %v957, 20
        %v1044 = vpop.permute.xlu0 %1043
        %1045 = vrot.lane.b32.xlu0 %v1026, 20
        %v1046 = vpop.permute.xlu0 %1045
        %v1047 = vunpack.c.l.b16 %v431
        %v1048 = vunpack.c.l.b16 %v432
        %v1049 = vpack.c.b16 %v1048, %v1047
        %1050 = vrot.lane.b32.xlu0 %v870, 24
        %v1051 = vpop.permute.xlu0 %1050
        %1052 = vrot.lane.b32.xlu0 %v871, 24
        %v1053 = vpop.permute.xlu0 %1052
        %1054 = vrot.lane.b32.xlu0 %v872, 24
        %v1055 = vpop.permute.xlu0 %1054
        %1056 = vrot.lane.b32.xlu0 %v873, 24
        %v1057 = vpop.permute.xlu0 %1056
        %1058 = vrot.lane.b32.xlu0 %v874, 24
        %v1059 = vpop.permute.xlu0 %1058
        %1060 = vrot.lane.b32.xlu0 %v875, 24
        %v1061 = vpop.permute.xlu0 %1060
        %1062 = vrot.lane.b32.xlu0 %v876, 24
        %v1063 = vpop.permute.xlu0 %1062
        %1064 = vrot.lane.b32.xlu0 %v877, 24
        %v1065 = vpop.permute.xlu0 %1064
        %1066 = vrot.lane.b32.xlu0 %v980, 24
        %v1067 = vpop.permute.xlu0 %1066
        %1068 = vrot.lane.b32.xlu0 %v1049, 24
        %v1069 = vpop.permute.xlu0 %1068
        %v1070 = vunpack.c.l.b16 %v827
        %v1071 = vunpack.c.l.b16 %v837
        %v1072 = vpack.c.b16 %v1071, %v1070
        %1073 = vrot.lane.b32.xlu0 %v900, 28
        %v1074 = vpop.permute.xlu0 %1073
        %1075 = vrot.lane.b32.xlu0 %v901, 28
        %v1076 = vpop.permute.xlu0 %1075
        %1077 = vrot.lane.b32.xlu0 %v902, 28
        %v1078 = vpop.permute.xlu0 %1077
        %1079 = vrot.lane.b32.xlu0 %v903, 28
        %v1080 = vpop.permute.xlu0 %1079
        %1081 = vrot.lane.b32.xlu0 %v904, 28
        %v1082 = vpop.permute.xlu0 %1081
        %1083 = vrot.lane.b32.xlu0 %v905, 28
        %v1084 = vpop.permute.xlu0 %1083
        %1085 = vrot.lane.b32.xlu0 %v906, 28
        %v1086 = vpop.permute.xlu0 %1085
        %1087 = vrot.lane.b32.xlu0 %v907, 28
        %v1088 = vpop.permute.xlu0 %1087
        %1089 = vrot.lane.b32.xlu0 %v1003, 28
        %v1090 = vpop.permute.xlu0 %1089
        %1091 = vrot.lane.b32.xlu0 %v1072, 28
        %v1092 = vpop.permute.xlu0 %1091
        %v1093 = vunpack.c.l.b16 %v844
        %v1094 = vunpack.c.l.b16 %v847
        %v1095 = vpack.c.b16 %v1094, %v1093
        %1096 = vrot.lane.b32.xlu0 %v950, 32
        %v1097 = vpop.permute.xlu0 %1096
        %1098 = vrot.lane.b32.xlu0 %v951, 32
        %v1099 = vpop.permute.xlu0 %1098
        %1100 = vrot.lane.b32.xlu0 %v952, 32
        %v1101 = vpop.permute.xlu0 %1100
        %1102 = vrot.lane.b32.xlu0 %v953, 32
        %v1103 = vpop.permute.xlu0 %1102
        %1104 = vrot.lane.b32.xlu0 %v954, 32
        %v1105 = vpop.permute.xlu0 %1104
        %1106 = vrot.lane.b32.xlu0 %v955, 32
        %v1107 = vpop.permute.xlu0 %1106
        %1108 = vrot.lane.b32.xlu0 %v956, 32
        %v1109 = vpop.permute.xlu0 %1108
        %1110 = vrot.lane.b32.xlu0 %v957, 32
        %v1111 = vpop.permute.xlu0 %1110
        %1112 = vrot.lane.b32.xlu0 %v1026, 32
        %v1113 = vpop.permute.xlu0 %1112
        %1114 = vrot.lane.b32.xlu0 %v1095, 32
        %v1115 = vpop.permute.xlu0 %1114
        %vm1116 = vcmask 31744
        %v1119 = vsel %vm1116, %v868, %v909
        %v1122 = vsel %vm1116, %v869, %v911
        %v1125 = vsel %vm1116, %v870, %v913
        %v1128 = vsel %vm1116, %v871, %v915
        %v1131 = vsel %vm1116, %v872, %v917
        %v1134 = vsel %vm1116, %v873, %v919
        %v1137 = vsel %vm1116, %v874, %v921
        %v1140 = vsel %vm1116, %v875, %v923
        %v1143 = vsel %vm1116, %v876, %v925
        %v1146 = vsel %vm1116, %v877, %v927
        %vm1147 = vcmask 64512
        %v1149 = vsel %vm1147, %v1119, %v959
        %v1151 = vsel %vm1147, %v1122, %v961
        %v1153 = vsel %vm1147, %v1125, %v963
        %v1155 = vsel %vm1147, %v1128, %v965
        %v1157 = vsel %vm1147, %v1131, %v967
        %v1159 = vsel %vm1147, %v1134, %v969
        %v1161 = vsel %vm1147, %v1137, %v971
        %v1163 = vsel %vm1147, %v1140, %v973
        %v1165 = vsel %vm1147, %v1143, %v975
        %v1167 = vsel %vm1147, %v1146, %v977
        %vm1168 = vcmask 97280
        %v1170 = vsel %vm1168, %v1149, %v982
        %v1172 = vsel %vm1168, %v1151, %v984
        %v1174 = vsel %vm1168, %v1153, %v986
        %v1176 = vsel %vm1168, %v1155, %v988
        %v1178 = vsel %vm1168, %v1157, %v990
        %v1180 = vsel %vm1168, %v1159, %v992
        %v1182 = vsel %vm1168, %v1161, %v994
        %v1184 = vsel %vm1168, %v1163, %v996
        %v1186 = vsel %vm1168, %v1165, %v998
        %v1188 = vsel %vm1168, %v1167, %v1000
        %vm1189 = vcmask 130048
        %v1191 = vsel %vm1189, %v1170, %v1005
        %v1193 = vsel %vm1189, %v1172, %v1007
        %v1195 = vsel %vm1189, %v1174, %v1009
        %v1197 = vsel %vm1189, %v1176, %v1011
        %v1199 = vsel %vm1189, %v1178, %v1013
        %v1201 = vsel %vm1189, %v1180, %v1015
        %v1203 = vsel %vm1189, %v1182, %v1017
        %v1205 = vsel %vm1189, %v1184, %v1019
        %v1207 = vsel %vm1189, %v1186, %v1021
        %v1209 = vsel %vm1189, %v1188, %v1023
        %vm1210 = vcmask 162816
        %v1212 = vsel %vm1210, %v1191, %v1028
        %v1214 = vsel %vm1210, %v1193, %v1030
        %v1216 = vsel %vm1210, %v1195, %v1032
        %v1218 = vsel %vm1210, %v1197, %v1034
        %v1220 = vsel %vm1210, %v1199, %v1036
        %v1222 = vsel %vm1210, %v1201, %v1038
        %v1224 = vsel %vm1210, %v1203, %v1040
        %v1226 = vsel %vm1210, %v1205, %v1042
        %v1228 = vsel %vm1210, %v1207, %v1044
        %v1230 = vsel %vm1210, %v1209, %v1046
        %vm1231 = vcmask 195584
        %v1233 = vsel %vm1231, %v1212, %v1051
        %v1235 = vsel %vm1231, %v1214, %v1053
        %v1237 = vsel %vm1231, %v1216, %v1055
        %v1239 = vsel %vm1231, %v1218, %v1057
        %v1241 = vsel %vm1231, %v1220, %v1059
        %v1243 = vsel %vm1231, %v1222, %v1061
        %v1245 = vsel %vm1231, %v1224, %v1063
        %v1247 = vsel %vm1231, %v1226, %v1065
        %v1249 = vsel %vm1231, %v1228, %v1067
        %v1251 = vsel %vm1231, %v1230, %v1069
        %vm1252 = vcmask 228352
        %v1254 = vsel %vm1252, %v1233, %v1074
        %v1256 = vsel %vm1252, %v1235, %v1076
        %v1258 = vsel %vm1252, %v1237, %v1078
        %v1260 = vsel %vm1252, %v1239, %v1080
        %v1262 = vsel %vm1252, %v1241, %v1082
        %v1264 = vsel %vm1252, %v1243, %v1084
        %v1266 = vsel %vm1252, %v1245, %v1086
        %v1268 = vsel %vm1252, %v1247, %v1088
        %v1270 = vsel %vm1252, %v1249, %v1090
        %v1272 = vsel %vm1252, %v1251, %v1092
        %vm1273 = vcmask 261120
        %v1275 = vsel %vm1273, %v1254, %v1097
        %v1277 = vsel %vm1273, %v1256, %v1099
        %v1279 = vsel %vm1273, %v1258, %v1101
        %v1281 = vsel %vm1273, %v1260, %v1103
        %v1283 = vsel %vm1273, %v1262, %v1105
        %v1285 = vsel %vm1273, %v1264, %v1107
        %v1287 = vsel %vm1273, %v1266, %v1109
        %v1289 = vsel %vm1273, %v1268, %v1111
        %v1291 = vsel %vm1273, %v1270, %v1113
        %v1293 = vsel %vm1273, %v1272, %v1115
        %v1294 = vld [vmem:[%s4] sm:$0xf]
        %v1295 = vld [vmem:[%s4 + $0x4] sm:$0xf]
        %v1296 = vld [vmem:[%s4 + $0x8] sm:$0xf]
        %v1297 = vld [vmem:[%s4 + $0xc] sm:$0xf]
        %v1298 = vld [vmem:[%s4 + $0x10] sm:$0x3]
        %v1299 = vld [vmem:[%s5] sm:$0x1]
        %v1301 = vlaneseq
        %v1302 = vshrl.u32 %v1301, 7
        %v1303 = vsub.s32 0, %v1302
        %v1304 = vrot.slane %v1299, %v1303
        %v1311 = vunpack.c.l.b16 %v1294
        %v1312 = vunpack.c.l.b16 %v1295
        %v1313 = vunpack.c.l.b16 %v1296
        %v1314 = vunpack.c.l.b16 %v1297
        %v1315 = vunpack.c.l.b16 %v1298
        %v1316 = vpack.c.b16 %v1312, %v1311
        %v1317 = vpack.c.b16 %v1314, %v1313
        %v1318 = vpack.c.b16 %v1315, %v1315
        %vm1321 = vcmask 293888
        %v1322 = vsel %vm1321, %v1275, 0
        %v1324 = vsel %vm1321, %v1277, 0
        %v1326 = vsel %vm1321, %v1279, 0
        %v1328 = vsel %vm1321, %v1281, 0
        %v1330 = vsel %vm1321, %v1283, 0
        %v1332 = vsel %vm1321, %v1285, 0
        %v1334 = vsel %vm1321, %v1287, 0
        %v1336 = vsel %vm1321, %v1289, 0
        %v1338 = vsel %vm1321, %v1291, 0
        %v1340 = vsel %vm1321, %v1293, 0
        %vm1342 = vcmask 1041408
        %v1344 = vsel %vm1342, %v1318, 0
        %1346 = vmatprep.subr.bf16.mxu0 0
        %1347 = vmatpush1.bf16.msra.mxu0 0
        %1348 = vmatprep.subr.bf16.mxu0 0
        %1349 = vmatpush1.bf16.msra.mxu0 0
        %1350 = vmatprep.subr.bf16.mxu0 0
        %1351 = vmatpush1.bf16.msra.mxu0 0
        %1352 = vmatprep.subr.bf16.mxu0 0
        %1353 = vmatpush1.bf16.msra.mxu0 0
        %1354 = vmatprep.subr.bf16.mxu0 0
        %1355 = vmatpush1.bf16.msra.mxu0 0
        %1356 = vmatprep.subr.bf16.mxu0 0
        %1357 = vmatpush1.bf16.msra.mxu0 %v1344
        %1358 = vmatprep.subr.bf16.mxu0 0
        %1359 = vmatpush1.bf16.msra.mxu0 %v1317
        %1360 = vmatprep.subr.bf16.mxu0 0
        %1361 = vmatpush1.bf16.msra.mxu0 %v1316
        %1362 = vmatprep.subr.bf16.mxu0 0
        %1363 = vmatpush2.bf16.msra.mxu0 0
        %1364 = vmatprep.subr.bf16.mxu0 0
        %1365 = vmatpush2.bf16.msra.mxu0 0
        %1366 = vmatprep.subr.bf16.mxu0 0
        %1367 = vmatpush2.bf16.msra.mxu0 0
        %1368 = vmatprep.subr.bf16.mxu0 0
        %1369 = vmatpush2.bf16.msra.mxu0 0
        %1370 = vmatprep.subr.bf16.mxu0 0
        %1371 = vmatpush2.bf16.msra.mxu0 0
        %1372 = vmatprep.subr.bf16.mxu0 0
        %1373 = vmatpush2.bf16.msra.mxu0 0
        %1374 = vmatprep.subr.bf16.mxu0 0
        %1375 = vmatpush2.bf16.msra.mxu0 0
        %1376 = vmatprep.subr.bf16.mxu0 0
        %1377 = vmatpush2.bf16.msra.mxu0 0
        %1378 = vmatprep.mubr.bf16.mxu0 0
        %1379 = vmatmul.mubr.bf16.gmra.mxu0 %v1322
        %v1380 = vpop.f32.mrf.mxu0
        %v1381 = vadd.f32 %v1304, %v1380
        %v1382 = vpop.f32.mrf.mxu0
        %v1383 = vpop.f32.mrf.mxu0
        %v1384 = vadd.f32 %v1304, %v1383
        %v1385 = vpop.f32.mrf.mxu0
        %1386 = vmatprep.mubr.bf16.mxu0 0
        %1387 = vmatmul.mubr.bf16.gmra.mxu0 %v1324
        %v1388 = vpop.f32.mrf.mxu0
        %v1389 = vadd.f32 %v1304, %v1388
        %v1390 = vpop.f32.mrf.mxu0
        %v1391 = vpop.f32.mrf.mxu0
        %v1392 = vadd.f32 %v1304, %v1391
        %v1393 = vpop.f32.mrf.mxu0
        %1394 = vmatprep.mubr.bf16.mxu0 0
        %1395 = vmatmul.mubr.bf16.gmra.mxu0 %v1326
        %v1396 = vpop.f32.mrf.mxu0
        %v1397 = vadd.f32 %v1304, %v1396
        %v1398 = vpop.f32.mrf.mxu0
        %v1399 = vpop.f32.mrf.mxu0
        %v1400 = vadd.f32 %v1304, %v1399
        %v1401 = vpop.f32.mrf.mxu0
        %1402 = vmatprep.mubr.bf16.mxu0 0
        %1403 = vmatmul.mubr.bf16.gmra.mxu0 %v1328
        %v1404 = vpop.f32.mrf.mxu0
        %v1405 = vadd.f32 %v1304, %v1404
        %v1406 = vpop.f32.mrf.mxu0
        %v1407 = vpop.f32.mrf.mxu0
        %v1408 = vadd.f32 %v1304, %v1407
        %v1409 = vpop.f32.mrf.mxu0
        %1410 = vmatprep.mubr.bf16.mxu0 0
        %1411 = vmatmul.mubr.bf16.gmra.mxu0 %v1330
        %v1412 = vpop.f32.mrf.mxu0
        %v1413 = vadd.f32 %v1304, %v1412
        %v1414 = vpop.f32.mrf.mxu0
        %v1415 = vpop.f32.mrf.mxu0
        %v1416 = vadd.f32 %v1304, %v1415
        %v1417 = vpop.f32.mrf.mxu0
        %1418 = vmatprep.mubr.bf16.mxu0 0
        %1419 = vmatmul.mubr.bf16.gmra.mxu0 %v1332
        %v1420 = vpop.f32.mrf.mxu0
        %v1421 = vadd.f32 %v1304, %v1420
        %v1422 = vpop.f32.mrf.mxu0
        %v1423 = vpop.f32.mrf.mxu0
        %v1424 = vadd.f32 %v1304, %v1423
        %v1425 = vpop.f32.mrf.mxu0
        %1426 = vmatprep.mubr.bf16.mxu0 0
        %1427 = vmatmul.mubr.bf16.gmra.mxu0 %v1334
        %v1428 = vpop.f32.mrf.mxu0
        %v1429 = vadd.f32 %v1304, %v1428
        %v1430 = vpop.f32.mrf.mxu0
        %v1431 = vpop.f32.mrf.mxu0
        %v1432 = vadd.f32 %v1304, %v1431
        %v1433 = vpop.f32.mrf.mxu0
        %1434 = vmatprep.mubr.bf16.mxu0 0
        %1435 = vmatmul.mubr.bf16.gmra.mxu0 %v1336
        %v1436 = vpop.f32.mrf.mxu0
        %v1437 = vadd.f32 %v1304, %v1436
        %v1438 = vpop.f32.mrf.mxu0
        %v1439 = vpop.f32.mrf.mxu0
        %v1440 = vadd.f32 %v1304, %v1439
        %v1441 = vpop.f32.mrf.mxu0
        %1442 = vmatprep.mubr.bf16.mxu0 0
        %1443 = vmatmul.mubr.bf16.gmra.mxu0 %v1338
        %v1444 = vpop.f32.mrf.mxu0
        %v1445 = vadd.f32 %v1304, %v1444
        %v1446 = vpop.f32.mrf.mxu0
        %v1447 = vpop.f32.mrf.mxu0
        %v1448 = vadd.f32 %v1304, %v1447
        %v1449 = vpop.f32.mrf.mxu0
        %1450 = vmatprep.mubr.bf16.mxu0 0
        %1451 = vmatmul.mubr.bf16.gmra.mxu0 %v1340
        %v1452 = vpop.f32.mrf.mxu0
        %v1453 = vadd.f32 %v1304, %v1452
        %v1454 = vpop.f32.mrf.mxu0
        %v1455 = vpop.f32.mrf.mxu0
        %v1456 = vadd.f32 %v1304, %v1455
        %v1457 = vpop.f32.mrf.mxu0
        %1458 = vdwg.mxu0
        %v1459 = vmax.f32 %v1381, 0.0
        %v1460 = vmax.f32 %v1384, 0.0
        %v1461 = vmax.f32 %v1389, 0.0
        %v1462 = vmax.f32 %v1392, 0.0
        %v1463 = vmax.f32 %v1397, 0.0
        %v1464 = vmax.f32 %v1400, 0.0
        %v1465 = vmax.f32 %v1405, 0.0
        %v1466 = vmax.f32 %v1408, 0.0
        %v1467 = vmax.f32 %v1413, 0.0
        %v1468 = vmax.f32 %v1416, 0.0
        %v1469 = vmax.f32 %v1421, 0.0
        %v1470 = vmax.f32 %v1424, 0.0
        %v1471 = vmax.f32 %v1429, 0.0
        %v1472 = vmax.f32 %v1432, 0.0
        %v1473 = vmax.f32 %v1437, 0.0
        %v1474 = vmax.f32 %v1440, 0.0
        %v1475 = vmax.f32 %v1445, 0.0
        %v1476 = vmax.f32 %v1448, 0.0
        %v1477 = vmax.f32 %v1453, 0.0
        %v1478 = vmax.f32 %v1456, 0.0
        %v1479 = vpack.c.bf16 %v1460, %v1459
        %v1480 = vpack.c.bf16 %v1462, %v1461
        %v1481 = vpack.c.bf16 %v1464, %v1463
        %v1482 = vpack.c.bf16 %v1466, %v1465
        %v1483 = vpack.c.bf16 %v1468, %v1467
        %v1484 = vpack.c.bf16 %v1470, %v1469
        %v1485 = vpack.c.bf16 %v1472, %v1471
        %v1486 = vpack.c.bf16 %v1474, %v1473
        %v1487 = vpack.c.bf16 %v1476, %v1475
        %v1488 = vpack.c.bf16 %v1478, %v1477
        %v1499 = vunpack.c.l.b16 %v1479
        %v1500 = vunpack.c.h.b16 %v1479
        %v1501 = vunpack.c.l.b16 %v1480
        %v1502 = vunpack.c.h.b16 %v1480
        %v1503 = vunpack.c.l.b16 %v1481
        %v1504 = vunpack.c.h.b16 %v1481
        %v1505 = vunpack.c.l.b16 %v1482
        %v1506 = vunpack.c.h.b16 %v1482
        %v1507 = vunpack.c.l.b16 %v1483
        %v1508 = vunpack.c.h.b16 %v1483
        %v1509 = vunpack.c.l.b16 %v1484
        %v1510 = vunpack.c.h.b16 %v1484
        %v1511 = vunpack.c.l.b16 %v1485
        %v1512 = vunpack.c.h.b16 %v1485
        %v1513 = vunpack.c.l.b16 %v1486
        %v1514 = vunpack.c.h.b16 %v1486
        %v1515 = vunpack.c.l.b16 %v1487
        %v1516 = vunpack.c.h.b16 %v1487
        %v1517 = vunpack.c.l.b16 %v1488
        %v1518 = vunpack.c.h.b16 %v1488
        %v1519 = vpack.c.b16 %v1499, %v1499
        %v1520 = vpack.c.b16 %v1500, %v1500
        %v1521 = vpack.c.b16 %v1501, %v1501
        %v1522 = vpack.c.b16 %v1502, %v1502
        %v1523 = vpack.c.b16 %v1503, %v1503
        %v1524 = vpack.c.b16 %v1504, %v1504
        %v1525 = vpack.c.b16 %v1505, %v1505
        %v1526 = vpack.c.b16 %v1506, %v1506
        %v1527 = vpack.c.b16 %v1507, %v1507
        %v1528 = vpack.c.b16 %v1508, %v1508
        %v1529 = vpack.c.b16 %v1509, %v1509
        %v1530 = vpack.c.b16 %v1510, %v1510
        %v1531 = vpack.c.b16 %v1511, %v1511
        %v1532 = vpack.c.b16 %v1512, %v1512
        %v1533 = vpack.c.b16 %v1513, %v1513
        %v1534 = vpack.c.b16 %v1514, %v1514
        %v1535 = vpack.c.b16 %v1515, %v1515
        %v1536 = vpack.c.b16 %v1516, %v1516
        %v1537 = vpack.c.b16 %v1517, %v1517
        %v1538 = vpack.c.b16 %v1518, %v1518
        %vm1539 = vsmask.f32 256
        %vm1540 = vsmask.f32 4368
        %vm1541 = vmor %vm1539, %vm1540
        %v1543 = vshrl.u32 %v1519, 16
        %v1545 = vrot.slane %v1543, 7
        %v1546 = vshll.u32 %v1519, 16
        %v1548 = vor.u32 %v1545, %v1546
        %v1549 = vrot.slane %v1545, 4
        %v1551 = vshrl.u32 %v1520, 16
        %v1553 = vrot.slane %v1551, 7
        %v1554 = vshll.u32 %v1520, 16
        %v1556 = vor.u32 %v1553, %v1554
        %v1557 = vsel %vm1541, %v1549, %v1556
        %v1558 = vrot.slane %v1553, 4
        %v1560 = vshrl.u32 %v1521, 16
        %v1562 = vrot.slane %v1560, 7
        %v1563 = vshll.u32 %v1521, 16
        %v1565 = vor.u32 %v1562, %v1563
        %v1566 = vrot.slane %v1562, 4
        %v1568 = vshrl.u32 %v1522, 16
        %v1570 = vrot.slane %v1568, 7
        %v1571 = vshll.u32 %v1522, 16
        %v1573 = vor.u32 %v1570, %v1571
        %v1574 = vsel %vm1541, %v1566, %v1573
        %v1575 = vrot.slane %v1570, 4
        %v1577 = vshrl.u32 %v1523, 16
        %v1579 = vrot.slane %v1577, 7
        %v1580 = vshll.u32 %v1523, 16
        %v1582 = vor.u32 %v1579, %v1580
        %v1583 = vrot.slane %v1579, 4
        %v1585 = vshrl.u32 %v1524, 16
        %v1587 = vrot.slane %v1585, 7
        %v1588 = vshll.u32 %v1524, 16
        %v1590 = vor.u32 %v1587, %v1588
        %v1591 = vsel %vm1541, %v1583, %v1590
        %v1592 = vrot.slane %v1587, 4
        %v1594 = vshrl.u32 %v1525, 16
        %v1596 = vrot.slane %v1594, 7
        %v1597 = vshll.u32 %v1525, 16
        %v1599 = vor.u32 %v1596, %v1597
        %v1600 = vrot.slane %v1596, 4
        %v1602 = vshrl.u32 %v1526, 16
        %v1604 = vrot.slane %v1602, 7
        %v1605 = vshll.u32 %v1526, 16
        %v1607 = vor.u32 %v1604, %v1605
        %v1608 = vsel %vm1541, %v1600, %v1607
        %v1609 = vrot.slane %v1604, 4
        %v1611 = vshrl.u32 %v1527, 16
        %v1613 = vrot.slane %v1611, 7
        %v1614 = vshll.u32 %v1527, 16
        %v1616 = vor.u32 %v1613, %v1614
        %v1617 = vrot.slane %v1613, 4
        %v1619 = vshrl.u32 %v1528, 16
        %v1621 = vrot.slane %v1619, 7
        %v1622 = vshll.u32 %v1528, 16
        %v1624 = vor.u32 %v1621, %v1622
        %v1625 = vsel %vm1541, %v1617, %v1624
        %v1626 = vrot.slane %v1621, 4
        %v1628 = vshrl.u32 %v1529, 16
        %v1630 = vrot.slane %v1628, 7
        %v1631 = vshll.u32 %v1529, 16
        %v1633 = vor.u32 %v1630, %v1631
        %v1634 = vrot.slane %v1630, 4
        %v1636 = vshrl.u32 %v1530, 16
        %v1638 = vrot.slane %v1636, 7
        %v1639 = vshll.u32 %v1530, 16
        %v1641 = vor.u32 %v1638, %v1639
        %v1642 = vsel %vm1541, %v1634, %v1641
        %v1643 = vrot.slane %v1638, 4
        %v1645 = vshrl.u32 %v1531, 16
        %v1647 = vrot.slane %v1645, 7
        %v1648 = vshll.u32 %v1531, 16
        %v1650 = vor.u32 %v1647, %v1648
        %v1651 = vrot.slane %v1647, 4
        %v1653 = vshrl.u32 %v1532, 16
        %v1655 = vrot.slane %v1653, 7
        %v1656 = vshll.u32 %v1532, 16
        %v1658 = vor.u32 %v1655, %v1656
        %v1659 = vsel %vm1541, %v1651, %v1658
        %v1660 = vrot.slane %v1655, 4
        %v1662 = vshrl.u32 %v1533, 16
        %v1664 = vrot.slane %v1662, 7
        %v1665 = vshll.u32 %v1533, 16
        %v1667 = vor.u32 %v1664, %v1665
        %v1668 = vrot.slane %v1664, 4
        %v1670 = vshrl.u32 %v1534, 16
        %v1672 = vrot.slane %v1670, 7
        %v1673 = vshll.u32 %v1534, 16
        %v1675 = vor.u32 %v1672, %v1673
        %v1676 = vsel %vm1541, %v1668, %v1675
        %v1677 = vrot.slane %v1672, 4
        %v1679 = vshrl.u32 %v1535, 16
        %v1681 = vrot.slane %v1679, 7
        %v1682 = vshll.u32 %v1535, 16
        %v1684 = vor.u32 %v1681, %v1682
        %v1685 = vrot.slane %v1681, 4
        %v1687 = vshrl.u32 %v1536, 16
        %v1689 = vrot.slane %v1687, 7
        %v1690 = vshll.u32 %v1536, 16
        %v1692 = vor.u32 %v1689, %v1690
        %v1693 = vsel %vm1541, %v1685, %v1692
        %v1694 = vrot.slane %v1689, 4
        %v1696 = vshrl.u32 %v1537, 16
        %v1698 = vrot.slane %v1696, 7
        %v1699 = vshll.u32 %v1537, 16
        %v1701 = vor.u32 %v1698, %v1699
        %v1702 = vrot.slane %v1698, 4
        %v1704 = vshrl.u32 %v1538, 16
        %v1706 = vrot.slane %v1704, 7
        %v1707 = vshll.u32 %v1538, 16
        %v1709 = vor.u32 %v1706, %v1707
        %v1710 = vsel %vm1541, %v1702, %v1709
        %v1711 = vrot.slane %v1706, 4
        %vm1742 = vcmask 1043456
        %vm1743 = vsmask.f32 7938
        %vm1744 = vmand %vm1742, %vm1743
        %v1745 = vld [vmem:[#allocation2] sm:$0xf]
        %v1746 = vsel %vm1744, %v1548, %v1745
        %1747 = vst [vmem:[#allocation2] sm:$0xf] %v1746
        %1748 = vst [vmem:[#allocation2 + $0x4] sm:$0xf] %v1557
        %vm1749 = vcmask 1040384
        %vm1750 = vmand %vm1749, %vm1539
        %v1751 = vld [vmem:[#allocation2 + $0x8] sm:$0x1]
        %v1752 = vsel %vm1750, %v1558, %v1751
        %1753 = vst [vmem:[#allocation2 + $0x8] sm:$0x1] %v1752
        %v1754 = vld [vmem:[#allocation2 + $0xc] sm:$0xf]
        %v1755 = vsel %vm1744, %v1565, %v1754
        %1756 = vst [vmem:[#allocation2 + $0xc] sm:$0xf] %v1755
        %1757 = vst [vmem:[#allocation2 + $0x10] sm:$0xf] %v1574
        %v1758 = vld [vmem:[#allocation2 + $0x14] sm:$0x1]
        %v1759 = vsel %vm1750, %v1575, %v1758
        %1760 = vst [vmem:[#allocation2 + $0x14] sm:$0x1] %v1759
        %v1761 = vld [vmem:[#allocation2 + $0x18] sm:$0xf]
        %v1762 = vsel %vm1744, %v1582, %v1761
        %1763 = vst [vmem:[#allocation2 + $0x18] sm:$0xf] %v1762
        %1764 = vst [vmem:[#allocation2 + $0x1c] sm:$0xf] %v1591
        %v1765 = vld [vmem:[#allocation2 + $0x20] sm:$0x1]
        %v1766 = vsel %vm1750, %v1592, %v1765
        %1767 = vst [vmem:[#allocation2 + $0x20] sm:$0x1] %v1766
        %v1768 = vld [vmem:[#allocation2 + $0x24] sm:$0xf]
        %v1769 = vsel %vm1744, %v1599, %v1768
        %1770 = vst [vmem:[#allocation2 + $0x24] sm:$0xf] %v1769
        %1771 = vst [vmem:[#allocation2 + $0x28] sm:$0xf] %v1608
        %v1772 = vld [vmem:[#allocation2 + $0x2c] sm:$0x1]
        %v1773 = vsel %vm1750, %v1609, %v1772
        %1774 = vst [vmem:[#allocation2 + $0x2c] sm:$0x1] %v1773
        %v1775 = vld [vmem:[#allocation2 + $0x30] sm:$0xf]
        %v1776 = vsel %vm1744, %v1616, %v1775
        %1777 = vst [vmem:[#allocation2 + $0x30] sm:$0xf] %v1776
        %1778 = vst [vmem:[#allocation2 + $0x34] sm:$0xf] %v1625
        %v1779 = vld [vmem:[#allocation2 + $0x38] sm:$0x1]
        %v1780 = vsel %vm1750, %v1626, %v1779
        %1781 = vst [vmem:[#allocation2 + $0x38] sm:$0x1] %v1780
        %v1782 = vld [vmem:[#allocation2 + $0x3c] sm:$0xf]
        %v1783 = vsel %vm1744, %v1633, %v1782
        %1784 = vst [vmem:[#allocation2 + $0x3c] sm:$0xf] %v1783
        %1785 = vst [vmem:[#allocation2 + $0x40] sm:$0xf] %v1642
        %v1786 = vld [vmem:[#allocation2 + $0x44] sm:$0x1]
        %v1787 = vsel %vm1750, %v1643, %v1786
        %1788 = vst [vmem:[#allocation2 + $0x44] sm:$0x1] %v1787
        %v1789 = vld [vmem:[#allocation2 + $0x48] sm:$0xf]
        %v1790 = vsel %vm1744, %v1650, %v1789
        %1791 = vst [vmem:[#allocation2 + $0x48] sm:$0xf] %v1790
        %1792 = vst [vmem:[#allocation2 + $0x4c] sm:$0xf] %v1659
        %v1793 = vld [vmem:[#allocation2 + $0x50] sm:$0x1]
        %v1794 = vsel %vm1750, %v1660, %v1793
        %1795 = vst [vmem:[#allocation2 + $0x50] sm:$0x1] %v1794
        %v1796 = vld [vmem:[#allocation2 + $0x54] sm:$0xf]
        %v1797 = vsel %vm1744, %v1667, %v1796
        %1798 = vst [vmem:[#allocation2 + $0x54] sm:$0xf] %v1797
        %1799 = vst [vmem:[#allocation2 + $0x58] sm:$0xf] %v1676
        %v1800 = vld [vmem:[#allocation2 + $0x5c] sm:$0x1]
        %v1801 = vsel %vm1750, %v1677, %v1800
        %1802 = vst [vmem:[#allocation2 + $0x5c] sm:$0x1] %v1801
        %v1803 = vld [vmem:[#allocation2 + $0x60] sm:$0xf]
        %v1804 = vsel %vm1744, %v1684, %v1803
        %1805 = vst [vmem:[#allocation2 + $0x60] sm:$0xf] %v1804
        %1806 = vst [vmem:[#allocation2 + $0x64] sm:$0xf] %v1693
        %v1807 = vld [vmem:[#allocation2 + $0x68] sm:$0x1]
        %v1808 = vsel %vm1750, %v1694, %v1807
        %1809 = vst [vmem:[#allocation2 + $0x68] sm:$0x1] %v1808
        %v1810 = vld [vmem:[#allocation2 + $0x6c] sm:$0xf]
        %v1811 = vsel %vm1744, %v1701, %v1810
        %1812 = vst [vmem:[#allocation2 + $0x6c] sm:$0xf] %v1811
        %1813 = vst [vmem:[#allocation2 + $0x70] sm:$0xf] %v1710
        %v1814 = vld [vmem:[#allocation2 + $0x74] sm:$0x1]
        %v1815 = vsel %vm1750, %v1711, %v1814
        %1816 = vst [vmem:[#allocation2 + $0x74] sm:$0x1] %v1815
        %v1817 = vld [vmem:[#allocation2] sm:$0x1]
        %v1818 = vsel %vm1750, 0, %v1817
        %1819 = vst [vmem:[#allocation2] sm:$0x1] %v1818
        %v1820 = vld [vmem:[#allocation2 + $0xc] sm:$0x1]
        %v1821 = vsel %vm1750, 0, %v1820
        %1822 = vst [vmem:[#allocation2 + $0xc] sm:$0x1] %v1821
        %v1823 = vld [vmem:[#allocation2 + $0x18] sm:$0x1]
        %v1824 = vsel %vm1750, 0, %v1823
        %1825 = vst [vmem:[#allocation2 + $0x18] sm:$0x1] %v1824
        %v1826 = vld [vmem:[#allocation2 + $0x24] sm:$0x1]
        %v1827 = vsel %vm1750, 0, %v1826
        %1828 = vst [vmem:[#allocation2 + $0x24] sm:$0x1] %v1827
        %v1829 = vld [vmem:[#allocation2 + $0x30] sm:$0x1]
        %v1830 = vsel %vm1750, 0, %v1829
        %1831 = vst [vmem:[#allocation2 + $0x30] sm:$0x1] %v1830
        %v1832 = vld [vmem:[#allocation2 + $0x3c] sm:$0x1]
        %v1833 = vsel %vm1750, 0, %v1832
        %1834 = vst [vmem:[#allocation2 + $0x3c] sm:$0x1] %v1833
        %v1835 = vld [vmem:[#allocation2 + $0x48] sm:$0x1]
        %v1836 = vsel %vm1750, 0, %v1835
        %1837 = vst [vmem:[#allocation2 + $0x48] sm:$0x1] %v1836
        %v1838 = vld [vmem:[#allocation2 + $0x54] sm:$0x1]
        %v1839 = vsel %vm1750, 0, %v1838
        %1840 = vst [vmem:[#allocation2 + $0x54] sm:$0x1] %v1839
        %v1841 = vld [vmem:[#allocation2 + $0x60] sm:$0x1]
        %v1842 = vsel %vm1750, 0, %v1841
        %1843 = vst [vmem:[#allocation2 + $0x60] sm:$0x1] %v1842
        %v1844 = vld [vmem:[#allocation2 + $0x6c] sm:$0x1]
        %v1845 = vsel %vm1750, 0, %v1844
        %1846 = vst [vmem:[#allocation2 + $0x6c] sm:$0x1] %v1845
        %vm1847 = vmand %vm1749, %vm1743
        %v1848 = vld [vmem:[#allocation2 + $0x8] sm:$0x1]
        %v1849 = vsel %vm1847, 0, %v1848
        %1850 = vst [vmem:[#allocation2 + $0x8] sm:$0x1] %v1849
        %v1851 = vld [vmem:[#allocation2 + $0x14] sm:$0x1]
        %v1852 = vsel %vm1847, 0, %v1851
        %1853 = vst [vmem:[#allocation2 + $0x14] sm:$0x1] %v1852
        %v1854 = vld [vmem:[#allocation2 + $0x20] sm:$0x1]
        %v1855 = vsel %vm1847, 0, %v1854
        %1856 = vst [vmem:[#allocation2 + $0x20] sm:$0x1] %v1855
        %v1857 = vld [vmem:[#allocation2 + $0x2c] sm:$0x1]
        %v1858 = vsel %vm1847, 0, %v1857
        %1859 = vst [vmem:[#allocation2 + $0x2c] sm:$0x1] %v1858
        %v1860 = vld [vmem:[#allocation2 + $0x38] sm:$0x1]
        %v1861 = vsel %vm1847, 0, %v1860
        %1862 = vst [vmem:[#allocation2 + $0x38] sm:$0x1] %v1861
        %v1863 = vld [vmem:[#allocation2 + $0x44] sm:$0x1]
        %v1864 = vsel %vm1847, 0, %v1863
        %1865 = vst [vmem:[#allocation2 + $0x44] sm:$0x1] %v1864
        %v1866 = vld [vmem:[#allocation2 + $0x50] sm:$0x1]
        %v1867 = vsel %vm1847, 0, %v1866
        %1868 = vst [vmem:[#allocation2 + $0x50] sm:$0x1] %v1867
        %v1869 = vld [vmem:[#allocation2 + $0x5c] sm:$0x1]
        %v1870 = vsel %vm1847, 0, %v1869
        %1871 = vst [vmem:[#allocation2 + $0x5c] sm:$0x1] %v1870
        %v1872 = vld [vmem:[#allocation2 + $0x68] sm:$0x1]
        %v1873 = vsel %vm1847, 0, %v1872
        %1874 = vst [vmem:[#allocation2 + $0x68] sm:$0x1] %v1873
        %v1875 = vld [vmem:[#allocation2 + $0x74] sm:$0x1]
        %v1876 = vsel %vm1847, 0, %v1875
        %1877 = vst [vmem:[#allocation2 + $0x74] sm:$0x1] %v1876
        %p1878 = scmp.eq.s32.totalorder %s27, 0
        // Predicated region
        $region53: #{tpu_custom_call.1} parent=51 // pred_check
          %p1879 = pneg %p1878
        $region54: #{tpu_custom_call.1} parent=51 // pred_check_branch
          %1881 = sbr.rel (%p1879) target = $region56
        $region55: #{tpu_custom_call.1} parent=51 // pred_region
          %1882 = vst [vmem:[#allocation2] sm:$0xf] 0
          %1883 = vst [vmem:[#allocation2 + $0x4] sm:$0xf] 0
          %1884 = vst [vmem:[#allocation2 + $0x8] sm:$0x1] 0
        $region56: #{tpu_custom_call.1} parent=51 // pred_fallthru
          _
        %p1885 = scmp.eq.s32.totalorder %s27, 1
        // Predicated region
        $region57: #{tpu_custom_call.1} parent=51 // pred_check
          %p1886 = pneg %p1885
        $region58: #{tpu_custom_call.1} parent=51 // pred_check_branch
          %1888 = sbr.rel (%p1886) target = $region60
        $region59: #{tpu_custom_call.1} parent=51 // pred_region
          %s1889 = scalar_lea.vmem [#allocation2], 108
          %1890 = vst [vmem:[%s1889] sm:$0xf] 0
          %1891 = vst [vmem:[%s1889 + $0x4] sm:$0xf] 0
          %1892 = vst [vmem:[%s1889 + $0x8] sm:$0x1] 0
        $region60: #{tpu_custom_call.1} parent=51 // pred_fallthru
          _
        %v1893 = vld [vmem:[%s7] sm:$0xff]
        %v1894 = vld [vmem:[%s7 + $0x8] sm:$0xff]
        %1896 = vset.pattern.permute.xlu0 0
        %1897 = vperm.xlu0 %1896, %v1893
        %v1898 = vpop.permute.xlu0 %1897
        %1901 = vset.pattern.permute.xlu0 0
        %1902 = vperm.xlu0 %1901, %v1894
        %v1903 = vpop.permute.xlu0 %1902
        %v1905 = vld [vmem:[#allocation2] sm:$0xf]
        %v1906 = vld [vmem:[#allocation2 + $0x4] sm:$0xf]
        %v1907 = vld [vmem:[#allocation2 + $0xc] sm:$0xf]
        %v1908 = vld [vmem:[#allocation2 + $0x10] sm:$0xf]
        %v1909 = vld [vmem:[#allocation2 + $0x18] sm:$0xf]
        %v1910 = vld [vmem:[#allocation2 + $0x1c] sm:$0xf]
        %v1911 = vld [vmem:[#allocation2 + $0x24] sm:$0xf]
        %v1912 = vld [vmem:[#allocation2 + $0x28] sm:$0xf]
        %v1913 = vld [vmem:[#allocation2 + $0x30] sm:$0xf]
        %v1914 = vld [vmem:[#allocation2 + $0x34] sm:$0xf]
        %v1915 = vld [vmem:[#allocation2 + $0x3c] sm:$0xf]
        %v1916 = vld [vmem:[#allocation2 + $0x40] sm:$0xf]
        %v1917 = vld [vmem:[#allocation2 + $0x48] sm:$0xf]
        %v1918 = vld [vmem:[#allocation2 + $0x4c] sm:$0xf]
        %v1919 = vld [vmem:[#allocation2 + $0x54] sm:$0xf]
        %v1920 = vld [vmem:[#allocation2 + $0x58] sm:$0xf]
        %v1921 = vld [vmem:[#allocation2 + $0x8] sm:$0x1]
        %v1922 = vld [vmem:[#allocation2 + $0x14] sm:$0x1]
        %v1923 = vld [vmem:[#allocation2 + $0x20] sm:$0x1]
        %v1924 = vld [vmem:[#allocation2 + $0x2c] sm:$0x1]
        %v1925 = vld [vmem:[#allocation2 + $0x38] sm:$0x1]
        %v1926 = vld [vmem:[#allocation2 + $0x44] sm:$0x1]
        %v1927 = vld [vmem:[#allocation2 + $0x50] sm:$0x1]
        %v1928 = vld [vmem:[#allocation2 + $0x5c] sm:$0x1]
        %v1930 = vshrl.u32 %v1905, 16
        %v1932 = vrot.slane %v1930, 4
        %v1933 = vshll.u32 %v1905, 16
        %v1935 = vrot.slane %v1933, 5
        %v1936 = vor.u32 %v1932, %v1935
        %v1937 = vrot.slane %v1936, 4
        %v1939 = vshll.u32 %v1906, 16
        %v1941 = vrot.slane %v1939, 5
        %v1942 = vsel %vm436, %v1937, %v1941
        %v1943 = vshrl.u32 %v1906, 16
        %v1945 = vrot.slane %v1943, 4
        %v1946 = vor.u32 %v1945, %v1941
        %v1947 = vrot.slane %v1946, 4
        %v1949 = vshll.u32 %v1921, 16
        %v1951 = vrot.slane %v1949, 5
        %v1952 = vsel %vm436, %v1947, %v1951
        %v1954 = vshrl.u32 %v1907, 16
        %v1956 = vrot.slane %v1954, 4
        %v1957 = vshll.u32 %v1907, 16
        %v1959 = vrot.slane %v1957, 5
        %v1960 = vor.u32 %v1956, %v1959
        %v1961 = vrot.slane %v1960, 4
        %v1963 = vshll.u32 %v1908, 16
        %v1965 = vrot.slane %v1963, 5
        %v1966 = vsel %vm436, %v1961, %v1965
        %v1967 = vshrl.u32 %v1908, 16
        %v1969 = vrot.slane %v1967, 4
        %v1970 = vor.u32 %v1969, %v1965
        %v1971 = vrot.slane %v1970, 4
        %v1973 = vshll.u32 %v1922, 16
        %v1975 = vrot.slane %v1973, 5
        %v1976 = vsel %vm436, %v1971, %v1975
        %v1978 = vshrl.u32 %v1909, 16
        %v1980 = vrot.slane %v1978, 4
        %v1981 = vshll.u32 %v1909, 16
        %v1983 = vrot.slane %v1981, 5
        %v1984 = vor.u32 %v1980, %v1983
        %v1985 = vrot.slane %v1984, 4
        %v1987 = vshll.u32 %v1910, 16
        %v1989 = vrot.slane %v1987, 5
        %v1990 = vsel %vm436, %v1985, %v1989
        %v1991 = vshrl.u32 %v1910, 16
        %v1993 = vrot.slane %v1991, 4
        %v1994 = vor.u32 %v1993, %v1989
        %v1995 = vrot.slane %v1994, 4
        %v1997 = vshll.u32 %v1923, 16
        %v1999 = vrot.slane %v1997, 5
        %v2000 = vsel %vm436, %v1995, %v1999
        %v2002 = vshrl.u32 %v1911, 16
        %v2004 = vrot.slane %v2002, 4
        %v2005 = vshll.u32 %v1911, 16
        %v2007 = vrot.slane %v2005, 5
        %v2008 = vor.u32 %v2004, %v2007
        %v2009 = vrot.slane %v2008, 4
        %v2011 = vshll.u32 %v1912, 16
        %v2013 = vrot.slane %v2011, 5
        %v2014 = vsel %vm436, %v2009, %v2013
        %v2015 = vshrl.u32 %v1912, 16
        %v2017 = vrot.slane %v2015, 4
        %v2018 = vor.u32 %v2017, %v2013
        %v2019 = vrot.slane %v2018, 4
        %v2021 = vshll.u32 %v1924, 16
        %v2023 = vrot.slane %v2021, 5
        %v2024 = vsel %vm436, %v2019, %v2023
        %v2026 = vshrl.u32 %v1913, 16
        %v2028 = vrot.slane %v2026, 4
        %v2029 = vshll.u32 %v1913, 16
        %v2031 = vrot.slane %v2029, 5
        %v2032 = vor.u32 %v2028, %v2031
        %v2033 = vrot.slane %v2032, 4
        %v2035 = vshll.u32 %v1914, 16
        %v2037 = vrot.slane %v2035, 5
        %v2038 = vsel %vm436, %v2033, %v2037
        %v2039 = vshrl.u32 %v1914, 16
        %v2041 = vrot.slane %v2039, 4
        %v2042 = vor.u32 %v2041, %v2037
        %v2043 = vrot.slane %v2042, 4
        %v2045 = vshll.u32 %v1925, 16
        %v2047 = vrot.slane %v2045, 5
        %v2048 = vsel %vm436, %v2043, %v2047
        %v2050 = vshrl.u32 %v1915, 16
        %v2052 = vrot.slane %v2050, 4
        %v2053 = vshll.u32 %v1915, 16
        %v2055 = vrot.slane %v2053, 5
        %v2056 = vor.u32 %v2052, %v2055
        %v2057 = vrot.slane %v2056, 4
        %v2059 = vshll.u32 %v1916, 16
        %v2061 = vrot.slane %v2059, 5
        %v2062 = vsel %vm436, %v2057, %v2061
        %v2063 = vshrl.u32 %v1916, 16
        %v2065 = vrot.slane %v2063, 4
        %v2066 = vor.u32 %v2065, %v2061
        %v2067 = vrot.slane %v2066, 4
        %v2069 = vshll.u32 %v1926, 16
        %v2071 = vrot.slane %v2069, 5
        %v2072 = vsel %vm436, %v2067, %v2071
        %v2074 = vshrl.u32 %v1917, 16
        %v2076 = vrot.slane %v2074, 4
        %v2077 = vshll.u32 %v1917, 16
        %v2079 = vrot.slane %v2077, 5
        %v2080 = vor.u32 %v2076, %v2079
        %v2081 = vrot.slane %v2080, 4
        %v2083 = vshll.u32 %v1918, 16
        %v2085 = vrot.slane %v2083, 5
        %v2086 = vsel %vm436, %v2081, %v2085
        %v2087 = vshrl.u32 %v1918, 16
        %v2089 = vrot.slane %v2087, 4
        %v2090 = vor.u32 %v2089, %v2085
        %v2091 = vrot.slane %v2090, 4
        %v2093 = vshll.u32 %v1927, 16
        %v2095 = vrot.slane %v2093, 5
        %v2096 = vsel %vm436, %v2091, %v2095
        %v2098 = vshrl.u32 %v1919, 16
        %v2100 = vrot.slane %v2098, 4
        %v2101 = vshll.u32 %v1919, 16
        %v2103 = vrot.slane %v2101, 5
        %v2104 = vor.u32 %v2100, %v2103
        %v2105 = vrot.slane %v2104, 4
        %v2107 = vshll.u32 %v1920, 16
        %v2109 = vrot.slane %v2107, 5
        %v2110 = vsel %vm436, %v2105, %v2109
        %v2111 = vshrl.u32 %v1920, 16
        %v2113 = vrot.slane %v2111, 4
        %v2114 = vor.u32 %v2113, %v2109
        %v2115 = vrot.slane %v2114, 4
        %v2117 = vshll.u32 %v1928, 16
        %v2119 = vrot.slane %v2117, 5
        %v2120 = vsel %vm436, %v2115, %v2119
        %v2121 = vld [vmem:[#allocation2] sm:$0xe]
        %v2122 = vld [vmem:[#allocation2 + $0xc] sm:$0xe]
        %v2123 = vld [vmem:[#allocation2 + $0x18] sm:$0xe]
        %v2124 = vld [vmem:[#allocation2 + $0x24] sm:$0xe]
        %v2125 = vld [vmem:[#allocation2 + $0x30] sm:$0xe]
        %v2126 = vld [vmem:[#allocation2 + $0x3c] sm:$0xe]
        %v2127 = vld [vmem:[#allocation2 + $0x48] sm:$0xe]
        %v2128 = vld [vmem:[#allocation2 + $0x54] sm:$0xe]
        %v2153 = vrot.slane %v2121, 5
        %v2154 = vrot.slane %v2153, 4
        %v2155 = vrot.slane %v1906, 5
        %v2156 = vsel %vm709, %v2154, %v2155
        %v2157 = vrot.slane %v2155, 4
        %v2158 = vrot.slane %v1921, 5
        %v2159 = vsel %vm709, %v2157, %v2158
        %v2160 = vrot.slane %v2122, 5
        %v2161 = vrot.slane %v2160, 4
        %v2162 = vrot.slane %v1908, 5
        %v2163 = vsel %vm709, %v2161, %v2162
        %v2164 = vrot.slane %v2162, 4
        %v2165 = vrot.slane %v1922, 5
        %v2166 = vsel %vm709, %v2164, %v2165
        %v2167 = vrot.slane %v2123, 5
        %v2168 = vrot.slane %v2167, 4
        %v2169 = vrot.slane %v1910, 5
        %v2170 = vsel %vm709, %v2168, %v2169
        %v2171 = vrot.slane %v2169, 4
        %v2172 = vrot.slane %v1923, 5
        %v2173 = vsel %vm709, %v2171, %v2172
        %v2174 = vrot.slane %v2124, 5
        %v2175 = vrot.slane %v2174, 4
        %v2176 = vrot.slane %v1912, 5
        %v2177 = vsel %vm709, %v2175, %v2176
        %v2178 = vrot.slane %v2176, 4
        %v2179 = vrot.slane %v1924, 5
        %v2180 = vsel %vm709, %v2178, %v2179
        %v2181 = vrot.slane %v2125, 5
        %v2182 = vrot.slane %v2181, 4
        %v2183 = vrot.slane %v1914, 5
        %v2184 = vsel %vm709, %v2182, %v2183
        %v2185 = vrot.slane %v2183, 4
        %v2186 = vrot.slane %v1925, 5
        %v2187 = vsel %vm709, %v2185, %v2186
        %v2188 = vrot.slane %v2126, 5
        %v2189 = vrot.slane %v2188, 4
        %v2190 = vrot.slane %v1916, 5
        %v2191 = vsel %vm709, %v2189, %v2190
        %v2192 = vrot.slane %v2190, 4
        %v2193 = vrot.slane %v1926, 5
        %v2194 = vsel %vm709, %v2192, %v2193
        %v2195 = vrot.slane %v2127, 5
        %v2196 = vrot.slane %v2195, 4
        %v2197 = vrot.slane %v1918, 5
        %v2198 = vsel %vm709, %v2196, %v2197
        %v2199 = vrot.slane %v2197, 4
        %v2200 = vrot.slane %v1927, 5
        %v2201 = vsel %vm709, %v2199, %v2200
        %v2202 = vrot.slane %v2128, 5
        %v2203 = vrot.slane %v2202, 4
        %v2204 = vrot.slane %v1920, 5
        %v2205 = vsel %vm709, %v2203, %v2204
        %v2206 = vrot.slane %v2204, 4
        %v2207 = vrot.slane %v1928, 5
        %v2208 = vsel %vm709, %v2206, %v2207
        %v2217 = vunpack.c.l.b16 %v1905
        %v2218 = vunpack.c.l.b16 %v1906
        %v2219 = vunpack.c.l.b16 %v1907
        %v2220 = vunpack.c.l.b16 %v1908
        %v2221 = vunpack.c.l.b16 %v1909
        %v2222 = vunpack.c.l.b16 %v1910
        %v2223 = vunpack.c.l.b16 %v1911
        %v2224 = vunpack.c.l.b16 %v1912
        %v2225 = vunpack.c.l.b16 %v1913
        %v2226 = vunpack.c.l.b16 %v1914
        %v2227 = vunpack.c.l.b16 %v1915
        %v2228 = vunpack.c.l.b16 %v1916
        %v2229 = vunpack.c.l.b16 %v1917
        %v2230 = vunpack.c.l.b16 %v1918
        %v2231 = vunpack.c.l.b16 %v1919
        %v2232 = vunpack.c.l.b16 %v1920
        %v2233 = vpack.c.b16 %v2218, %v2217
        %v2234 = vpack.c.b16 %v2220, %v2219
        %v2235 = vpack.c.b16 %v2222, %v2221
        %v2236 = vpack.c.b16 %v2224, %v2223
        %v2237 = vpack.c.b16 %v2226, %v2225
        %v2238 = vpack.c.b16 %v2228, %v2227
        %v2239 = vpack.c.b16 %v2230, %v2229
        %v2240 = vpack.c.b16 %v2232, %v2231
        %v2249 = vunpack.c.l.b16 %v1942
        %v2250 = vunpack.c.l.b16 %v1952
        %v2251 = vunpack.c.l.b16 %v1966
        %v2252 = vunpack.c.l.b16 %v1976
        %v2253 = vunpack.c.l.b16 %v1990
        %v2254 = vunpack.c.l.b16 %v2000
        %v2255 = vunpack.c.l.b16 %v2014
        %v2256 = vunpack.c.l.b16 %v2024
        %v2257 = vunpack.c.l.b16 %v2038
        %v2258 = vunpack.c.l.b16 %v2048
        %v2259 = vunpack.c.l.b16 %v2062
        %v2260 = vunpack.c.l.b16 %v2072
        %v2261 = vunpack.c.l.b16 %v2086
        %v2262 = vunpack.c.l.b16 %v2096
        %v2263 = vunpack.c.l.b16 %v2110
        %v2264 = vunpack.c.l.b16 %v2120
        %v2265 = vpack.c.b16 %v2250, %v2249
        %v2266 = vpack.c.b16 %v2252, %v2251
        %v2267 = vpack.c.b16 %v2254, %v2253
        %v2268 = vpack.c.b16 %v2256, %v2255
        %v2269 = vpack.c.b16 %v2258, %v2257
        %v2270 = vpack.c.b16 %v2260, %v2259
        %v2271 = vpack.c.b16 %v2262, %v2261
        %v2272 = vpack.c.b16 %v2264, %v2263
        %v2281 = vunpack.c.l.b16 %v2156
        %v2282 = vunpack.c.l.b16 %v2159
        %v2283 = vunpack.c.l.b16 %v2163
        %v2284 = vunpack.c.l.b16 %v2166
        %v2285 = vunpack.c.l.b16 %v2170
        %v2286 = vunpack.c.l.b16 %v2173
        %v2287 = vunpack.c.l.b16 %v2177
        %v2288 = vunpack.c.l.b16 %v2180
        %v2289 = vunpack.c.l.b16 %v2184
        %v2290 = vunpack.c.l.b16 %v2187
        %v2291 = vunpack.c.l.b16 %v2191
        %v2292 = vunpack.c.l.b16 %v2194
        %v2293 = vunpack.c.l.b16 %v2198
        %v2294 = vunpack.c.l.b16 %v2201
        %v2295 = vunpack.c.l.b16 %v2205
        %v2296 = vunpack.c.l.b16 %v2208
        %v2297 = vpack.c.b16 %v2282, %v2281
        %v2298 = vpack.c.b16 %v2284, %v2283
        %v2299 = vpack.c.b16 %v2286, %v2285
        %v2300 = vpack.c.b16 %v2288, %v2287
        %v2301 = vpack.c.b16 %v2290, %v2289
        %v2302 = vpack.c.b16 %v2292, %v2291
        %v2303 = vpack.c.b16 %v2294, %v2293
        %v2304 = vpack.c.b16 %v2296, %v2295
        %v2313 = vld [vmem:[%s6] sm:$0xff]
        %v2314 = vld [vmem:[%s6 + $0x8] sm:$0xf]
        %v2315 = vld [vmem:[%s6 + $0xc] sm:$0xff]
        %v2316 = vld [vmem:[%s6 + $0x14] sm:$0xf]
        %v2321 = vunpack.c.l.b16 %v2313
        %v2322 = vunpack.c.h.b16 %v2313
        %v2323 = vunpack.c.l.b16 %v2314
        %v2324 = vunpack.c.l.b16 %v2315
        %v2325 = vunpack.c.h.b16 %v2315
        %v2326 = vunpack.c.l.b16 %v2316
        %v2327 = vpack.c.b16 %v2324, %v2321
        %v2328 = vpack.c.b16 %v2325, %v2322
        %v2329 = vpack.c.b16 %v2326, %v2323
        %2333 = vmatprep.subr.bf16.mxu0 %v2272
        %2334 = vmatpush1.bf16.xpose.msra.mxu0 %v2240
        %2335 = vmatprep.subr.bf16.mxu0 %v2271
        %2336 = vmatpush1.bf16.xpose.msra.mxu0 %v2239
        %2337 = vmatprep.subr.bf16.mxu0 %v2270
        %2338 = vmatpush1.bf16.xpose.msra.mxu0 %v2238
        %2339 = vmatprep.subr.bf16.mxu0 %v2269
        %2340 = vmatpush1.bf16.xpose.msra.mxu0 %v2237
        %2341 = vmatprep.subr.bf16.mxu0 %v2268
        %2342 = vmatpush1.bf16.xpose.msra.mxu0 %v2236
        %2343 = vmatprep.subr.bf16.mxu0 %v2267
        %2344 = vmatpush1.bf16.xpose.msra.mxu0 %v2235
        %2345 = vmatprep.subr.bf16.mxu0 %v2266
        %2346 = vmatpush1.bf16.xpose.msra.mxu0 %v2234
        %2347 = vmatprep.subr.bf16.mxu0 %v2265
        %2348 = vmatpush1.bf16.xpose.msra.mxu0 %v2233
        %2349 = vmatprep.subr.bf16.mxu0 0
        %2350 = vmatpush2.bf16.xpose.msra.mxu0 0
        %2351 = vmatprep.subr.bf16.mxu0 0
        %2352 = vmatpush2.bf16.xpose.msra.mxu0 0
        %2353 = vmatprep.subr.bf16.mxu0 0
        %2354 = vmatpush2.bf16.xpose.msra.mxu0 0
        %2355 = vmatprep.subr.bf16.mxu0 0
        %2356 = vmatpush2.bf16.xpose.msra.mxu0 0
        %2357 = vmatprep.subr.bf16.mxu0 0
        %2358 = vmatpush2.bf16.xpose.msra.mxu0 0
        %2359 = vmatprep.subr.bf16.mxu0 0
        %2360 = vmatpush2.bf16.xpose.msra.mxu0 0
        %2361 = vmatprep.subr.bf16.mxu0 0
        %2362 = vmatpush2.bf16.xpose.msra.mxu0 0
        %2363 = vmatprep.subr.bf16.mxu0 0
        %2364 = vmatpush2.bf16.xpose.msra.mxu0 0
        %2365 = vmatprep.mubr.bf16.mxu0 %v2328
        %2366 = vmatmul.mubr.bf16.gmra.mxu0 %v2327
        %v2367 = vpop.f32.mrf.mxu0
        %v2368 = vadd.f32 0.0, %v2367
        %v2369 = vpop.f32.mrf.mxu0
        %v2370 = vpop.f32.mrf.mxu0
        %v2371 = vadd.f32 0.0, %v2370
        %v2372 = vpop.f32.mrf.mxu0
        %2373 = vdwg.mxu0
        %2374 = vmatprep.subr.bf16.mxu0 0
        %2375 = vmatpush1.bf16.xpose.msra.mxu0 %v2304
        %2376 = vmatprep.subr.bf16.mxu0 0
        %2377 = vmatpush1.bf16.xpose.msra.mxu0 %v2303
        %2378 = vmatprep.subr.bf16.mxu0 0
        %2379 = vmatpush1.bf16.xpose.msra.mxu0 %v2302
        %2380 = vmatprep.subr.bf16.mxu0 0
        %2381 = vmatpush1.bf16.xpose.msra.mxu0 %v2301
        %2382 = vmatprep.subr.bf16.mxu0 0
        %2383 = vmatpush1.bf16.xpose.msra.mxu0 %v2300
        %2384 = vmatprep.subr.bf16.mxu0 0
        %2385 = vmatpush1.bf16.xpose.msra.mxu0 %v2299
        %2386 = vmatprep.subr.bf16.mxu0 0
        %2387 = vmatpush1.bf16.xpose.msra.mxu0 %v2298
        %2388 = vmatprep.subr.bf16.mxu0 0
        %2389 = vmatpush1.bf16.xpose.msra.mxu0 %v2297
        %2390 = vmatprep.subr.bf16.mxu0 0
        %2391 = vmatpush2.bf16.xpose.msra.mxu0 0
        %2392 = vmatprep.subr.bf16.mxu0 0
        %2393 = vmatpush2.bf16.xpose.msra.mxu0 0
        %2394 = vmatprep.subr.bf16.mxu0 0
        %2395 = vmatpush2.bf16.xpose.msra.mxu0 0
        %2396 = vmatprep.subr.bf16.mxu0 0
        %2397 = vmatpush2.bf16.xpose.msra.mxu0 0
        %2398 = vmatprep.subr.bf16.mxu0 0
        %2399 = vmatpush2.bf16.xpose.msra.mxu0 0
        %2400 = vmatprep.subr.bf16.mxu0 0
        %2401 = vmatpush2.bf16.xpose.msra.mxu0 0
        %2402 = vmatprep.subr.bf16.mxu0 0
        %2403 = vmatpush2.bf16.xpose.msra.mxu0 0
        %2404 = vmatprep.subr.bf16.mxu0 0
        %2405 = vmatpush2.bf16.xpose.msra.mxu0 0
        %2406 = vmatprep.mubr.bf16.mxu0 0
        %2407 = vmatmul.mubr.bf16.gmra.mxu0 %v2329
        %v2408 = vpop.f32.mrf.mxu0
        %v2409 = vadd.f32 %v2368, %v2408
        %v2410 = vpop.f32.mrf.mxu0
        %v2411 = vpop.f32.mrf.mxu0
        %v2412 = vadd.f32 %v2371, %v2411
        %v2413 = vpop.f32.mrf.mxu0
        %2414 = vdwg.mxu0
        %v2415 = vadd.f32 %v1898, %v2409
        %v2416 = vadd.f32 %v1903, %v2412
        %s2417 = scalar_lea.vmem [#allocation2], 12
        %v2418 = vld [vmem:[%s2417] sm:$0xf]
        %v2419 = vld [vmem:[%s2417 + $0x4] sm:$0xf]
        %v2420 = vld [vmem:[%s2417 + $0xc] sm:$0xf]
        %v2421 = vld [vmem:[%s2417 + $0x10] sm:$0xf]
        %v2422 = vld [vmem:[%s2417 + $0x18] sm:$0xf]
        %v2423 = vld [vmem:[%s2417 + $0x1c] sm:$0xf]
        %v2424 = vld [vmem:[%s2417 + $0x24] sm:$0xf]
        %v2425 = vld [vmem:[%s2417 + $0x28] sm:$0xf]
        %v2426 = vld [vmem:[%s2417 + $0x30] sm:$0xf]
        %v2427 = vld [vmem:[%s2417 + $0x34] sm:$0xf]
        %v2428 = vld [vmem:[%s2417 + $0x3c] sm:$0xf]
        %v2429 = vld [vmem:[%s2417 + $0x40] sm:$0xf]
        %v2430 = vld [vmem:[%s2417 + $0x48] sm:$0xf]
        %v2431 = vld [vmem:[%s2417 + $0x4c] sm:$0xf]
        %v2432 = vld [vmem:[%s2417 + $0x54] sm:$0xf]
        %v2433 = vld [vmem:[%s2417 + $0x58] sm:$0xf]
        %v2434 = vld [vmem:[%s2417 + $0x8] sm:$0x1]
        %v2435 = vld [vmem:[%s2417 + $0x14] sm:$0x1]
        %v2436 = vld [vmem:[%s2417 + $0x20] sm:$0x1]
        %v2437 = vld [vmem:[%s2417 + $0x2c] sm:$0x1]
        %v2438 = vld [vmem:[%s2417 + $0x38] sm:$0x1]
        %v2439 = vld [vmem:[%s2417 + $0x44] sm:$0x1]
        %v2440 = vld [vmem:[%s2417 + $0x50] sm:$0x1]
        %v2441 = vld [vmem:[%s2417 + $0x5c] sm:$0x1]
        %v2443 = vshrl.u32 %v2418, 16
        %v2445 = vrot.slane %v2443, 4
        %v2446 = vshll.u32 %v2418, 16
        %v2448 = vrot.slane %v2446, 5
        %v2449 = vor.u32 %v2445, %v2448
        %v2450 = vrot.slane %v2449, 4
        %v2452 = vshll.u32 %v2419, 16
        %v2454 = vrot.slane %v2452, 5
        %v2455 = vsel %vm436, %v2450, %v2454
        %v2456 = vshrl.u32 %v2419, 16
        %v2458 = vrot.slane %v2456, 4
        %v2459 = vor.u32 %v2458, %v2454
        %v2460 = vrot.slane %v2459, 4
        %v2462 = vshll.u32 %v2434, 16
        %v2464 = vrot.slane %v2462, 5
        %v2465 = vsel %vm436, %v2460, %v2464
        %v2467 = vshrl.u32 %v2420, 16
        %v2469 = vrot.slane %v2467, 4
        %v2470 = vshll.u32 %v2420, 16
        %v2472 = vrot.slane %v2470, 5
        %v2473 = vor.u32 %v2469, %v2472
        %v2474 = vrot.slane %v2473, 4
        %v2476 = vshll.u32 %v2421, 16
        %v2478 = vrot.slane %v2476, 5
        %v2479 = vsel %vm436, %v2474, %v2478
        %v2480 = vshrl.u32 %v2421, 16
        %v2482 = vrot.slane %v2480, 4
        %v2483 = vor.u32 %v2482, %v2478
        %v2484 = vrot.slane %v2483, 4
        %v2486 = vshll.u32 %v2435, 16
        %v2488 = vrot.slane %v2486, 5
        %v2489 = vsel %vm436, %v2484, %v2488
        %v2491 = vshrl.u32 %v2422, 16
        %v2493 = vrot.slane %v2491, 4
        %v2494 = vshll.u32 %v2422, 16
        %v2496 = vrot.slane %v2494, 5
        %v2497 = vor.u32 %v2493, %v2496
        %v2498 = vrot.slane %v2497, 4
        %v2500 = vshll.u32 %v2423, 16
        %v2502 = vrot.slane %v2500, 5
        %v2503 = vsel %vm436, %v2498, %v2502
        %v2504 = vshrl.u32 %v2423, 16
        %v2506 = vrot.slane %v2504, 4
        %v2507 = vor.u32 %v2506, %v2502
        %v2508 = vrot.slane %v2507, 4
        %v2510 = vshll.u32 %v2436, 16
        %v2512 = vrot.slane %v2510, 5
        %v2513 = vsel %vm436, %v2508, %v2512
        %v2515 = vshrl.u32 %v2424, 16
        %v2517 = vrot.slane %v2515, 4
        %v2518 = vshll.u32 %v2424, 16
        %v2520 = vrot.slane %v2518, 5
        %v2521 = vor.u32 %v2517, %v2520
        %v2522 = vrot.slane %v2521, 4
        %v2524 = vshll.u32 %v2425, 16
        %v2526 = vrot.slane %v2524, 5
        %v2527 = vsel %vm436, %v2522, %v2526
        %v2528 = vshrl.u32 %v2425, 16
        %v2530 = vrot.slane %v2528, 4
        %v2531 = vor.u32 %v2530, %v2526
        %v2532 = vrot.slane %v2531, 4
        %v2534 = vshll.u32 %v2437, 16
        %v2536 = vrot.slane %v2534, 5
        %v2537 = vsel %vm436, %v2532, %v2536
        %v2539 = vshrl.u32 %v2426, 16
        %v2541 = vrot.slane %v2539, 4
        %v2542 = vshll.u32 %v2426, 16
        %v2544 = vrot.slane %v2542, 5
        %v2545 = vor.u32 %v2541, %v2544
        %v2546 = vrot.slane %v2545, 4
        %v2548 = vshll.u32 %v2427, 16
        %v2550 = vrot.slane %v2548, 5
        %v2551 = vsel %vm436, %v2546, %v2550
        %v2552 = vshrl.u32 %v2427, 16
        %v2554 = vrot.slane %v2552, 4
        %v2555 = vor.u32 %v2554, %v2550
        %v2556 = vrot.slane %v2555, 4
        %v2558 = vshll.u32 %v2438, 16
        %v2560 = vrot.slane %v2558, 5
        %v2561 = vsel %vm436, %v2556, %v2560
        %v2563 = vshrl.u32 %v2428, 16
        %v2565 = vrot.slane %v2563, 4
        %v2566 = vshll.u32 %v2428, 16
        %v2568 = vrot.slane %v2566, 5
        %v2569 = vor.u32 %v2565, %v2568
        %v2570 = vrot.slane %v2569, 4
        %v2572 = vshll.u32 %v2429, 16
        %v2574 = vrot.slane %v2572, 5
        %v2575 = vsel %vm436, %v2570, %v2574
        %v2576 = vshrl.u32 %v2429, 16
        %v2578 = vrot.slane %v2576, 4
        %v2579 = vor.u32 %v2578, %v2574
        %v2580 = vrot.slane %v2579, 4
        %v2582 = vshll.u32 %v2439, 16
        %v2584 = vrot.slane %v2582, 5
        %v2585 = vsel %vm436, %v2580, %v2584
        %v2587 = vshrl.u32 %v2430, 16
        %v2589 = vrot.slane %v2587, 4
        %v2590 = vshll.u32 %v2430, 16
        %v2592 = vrot.slane %v2590, 5
        %v2593 = vor.u32 %v2589, %v2592
        %v2594 = vrot.slane %v2593, 4
        %v2596 = vshll.u32 %v2431, 16
        %v2598 = vrot.slane %v2596, 5
        %v2599 = vsel %vm436, %v2594, %v2598
        %v2600 = vshrl.u32 %v2431, 16
        %v2602 = vrot.slane %v2600, 4
        %v2603 = vor.u32 %v2602, %v2598
        %v2604 = vrot.slane %v2603, 4
        %v2606 = vshll.u32 %v2440, 16
        %v2608 = vrot.slane %v2606, 5
        %v2609 = vsel %vm436, %v2604, %v2608
        %v2611 = vshrl.u32 %v2432, 16
        %v2613 = vrot.slane %v2611, 4
        %v2614 = vshll.u32 %v2432, 16
        %v2616 = vrot.slane %v2614, 5
        %v2617 = vor.u32 %v2613, %v2616
        %v2618 = vrot.slane %v2617, 4
        %v2620 = vshll.u32 %v2433, 16
        %v2622 = vrot.slane %v2620, 5
        %v2623 = vsel %vm436, %v2618, %v2622
        %v2624 = vshrl.u32 %v2433, 16
        %v2626 = vrot.slane %v2624, 4
        %v2627 = vor.u32 %v2626, %v2622
        %v2628 = vrot.slane %v2627, 4
        %v2630 = vshll.u32 %v2441, 16
        %v2632 = vrot.slane %v2630, 5
        %v2633 = vsel %vm436, %v2628, %v2632
        %v2634 = vld [vmem:[%s2417] sm:$0xe]
        %v2635 = vld [vmem:[%s2417 + $0xc] sm:$0xe]
        %v2636 = vld [vmem:[%s2417 + $0x18] sm:$0xe]
        %v2637 = vld [vmem:[%s2417 + $0x24] sm:$0xe]
        %v2638 = vld [vmem:[%s2417 + $0x30] sm:$0xe]
        %v2639 = vld [vmem:[%s2417 + $0x3c] sm:$0xe]
        %v2640 = vld [vmem:[%s2417 + $0x48] sm:$0xe]
        %v2641 = vld [vmem:[%s2417 + $0x54] sm:$0xe]
        %v2666 = vrot.slane %v2634, 5
        %v2667 = vrot.slane %v2666, 4
        %v2668 = vrot.slane %v2419, 5
        %v2669 = vsel %vm709, %v2667, %v2668
        %v2670 = vrot.slane %v2668, 4
        %v2671 = vrot.slane %v2434, 5
        %v2672 = vsel %vm709, %v2670, %v2671
        %v2673 = vrot.slane %v2635, 5
        %v2674 = vrot.slane %v2673, 4
        %v2675 = vrot.slane %v2421, 5
        %v2676 = vsel %vm709, %v2674, %v2675
        %v2677 = vrot.slane %v2675, 4
        %v2678 = vrot.slane %v2435, 5
        %v2679 = vsel %vm709, %v2677, %v2678
        %v2680 = vrot.slane %v2636, 5
        %v2681 = vrot.slane %v2680, 4
        %v2682 = vrot.slane %v2423, 5
        %v2683 = vsel %vm709, %v2681, %v2682
        %v2684 = vrot.slane %v2682, 4
        %v2685 = vrot.slane %v2436, 5
        %v2686 = vsel %vm709, %v2684, %v2685
        %v2687 = vrot.slane %v2637, 5
        %v2688 = vrot.slane %v2687, 4
        %v2689 = vrot.slane %v2425, 5
        %v2690 = vsel %vm709, %v2688, %v2689
        %v2691 = vrot.slane %v2689, 4
        %v2692 = vrot.slane %v2437, 5
        %v2693 = vsel %vm709, %v2691, %v2692
        %v2694 = vrot.slane %v2638, 5
        %v2695 = vrot.slane %v2694, 4
        %v2696 = vrot.slane %v2427, 5
        %v2697 = vsel %vm709, %v2695, %v2696
        %v2698 = vrot.slane %v2696, 4
        %v2699 = vrot.slane %v2438, 5
        %v2700 = vsel %vm709, %v2698, %v2699
        %v2701 = vrot.slane %v2639, 5
        %v2702 = vrot.slane %v2701, 4
        %v2703 = vrot.slane %v2429, 5
        %v2704 = vsel %vm709, %v2702, %v2703
        %v2705 = vrot.slane %v2703, 4
        %v2706 = vrot.slane %v2439, 5
        %v2707 = vsel %vm709, %v2705, %v2706
        %v2708 = vrot.slane %v2640, 5
        %v2709 = vrot.slane %v2708, 4
        %v2710 = vrot.slane %v2431, 5
        %v2711 = vsel %vm709, %v2709, %v2710
        %v2712 = vrot.slane %v2710, 4
        %v2713 = vrot.slane %v2440, 5
        %v2714 = vsel %vm709, %v2712, %v2713
        %v2715 = vrot.slane %v2641, 5
        %v2716 = vrot.slane %v2715, 4
        %v2717 = vrot.slane %v2433, 5
        %v2718 = vsel %vm709, %v2716, %v2717
        %v2719 = vrot.slane %v2717, 4
        %v2720 = vrot.slane %v2441, 5
        %v2721 = vsel %vm709, %v2719, %v2720
        %v2730 = vunpack.c.l.b16 %v2418
        %v2731 = vunpack.c.l.b16 %v2419
        %v2732 = vunpack.c.l.b16 %v2420
        %v2733 = vunpack.c.l.b16 %v2421
        %v2734 = vunpack.c.l.b16 %v2422
        %v2735 = vunpack.c.l.b16 %v2423
        %v2736 = vunpack.c.l.b16 %v2424
        %v2737 = vunpack.c.l.b16 %v2425
        %v2738 = vunpack.c.l.b16 %v2426
        %v2739 = vunpack.c.l.b16 %v2427
        %v2740 = vunpack.c.l.b16 %v2428
        %v2741 = vunpack.c.l.b16 %v2429
        %v2742 = vunpack.c.l.b16 %v2430
        %v2743 = vunpack.c.l.b16 %v2431
        %v2744 = vunpack.c.l.b16 %v2432
        %v2745 = vunpack.c.l.b16 %v2433
        %v2746 = vpack.c.b16 %v2731, %v2730
        %v2747 = vpack.c.b16 %v2733, %v2732
        %v2748 = vpack.c.b16 %v2735, %v2734
        %v2749 = vpack.c.b16 %v2737, %v2736
        %v2750 = vpack.c.b16 %v2739, %v2738
        %v2751 = vpack.c.b16 %v2741, %v2740
        %v2752 = vpack.c.b16 %v2743, %v2742
        %v2753 = vpack.c.b16 %v2745, %v2744
        %v2762 = vunpack.c.l.b16 %v2455
        %v2763 = vunpack.c.l.b16 %v2465
        %v2764 = vunpack.c.l.b16 %v2479
        %v2765 = vunpack.c.l.b16 %v2489
        %v2766 = vunpack.c.l.b16 %v2503
        %v2767 = vunpack.c.l.b16 %v2513
        %v2768 = vunpack.c.l.b16 %v2527
        %v2769 = vunpack.c.l.b16 %v2537
        %v2770 = vunpack.c.l.b16 %v2551
        %v2771 = vunpack.c.l.b16 %v2561
        %v2772 = vunpack.c.l.b16 %v2575
        %v2773 = vunpack.c.l.b16 %v2585
        %v2774 = vunpack.c.l.b16 %v2599
        %v2775 = vunpack.c.l.b16 %v2609
        %v2776 = vunpack.c.l.b16 %v2623
        %v2777 = vunpack.c.l.b16 %v2633
        %v2778 = vpack.c.b16 %v2763, %v2762
        %v2779 = vpack.c.b16 %v2765, %v2764
        %v2780 = vpack.c.b16 %v2767, %v2766
        %v2781 = vpack.c.b16 %v2769, %v2768
        %v2782 = vpack.c.b16 %v2771, %v2770
        %v2783 = vpack.c.b16 %v2773, %v2772
        %v2784 = vpack.c.b16 %v2775, %v2774
        %v2785 = vpack.c.b16 %v2777, %v2776
        %v2794 = vunpack.c.l.b16 %v2669
        %v2795 = vunpack.c.l.b16 %v2672
        %v2796 = vunpack.c.l.b16 %v2676
        %v2797 = vunpack.c.l.b16 %v2679
        %v2798 = vunpack.c.l.b16 %v2683
        %v2799 = vunpack.c.l.b16 %v2686
        %v2800 = vunpack.c.l.b16 %v2690
        %v2801 = vunpack.c.l.b16 %v2693
        %v2802 = vunpack.c.l.b16 %v2697
        %v2803 = vunpack.c.l.b16 %v2700
        %v2804 = vunpack.c.l.b16 %v2704
        %v2805 = vunpack.c.l.b16 %v2707
        %v2806 = vunpack.c.l.b16 %v2711
        %v2807 = vunpack.c.l.b16 %v2714
        %v2808 = vunpack.c.l.b16 %v2718
        %v2809 = vunpack.c.l.b16 %v2721
        %v2810 = vpack.c.b16 %v2795, %v2794
        %v2811 = vpack.c.b16 %v2797, %v2796
        %v2812 = vpack.c.b16 %v2799, %v2798
        %v2813 = vpack.c.b16 %v2801, %v2800
        %v2814 = vpack.c.b16 %v2803, %v2802
        %v2815 = vpack.c.b16 %v2805, %v2804
        %v2816 = vpack.c.b16 %v2807, %v2806
        %v2817 = vpack.c.b16 %v2809, %v2808
        %s2826 = scalar_lea.vmem %s6, 24
        %v2827 = vld [vmem:[%s2826] sm:$0xff]
        %v2828 = vld [vmem:[%s2826 + $0x8] sm:$0xf]
        %v2829 = vld [vmem:[%s2826 + $0xc] sm:$0xff]
        %v2830 = vld [vmem:[%s2826 + $0x14] sm:$0xf]
        %v2835 = vunpack.c.l.b16 %v2827
        %v2836 = vunpack.c.h.b16 %v2827
        %v2837 = vunpack.c.l.b16 %v2828
        %v2838 = vunpack.c.l.b16 %v2829
        %v2839 = vunpack.c.h.b16 %v2829
        %v2840 = vunpack.c.l.b16 %v2830
        %v2841 = vpack.c.b16 %v2838, %v2835
        %v2842 = vpack.c.b16 %v2839, %v2836
        %v2843 = vpack.c.b16 %v2840, %v2837
        %2847 = vmatprep.subr.bf16.mxu0 %v2785
        %2848 = vmatpush1.bf16.xpose.msra.mxu0 %v2753
        %2849 = vmatprep.subr.bf16.mxu0 %v2784
        %2850 = vmatpush1.bf16.xpose.msra.mxu0 %v2752
        %2851 = vmatprep.subr.bf16.mxu0 %v2783
        %2852 = vmatpush1.bf16.xpose.msra.mxu0 %v2751
        %2853 = vmatprep.subr.bf16.mxu0 %v2782
        %2854 = vmatpush1.bf16.xpose.msra.mxu0 %v2750
        %2855 = vmatprep.subr.bf16.mxu0 %v2781
        %2856 = vmatpush1.bf16.xpose.msra.mxu0 %v2749
        %2857 = vmatprep.subr.bf16.mxu0 %v2780
        %2858 = vmatpush1.bf16.xpose.msra.mxu0 %v2748
        %2859 = vmatprep.subr.bf16.mxu0 %v2779
        %2860 = vmatpush1.bf16.xpose.msra.mxu0 %v2747
        %2861 = vmatprep.subr.bf16.mxu0 %v2778
        %2862 = vmatpush1.bf16.xpose.msra.mxu0 %v2746
        %2863 = vmatprep.subr.bf16.mxu0 0
        %2864 = vmatpush2.bf16.xpose.msra.mxu0 0
        %2865 = vmatprep.subr.bf16.mxu0 0
        %2866 = vmatpush2.bf16.xpose.msra.mxu0 0
        %2867 = vmatprep.subr.bf16.mxu0 0
        %2868 = vmatpush2.bf16.xpose.msra.mxu0 0
        %2869 = vmatprep.subr.bf16.mxu0 0
        %2870 = vmatpush2.bf16.xpose.msra.mxu0 0
        %2871 = vmatprep.subr.bf16.mxu0 0
        %2872 = vmatpush2.bf16.xpose.msra.mxu0 0
        %2873 = vmatprep.subr.bf16.mxu0 0
        %2874 = vmatpush2.bf16.xpose.msra.mxu0 0
        %2875 = vmatprep.subr.bf16.mxu0 0
        %2876 = vmatpush2.bf16.xpose.msra.mxu0 0
        %2877 = vmatprep.subr.bf16.mxu0 0
        %2878 = vmatpush2.bf16.xpose.msra.mxu0 0
        %2879 = vmatprep.mubr.bf16.mxu0 %v2842
        %2880 = vmatmul.mubr.bf16.gmra.mxu0 %v2841
        %v2881 = vpop.f32.mrf.mxu0
        %v2882 = vadd.f32 0.0, %v2881
        %v2883 = vpop.f32.mrf.mxu0
        %v2884 = vpop.f32.mrf.mxu0
        %v2885 = vadd.f32 0.0, %v2884
        %v2886 = vpop.f32.mrf.mxu0
        %2887 = vdwg.mxu0
        %2888 = vmatprep.subr.bf16.mxu0 0
        %2889 = vmatpush1.bf16.xpose.msra.mxu0 %v2817
        %2890 = vmatprep.subr.bf16.mxu0 0
        %2891 = vmatpush1.bf16.xpose.msra.mxu0 %v2816
        %2892 = vmatprep.subr.bf16.mxu0 0
        %2893 = vmatpush1.bf16.xpose.msra.mxu0 %v2815
        %2894 = vmatprep.subr.bf16.mxu0 0
        %2895 = vmatpush1.bf16.xpose.msra.mxu0 %v2814
        %2896 = vmatprep.subr.bf16.mxu0 0
        %2897 = vmatpush1.bf16.xpose.msra.mxu0 %v2813
        %2898 = vmatprep.subr.bf16.mxu0 0
        %2899 = vmatpush1.bf16.xpose.msra.mxu0 %v2812
        %2900 = vmatprep.subr.bf16.mxu0 0
        %2901 = vmatpush1.bf16.xpose.msra.mxu0 %v2811
        %2902 = vmatprep.subr.bf16.mxu0 0
        %2903 = vmatpush1.bf16.xpose.msra.mxu0 %v2810
        %2904 = vmatprep.subr.bf16.mxu0 0
        %2905 = vmatpush2.bf16.xpose.msra.mxu0 0
        %2906 = vmatprep.subr.bf16.mxu0 0
        %2907 = vmatpush2.bf16.xpose.msra.mxu0 0
        %2908 = vmatprep.subr.bf16.mxu0 0
        %2909 = vmatpush2.bf16.xpose.msra.mxu0 0
        %2910 = vmatprep.subr.bf16.mxu0 0
        %2911 = vmatpush2.bf16.xpose.msra.mxu0 0
        %2912 = vmatprep.subr.bf16.mxu0 0
        %2913 = vmatpush2.bf16.xpose.msra.mxu0 0
        %2914 = vmatprep.subr.bf16.mxu0 0
        %2915 = vmatpush2.bf16.xpose.msra.mxu0 0
        %2916 = vmatprep.subr.bf16.mxu0 0
        %2917 = vmatpush2.bf16.xpose.msra.mxu0 0
        %2918 = vmatprep.subr.bf16.mxu0 0
        %2919 = vmatpush2.bf16.xpose.msra.mxu0 0
        %2920 = vmatprep.mubr.bf16.mxu0 0
        %2921 = vmatmul.mubr.bf16.gmra.mxu0 %v2843
        %v2922 = vpop.f32.mrf.mxu0
        %v2923 = vadd.f32 %v2882, %v2922
        %v2924 = vpop.f32.mrf.mxu0
        %v2925 = vpop.f32.mrf.mxu0
        %v2926 = vadd.f32 %v2885, %v2925
        %v2927 = vpop.f32.mrf.mxu0
        %2928 = vdwg.mxu0
        %v2929 = vadd.f32 %v2415, %v2923
        %v2930 = vadd.f32 %v2416, %v2926
        %s2931 = scalar_lea.vmem [#allocation2], 24
        %v2932 = vld [vmem:[%s2931] sm:$0xf]
        %v2933 = vld [vmem:[%s2931 + $0x4] sm:$0xf]
        %v2934 = vld [vmem:[%s2931 + $0xc] sm:$0xf]
        %v2935 = vld [vmem:[%s2931 + $0x10] sm:$0xf]
        %v2936 = vld [vmem:[%s2931 + $0x18] sm:$0xf]
        %v2937 = vld [vmem:[%s2931 + $0x1c] sm:$0xf]
        %v2938 = vld [vmem:[%s2931 + $0x24] sm:$0xf]
        %v2939 = vld [vmem:[%s2931 + $0x28] sm:$0xf]
        %v2940 = vld [vmem:[%s2931 + $0x30] sm:$0xf]
        %v2941 = vld [vmem:[%s2931 + $0x34] sm:$0xf]
        %v2942 = vld [vmem:[%s2931 + $0x3c] sm:$0xf]
        %v2943 = vld [vmem:[%s2931 + $0x40] sm:$0xf]
        %v2944 = vld [vmem:[%s2931 + $0x48] sm:$0xf]
        %v2945 = vld [vmem:[%s2931 + $0x4c] sm:$0xf]
        %v2946 = vld [vmem:[%s2931 + $0x54] sm:$0xf]
        %v2947 = vld [vmem:[%s2931 + $0x58] sm:$0xf]
        %v2948 = vld [vmem:[%s2931 + $0x8] sm:$0x1]
        %v2949 = vld [vmem:[%s2931 + $0x14] sm:$0x1]
        %v2950 = vld [vmem:[%s2931 + $0x20] sm:$0x1]
        %v2951 = vld [vmem:[%s2931 + $0x2c] sm:$0x1]
        %v2952 = vld [vmem:[%s2931 + $0x38] sm:$0x1]
        %v2953 = vld [vmem:[%s2931 + $0x44] sm:$0x1]
        %v2954 = vld [vmem:[%s2931 + $0x50] sm:$0x1]
        %v2955 = vld [vmem:[%s2931 + $0x5c] sm:$0x1]
        %v2957 = vshrl.u32 %v2932, 16
        %v2959 = vrot.slane %v2957, 4
        %v2960 = vshll.u32 %v2932, 16
        %v2962 = vrot.slane %v2960, 5
        %v2963 = vor.u32 %v2959, %v2962
        %v2964 = vrot.slane %v2963, 4
        %v2966 = vshll.u32 %v2933, 16
        %v2968 = vrot.slane %v2966, 5
        %v2969 = vsel %vm436, %v2964, %v2968
        %v2970 = vshrl.u32 %v2933, 16
        %v2972 = vrot.slane %v2970, 4
        %v2973 = vor.u32 %v2972, %v2968
        %v2974 = vrot.slane %v2973, 4
        %v2976 = vshll.u32 %v2948, 16
        %v2978 = vrot.slane %v2976, 5
        %v2979 = vsel %vm436, %v2974, %v2978
        %v2981 = vshrl.u32 %v2934, 16
        %v2983 = vrot.slane %v2981, 4
        %v2984 = vshll.u32 %v2934, 16
        %v2986 = vrot.slane %v2984, 5
        %v2987 = vor.u32 %v2983, %v2986
        %v2988 = vrot.slane %v2987, 4
        %v2990 = vshll.u32 %v2935, 16
        %v2992 = vrot.slane %v2990, 5
        %v2993 = vsel %vm436, %v2988, %v2992
        %v2994 = vshrl.u32 %v2935, 16
        %v2996 = vrot.slane %v2994, 4
        %v2997 = vor.u32 %v2996, %v2992
        %v2998 = vrot.slane %v2997, 4
        %v3000 = vshll.u32 %v2949, 16
        %v3002 = vrot.slane %v3000, 5
        %v3003 = vsel %vm436, %v2998, %v3002
        %v3005 = vshrl.u32 %v2936, 16
        %v3007 = vrot.slane %v3005, 4
        %v3008 = vshll.u32 %v2936, 16
        %v3010 = vrot.slane %v3008, 5
        %v3011 = vor.u32 %v3007, %v3010
        %v3012 = vrot.slane %v3011, 4
        %v3014 = vshll.u32 %v2937, 16
        %v3016 = vrot.slane %v3014, 5
        %v3017 = vsel %vm436, %v3012, %v3016
        %v3018 = vshrl.u32 %v2937, 16
        %v3020 = vrot.slane %v3018, 4
        %v3021 = vor.u32 %v3020, %v3016
        %v3022 = vrot.slane %v3021, 4
        %v3024 = vshll.u32 %v2950, 16
        %v3026 = vrot.slane %v3024, 5
        %v3027 = vsel %vm436, %v3022, %v3026
        %v3029 = vshrl.u32 %v2938, 16
        %v3031 = vrot.slane %v3029, 4
        %v3032 = vshll.u32 %v2938, 16
        %v3034 = vrot.slane %v3032, 5
        %v3035 = vor.u32 %v3031, %v3034
        %v3036 = vrot.slane %v3035, 4
        %v3038 = vshll.u32 %v2939, 16
        %v3040 = vrot.slane %v3038, 5
        %v3041 = vsel %vm436, %v3036, %v3040
        %v3042 = vshrl.u32 %v2939, 16
        %v3044 = vrot.slane %v3042, 4
        %v3045 = vor.u32 %v3044, %v3040
        %v3046 = vrot.slane %v3045, 4
        %v3048 = vshll.u32 %v2951, 16
        %v3050 = vrot.slane %v3048, 5
        %v3051 = vsel %vm436, %v3046, %v3050
        %v3053 = vshrl.u32 %v2940, 16
        %v3055 = vrot.slane %v3053, 4
        %v3056 = vshll.u32 %v2940, 16
        %v3058 = vrot.slane %v3056, 5
        %v3059 = vor.u32 %v3055, %v3058
        %v3060 = vrot.slane %v3059, 4
        %v3062 = vshll.u32 %v2941, 16
        %v3064 = vrot.slane %v3062, 5
        %v3065 = vsel %vm436, %v3060, %v3064
        %v3066 = vshrl.u32 %v2941, 16
        %v3068 = vrot.slane %v3066, 4
        %v3069 = vor.u32 %v3068, %v3064
        %v3070 = vrot.slane %v3069, 4
        %v3072 = vshll.u32 %v2952, 16
        %v3074 = vrot.slane %v3072, 5
        %v3075 = vsel %vm436, %v3070, %v3074
        %v3077 = vshrl.u32 %v2942, 16
        %v3079 = vrot.slane %v3077, 4
        %v3080 = vshll.u32 %v2942, 16
        %v3082 = vrot.slane %v3080, 5
        %v3083 = vor.u32 %v3079, %v3082
        %v3084 = vrot.slane %v3083, 4
        %v3086 = vshll.u32 %v2943, 16
        %v3088 = vrot.slane %v3086, 5
        %v3089 = vsel %vm436, %v3084, %v3088
        %v3090 = vshrl.u32 %v2943, 16
        %v3092 = vrot.slane %v3090, 4
        %v3093 = vor.u32 %v3092, %v3088
        %v3094 = vrot.slane %v3093, 4
        %v3096 = vshll.u32 %v2953, 16
        %v3098 = vrot.slane %v3096, 5
        %v3099 = vsel %vm436, %v3094, %v3098
        %v3101 = vshrl.u32 %v2944, 16
        %v3103 = vrot.slane %v3101, 4
        %v3104 = vshll.u32 %v2944, 16
        %v3106 = vrot.slane %v3104, 5
        %v3107 = vor.u32 %v3103, %v3106
        %v3108 = vrot.slane %v3107, 4
        %v3110 = vshll.u32 %v2945, 16
        %v3112 = vrot.slane %v3110, 5
        %v3113 = vsel %vm436, %v3108, %v3112
        %v3114 = vshrl.u32 %v2945, 16
        %v3116 = vrot.slane %v3114, 4
        %v3117 = vor.u32 %v3116, %v3112
        %v3118 = vrot.slane %v3117, 4
        %v3120 = vshll.u32 %v2954, 16
        %v3122 = vrot.slane %v3120, 5
        %v3123 = vsel %vm436, %v3118, %v3122
        %v3125 = vshrl.u32 %v2946, 16
        %v3127 = vrot.slane %v3125, 4
        %v3128 = vshll.u32 %v2946, 16
        %v3130 = vrot.slane %v3128, 5
        %v3131 = vor.u32 %v3127, %v3130
        %v3132 = vrot.slane %v3131, 4
        %v3134 = vshll.u32 %v2947, 16
        %v3136 = vrot.slane %v3134, 5
        %v3137 = vsel %vm436, %v3132, %v3136
        %v3138 = vshrl.u32 %v2947, 16
        %v3140 = vrot.slane %v3138, 4
        %v3141 = vor.u32 %v3140, %v3136
        %v3142 = vrot.slane %v3141, 4
        %v3144 = vshll.u32 %v2955, 16
        %v3146 = vrot.slane %v3144, 5
        %v3147 = vsel %vm436, %v3142, %v3146
        %v3148 = vld [vmem:[%s2931] sm:$0xe]
        %v3149 = vld [vmem:[%s2931 + $0xc] sm:$0xe]
        %v3150 = vld [vmem:[%s2931 + $0x18] sm:$0xe]
        %v3151 = vld [vmem:[%s2931 + $0x24] sm:$0xe]
        %v3152 = vld [vmem:[%s2931 + $0x30] sm:$0xe]
        %v3153 = vld [vmem:[%s2931 + $0x3c] sm:$0xe]
        %v3154 = vld [vmem:[%s2931 + $0x48] sm:$0xe]
        %v3155 = vld [vmem:[%s2931 + $0x54] sm:$0xe]
        %v3180 = vrot.slane %v3148, 5
        %v3181 = vrot.slane %v3180, 4
        %v3182 = vrot.slane %v2933, 5
        %v3183 = vsel %vm709, %v3181, %v3182
        %v3184 = vrot.slane %v3182, 4
        %v3185 = vrot.slane %v2948, 5
        %v3186 = vsel %vm709, %v3184, %v3185
        %v3187 = vrot.slane %v3149, 5
        %v3188 = vrot.slane %v3187, 4
        %v3189 = vrot.slane %v2935, 5
        %v3190 = vsel %vm709, %v3188, %v3189
        %v3191 = vrot.slane %v3189, 4
        %v3192 = vrot.slane %v2949, 5
        %v3193 = vsel %vm709, %v3191, %v3192
        %v3194 = vrot.slane %v3150, 5
        %v3195 = vrot.slane %v3194, 4
        %v3196 = vrot.slane %v2937, 5
        %v3197 = vsel %vm709, %v3195, %v3196
        %v3198 = vrot.slane %v3196, 4
        %v3199 = vrot.slane %v2950, 5
        %v3200 = vsel %vm709, %v3198, %v3199
        %v3201 = vrot.slane %v3151, 5
        %v3202 = vrot.slane %v3201, 4
        %v3203 = vrot.slane %v2939, 5
        %v3204 = vsel %vm709, %v3202, %v3203
        %v3205 = vrot.slane %v3203, 4
        %v3206 = vrot.slane %v2951, 5
        %v3207 = vsel %vm709, %v3205, %v3206
        %v3208 = vrot.slane %v3152, 5
        %v3209 = vrot.slane %v3208, 4
        %v3210 = vrot.slane %v2941, 5
        %v3211 = vsel %vm709, %v3209, %v3210
        %v3212 = vrot.slane %v3210, 4
        %v3213 = vrot.slane %v2952, 5
        %v3214 = vsel %vm709, %v3212, %v3213
        %v3215 = vrot.slane %v3153, 5
        %v3216 = vrot.slane %v3215, 4
        %v3217 = vrot.slane %v2943, 5
        %v3218 = vsel %vm709, %v3216, %v3217
        %v3219 = vrot.slane %v3217, 4
        %v3220 = vrot.slane %v2953, 5
        %v3221 = vsel %vm709, %v3219, %v3220
        %v3222 = vrot.slane %v3154, 5
        %v3223 = vrot.slane %v3222, 4
        %v3224 = vrot.slane %v2945, 5
        %v3225 = vsel %vm709, %v3223, %v3224
        %v3226 = vrot.slane %v3224, 4
        %v3227 = vrot.slane %v2954, 5
        %v3228 = vsel %vm709, %v3226, %v3227
        %v3229 = vrot.slane %v3155, 5
        %v3230 = vrot.slane %v3229, 4
        %v3231 = vrot.slane %v2947, 5
        %v3232 = vsel %vm709, %v3230, %v3231
        %v3233 = vrot.slane %v3231, 4
        %v3234 = vrot.slane %v2955, 5
        %v3235 = vsel %vm709, %v3233, %v3234
        %v3244 = vunpack.c.l.b16 %v2932
        %v3245 = vunpack.c.l.b16 %v2933
        %v3246 = vunpack.c.l.b16 %v2934
        %v3247 = vunpack.c.l.b16 %v2935
        %v3248 = vunpack.c.l.b16 %v2936
        %v3249 = vunpack.c.l.b16 %v2937
        %v3250 = vunpack.c.l.b16 %v2938
        %v3251 = vunpack.c.l.b16 %v2939
        %v3252 = vunpack.c.l.b16 %v2940
        %v3253 = vunpack.c.l.b16 %v2941
        %v3254 = vunpack.c.l.b16 %v2942
        %v3255 = vunpack.c.l.b16 %v2943
        %v3256 = vunpack.c.l.b16 %v2944
        %v3257 = vunpack.c.l.b16 %v2945
        %v3258 = vunpack.c.l.b16 %v2946
        %v3259 = vunpack.c.l.b16 %v2947
        %v3260 = vpack.c.b16 %v3245, %v3244
        %v3261 = vpack.c.b16 %v3247, %v3246
        %v3262 = vpack.c.b16 %v3249, %v3248
        %v3263 = vpack.c.b16 %v3251, %v3250
        %v3264 = vpack.c.b16 %v3253, %v3252
        %v3265 = vpack.c.b16 %v3255, %v3254
        %v3266 = vpack.c.b16 %v3257, %v3256
        %v3267 = vpack.c.b16 %v3259, %v3258
        %v3276 = vunpack.c.l.b16 %v2969
        %v3277 = vunpack.c.l.b16 %v2979
        %v3278 = vunpack.c.l.b16 %v2993
        %v3279 = vunpack.c.l.b16 %v3003
        %v3280 = vunpack.c.l.b16 %v3017
        %v3281 = vunpack.c.l.b16 %v3027
        %v3282 = vunpack.c.l.b16 %v3041
        %v3283 = vunpack.c.l.b16 %v3051
        %v3284 = vunpack.c.l.b16 %v3065
        %v3285 = vunpack.c.l.b16 %v3075
        %v3286 = vunpack.c.l.b16 %v3089
        %v3287 = vunpack.c.l.b16 %v3099
        %v3288 = vunpack.c.l.b16 %v3113
        %v3289 = vunpack.c.l.b16 %v3123
        %v3290 = vunpack.c.l.b16 %v3137
        %v3291 = vunpack.c.l.b16 %v3147
        %v3292 = vpack.c.b16 %v3277, %v3276
        %v3293 = vpack.c.b16 %v3279, %v3278
        %v3294 = vpack.c.b16 %v3281, %v3280
        %v3295 = vpack.c.b16 %v3283, %v3282
        %v3296 = vpack.c.b16 %v3285, %v3284
        %v3297 = vpack.c.b16 %v3287, %v3286
        %v3298 = vpack.c.b16 %v3289, %v3288
        %v3299 = vpack.c.b16 %v3291, %v3290
        %v3308 = vunpack.c.l.b16 %v3183
        %v3309 = vunpack.c.l.b16 %v3186
        %v3310 = vunpack.c.l.b16 %v3190
        %v3311 = vunpack.c.l.b16 %v3193
        %v3312 = vunpack.c.l.b16 %v3197
        %v3313 = vunpack.c.l.b16 %v3200
        %v3314 = vunpack.c.l.b16 %v3204
        %v3315 = vunpack.c.l.b16 %v3207
        %v3316 = vunpack.c.l.b16 %v3211
        %v3317 = vunpack.c.l.b16 %v3214
        %v3318 = vunpack.c.l.b16 %v3218
        %v3319 = vunpack.c.l.b16 %v3221
        %v3320 = vunpack.c.l.b16 %v3225
        %v3321 = vunpack.c.l.b16 %v3228
        %v3322 = vunpack.c.l.b16 %v3232
        %v3323 = vunpack.c.l.b16 %v3235
        %v3324 = vpack.c.b16 %v3309, %v3308
        %v3325 = vpack.c.b16 %v3311, %v3310
        %v3326 = vpack.c.b16 %v3313, %v3312
        %v3327 = vpack.c.b16 %v3315, %v3314
        %v3328 = vpack.c.b16 %v3317, %v3316
        %v3329 = vpack.c.b16 %v3319, %v3318
        %v3330 = vpack.c.b16 %v3321, %v3320
        %v3331 = vpack.c.b16 %v3323, %v3322
        %s3340 = scalar_lea.vmem %s6, 48
        %v3341 = vld [vmem:[%s3340] sm:$0xff]
        %v3342 = vld [vmem:[%s3340 + $0x8] sm:$0xf]
        %v3343 = vld [vmem:[%s3340 + $0xc] sm:$0xff]
        %v3344 = vld [vmem:[%s3340 + $0x14] sm:$0xf]
        %v3349 = vunpack.c.l.b16 %v3341
        %v3350 = vunpack.c.h.b16 %v3341
        %v3351 = vunpack.c.l.b16 %v3342
        %v3352 = vunpack.c.l.b16 %v3343
        %v3353 = vunpack.c.h.b16 %v3343
        %v3354 = vunpack.c.l.b16 %v3344
        %v3355 = vpack.c.b16 %v3352, %v3349
        %v3356 = vpack.c.b16 %v3353, %v3350
        %v3357 = vpack.c.b16 %v3354, %v3351
        %3361 = vmatprep.subr.bf16.mxu0 %v3299
        %3362 = vmatpush1.bf16.xpose.msra.mxu0 %v3267
        %3363 = vmatprep.subr.bf16.mxu0 %v3298
        %3364 = vmatpush1.bf16.xpose.msra.mxu0 %v3266
        %3365 = vmatprep.subr.bf16.mxu0 %v3297
        %3366 = vmatpush1.bf16.xpose.msra.mxu0 %v3265
        %3367 = vmatprep.subr.bf16.mxu0 %v3296
        %3368 = vmatpush1.bf16.xpose.msra.mxu0 %v3264
        %3369 = vmatprep.subr.bf16.mxu0 %v3295
        %3370 = vmatpush1.bf16.xpose.msra.mxu0 %v3263
        %3371 = vmatprep.subr.bf16.mxu0 %v3294
        %3372 = vmatpush1.bf16.xpose.msra.mxu0 %v3262
        %3373 = vmatprep.subr.bf16.mxu0 %v3293
        %3374 = vmatpush1.bf16.xpose.msra.mxu0 %v3261
        %3375 = vmatprep.subr.bf16.mxu0 %v3292
        %3376 = vmatpush1.bf16.xpose.msra.mxu0 %v3260
        %3377 = vmatprep.subr.bf16.mxu0 0
        %3378 = vmatpush2.bf16.xpose.msra.mxu0 0
        %3379 = vmatprep.subr.bf16.mxu0 0
        %3380 = vmatpush2.bf16.xpose.msra.mxu0 0
        %3381 = vmatprep.subr.bf16.mxu0 0
        %3382 = vmatpush2.bf16.xpose.msra.mxu0 0
        %3383 = vmatprep.subr.bf16.mxu0 0
        %3384 = vmatpush2.bf16.xpose.msra.mxu0 0
        %3385 = vmatprep.subr.bf16.mxu0 0
        %3386 = vmatpush2.bf16.xpose.msra.mxu0 0
        %3387 = vmatprep.subr.bf16.mxu0 0
        %3388 = vmatpush2.bf16.xpose.msra.mxu0 0
        %3389 = vmatprep.subr.bf16.mxu0 0
        %3390 = vmatpush2.bf16.xpose.msra.mxu0 0
        %3391 = vmatprep.subr.bf16.mxu0 0
        %3392 = vmatpush2.bf16.xpose.msra.mxu0 0
        %3393 = vmatprep.mubr.bf16.mxu0 %v3356
        %3394 = vmatmul.mubr.bf16.gmra.mxu0 %v3355
        %v3395 = vpop.f32.mrf.mxu0
        %v3396 = vadd.f32 0.0, %v3395
        %v3397 = vpop.f32.mrf.mxu0
        %v3398 = vpop.f32.mrf.mxu0
        %v3399 = vadd.f32 0.0, %v3398
        %v3400 = vpop.f32.mrf.mxu0
        %3401 = vdwg.mxu0
        %3402 = vmatprep.subr.bf16.mxu0 0
        %3403 = vmatpush1.bf16.xpose.msra.mxu0 %v3331
        %3404 = vmatprep.subr.bf16.mxu0 0
        %3405 = vmatpush1.bf16.xpose.msra.mxu0 %v3330
        %3406 = vmatprep.subr.bf16.mxu0 0
        %3407 = vmatpush1.bf16.xpose.msra.mxu0 %v3329
        %3408 = vmatprep.subr.bf16.mxu0 0
        %3409 = vmatpush1.bf16.xpose.msra.mxu0 %v3328
        %3410 = vmatprep.subr.bf16.mxu0 0
        %3411 = vmatpush1.bf16.xpose.msra.mxu0 %v3327
        %3412 = vmatprep.subr.bf16.mxu0 0
        %3413 = vmatpush1.bf16.xpose.msra.mxu0 %v3326
        %3414 = vmatprep.subr.bf16.mxu0 0
        %3415 = vmatpush1.bf16.xpose.msra.mxu0 %v3325
        %3416 = vmatprep.subr.bf16.mxu0 0
        %3417 = vmatpush1.bf16.xpose.msra.mxu0 %v3324
        %3418 = vmatprep.subr.bf16.mxu0 0
        %3419 = vmatpush2.bf16.xpose.msra.mxu0 0
        %3420 = vmatprep.subr.bf16.mxu0 0
        %3421 = vmatpush2.bf16.xpose.msra.mxu0 0
        %3422 = vmatprep.subr.bf16.mxu0 0
        %3423 = vmatpush2.bf16.xpose.msra.mxu0 0
        %3424 = vmatprep.subr.bf16.mxu0 0
        %3425 = vmatpush2.bf16.xpose.msra.mxu0 0
        %3426 = vmatprep.subr.bf16.mxu0 0
        %3427 = vmatpush2.bf16.xpose.msra.mxu0 0
        %3428 = vmatprep.subr.bf16.mxu0 0
        %3429 = vmatpush2.bf16.xpose.msra.mxu0 0
        %3430 = vmatprep.subr.bf16.mxu0 0
        %3431 = vmatpush2.bf16.xpose.msra.mxu0 0
        %3432 = vmatprep.subr.bf16.mxu0 0
        %3433 = vmatpush2.bf16.xpose.msra.mxu0 0
        %3434 = vmatprep.mubr.bf16.mxu0 0
        %3435 = vmatmul.mubr.bf16.gmra.mxu0 %v3357
        %v3436 = vpop.f32.mrf.mxu0
        %v3437 = vadd.f32 %v3396, %v3436
        %v3438 = vpop.f32.mrf.mxu0
        %v3439 = vpop.f32.mrf.mxu0
        %v3440 = vadd.f32 %v3399, %v3439
        %v3441 = vpop.f32.mrf.mxu0
        %3442 = vdwg.mxu0
        %v3443 = vadd.f32 %v2929, %v3437
        %v3444 = vadd.f32 %v2930, %v3440
        %v3445 = vld [vmem:[%s379] sm:$0xff]
        %v3446 = vld [vmem:[%s392] sm:$0xff]
        %3448 = vset.pattern.permute.xlu0 0
        %3449 = vperm.xlu0 %3448, %v3446
        %v3450 = vpop.permute.xlu0 %3449
        %v3452 = vsub.f32 %v3445, %v3450
        %v3453 = vld [vmem:[%s396] sm:$0xff]
        %3455 = vset.pattern.permute.xlu0 0
        %3456 = vperm.xlu0 %3455, %v3453
        %v3457 = vpop.permute.xlu0 %3456
        %v3459 = vmul.f32 %v3452, %v3457
        %v3460 = vadd.f32 %v3443, 1.0
        %v3461 = vmul.f32 %v3459, %v3460
        %v3462 = vadd.f32 %v3461, %v3444
        %3463 = vst [vmem:[%s371] sm:$0xff] %v3462
        %s3464 = sand.u32 %s238, 1
        %s3465 = scalar_lea.sflag [#allocation4], %s3464
        %s3466 = sand.u32 %s238, 1
        %s3467 = smul.addr %s3466, 8
        %s3468 = scalar_lea.vmem [#allocation3], %s3467
        // Predicated region
        $region61: #{tpu_custom_call.1} parent=51 // pred_check
          %p3469 = pneg %p248
        $region62: #{tpu_custom_call.1} parent=51 // pred_check_branch
          %3471 = sbr.rel (%p3469) target = $region64
        $region63: #{tpu_custom_call.1} parent=51 // pred_region
          %s3473 = ssub.s32 128, 128
          %3474 = vsyncadd %s3465, %s3473
          %s3475 = smul.addr %s26, 2
          %s3476 = sadd.s32 %s27, %s3475
          %s3477 = smul.addr %s3476, 128
          %s3478 = scalar_lea.hbm %s8, %s3477
          %s3480 = sshll.u32 %s3468, 4
          %s3481 = int_to_ptr.vmem [resolvable:$true] %s3480
          %3483 = dma.vmem_to_hbm [thread:$0]  %s3481, 128, %s3478, %s3465
        $region64: #{tpu_custom_call.1} parent=51 // pred_fallthru
          _
      $region52: #{tpu_custom_call.1} parent=5 // pred_fallthru
        _
      %p3484 = scmp.le.s32.totalorder 2, %s17
      // Predicated region
      $region65: #{tpu_custom_call.1} parent=5 // pred_check
        %p3485 = pneg %p3484
      $region66: #{tpu_custom_call.1} parent=5 // pred_check_branch
        %3487 = sbr.rel (%p3485) target = $region68
      $region67: #{tpu_custom_call.1} parent=5 // pred_region
        %s3488 = ssub.s32 %s17, 2
        // Predicated region
        $region69: #{tpu_custom_call.1} parent=67 // pred_check
          %p3489 = pneg %p254
        $region70: #{tpu_custom_call.1} parent=67 // pred_check_branch
          %3491 = sbr.rel (%p3489) target = $region72
        $region71: #{tpu_custom_call.1} parent=67 // pred_region
          %s3492 = sand.u32 %s239, 1
          %s3493 = scalar_lea.sflag [#allocation4], %s3492
          %s3494 = sand.u32 %s239, 1
          %s3495 = smul.addr %s3494, 8
          %s3496 = scalar_lea.vmem [#allocation3], %s3495
          %3497 = dma.done %s3493, 128
        $region72: #{tpu_custom_call.1} parent=67 // pred_fallthru
          _
      $region68: #{tpu_custom_call.1} parent=5 // pred_fallthru
        _
    $region6: #{tpu_custom_call.1} parent=1 // loop_footer
      %s21 = sadd.s32 1, %s17
    $region7: #{tpu_custom_call.1} parent=1 // loop_footer_branch
      %16 = sbr.rel target = $region3
    $region8: #{tpu_custom_call.1} parent=1 // loop_exit
      _
    %3498 = vsyncpa [#allocation4], 1
    %s3499 = scalar_lea.sflag [#allocation4], 1
    %3500 = vsyncpa %s3499, 1

// kernel: tpu_custom_call.1
$region0: #{tpu_custom_call.1}
  #allocation0 [shape = 'u32[]', space=smem, size = 0x4, offset = 0x4, fixed_abs, tag = 'smem constant byte address 0x4 - core index']
  #allocation1 [shape = 'u32[144,128]{1,0:T(1,128)}', space=vmem, size = 0x12000, scoped, tag = 'internal scratch']
  #allocation2 [shape = 'bf16[10,18,128]{2,1,0:T(8,128)(2,1)}', space=vmem, size = 0xf000, scoped, tag = 'scratch operand']
  %s0 = inlined_call_operand.vmem [shape: f32[2,8,256], index: 0, kind: input, shape index: {}]
  %s1 = inlined_call_operand.vmem [shape: bf16[4,12,18,4], index: 1, kind: input, shape index: {}]
  %s2 = inlined_call_operand.vmem [shape: f32[2,8,1], index: 2, kind: input, shape index: {}]
  %s3 = inlined_call_operand.vmem [shape: f32[2,8,1], index: 3, kind: input, shape index: {}]
  %s4 = inlined_call_operand.vmem [shape: bf16[36,128], index: 4, kind: input, shape index: {}]
  %s5 = inlined_call_operand.vmem [shape: f32[1,128], index: 5, kind: input, shape index: {}]
  %s6 = inlined_call_operand.vmem [shape: bf16[3,16,384], index: 6, kind: input, shape index: {}]
  %s7 = inlined_call_operand.vmem [shape: f32[16,1], index: 7, kind: input, shape index: {}]
  %s8 = inlined_call_operand.hbm [shape: f32[2,8,256], index: 8, kind: output, shape index: {}]
  %s9 = sld [smem:[#allocation0]]
  $region73: #{tpu_custom_call.1} parent=0
    _
  %s11 = ssub.s32 1, %s9
  %s12 = scalar_select 0, %s11, %s9
  $region1: #{tpu_custom_call.1} parent=0
    #allocation3 [shape = 'u8[8192]{0}', space=vmem, size = 0x2000, scoped, tag = 'output window, operand 0']
    #allocation4 [shape = 's32[2]{0}', space=sflag, size = 0x8, scoped, tag = 'scoped memory for tpu_custom_call.1']
    %13 = vsyncpa [#allocation4], 0
    %s14 = scalar_lea.sflag [#allocation4], 1
    %15 = vsyncpa %s14, 0
    loop: start=0, step=1, limit=6
    $region2: #{tpu_custom_call.1} parent=1 // loop_pre_header
      _
    $region3: #{tpu_custom_call.1} parent=1 // loop_header
      %s17 = sphi 0, %s21
      %p18 = scmp.ge.s32.totalorder %s17, 6
      %s24 = sphi 0, %s36
      %s25 = sphi 0, %s32
      %s26 = sphi 0, %s24
      %s27 = sphi 0, %s25
      %s28 = sphi 0, %s26
      %s29 = sphi 0, %s27
      %s41 = sphi 0, %s43
      %s44 = sphi 0, %s41
      %s45 = sphi 0, %s44
      %s61 = sphi 0, %s45
      %s71 = sphi 0, %s73
      %s74 = sphi 0, %s71
      %s75 = sphi 0, %s74
      %s91 = sphi 0, %s75
      %s97 = sphi 0, %s99
      %s100 = sphi 0, %s97
      %s101 = sphi 0, %s100
      %s117 = sphi 0, %s101
      %s123 = sphi 0, %s125
      %s126 = sphi 0, %s123
      %s127 = sphi 0, %s126
      %s143 = sphi 0, %s127
      %s147 = sphi 0, %s147
      %s149 = sphi 0, %s147
      %s150 = sphi 0, %s149
      %s164 = sphi 0, %s150
      %s168 = sphi 0, %s168
      %s170 = sphi 0, %s168
      %s171 = sphi 0, %s170
      %s185 = sphi 0, %s171
      %s189 = sphi 0, %s189
      %s191 = sphi 0, %s189
      %s192 = sphi 0, %s191
      %s206 = sphi 0, %s192
      %s210 = sphi 0, %s210
      %s212 = sphi 0, %s210
      %s213 = sphi 0, %s212
      %s227 = sphi 0, %s213
      %s235 = sphi 0, %s237
      %s238 = sphi 0, %s235
      %s239 = sphi 0, %s238
      %s255 = sphi 0, %s239
    $region4: #{tpu_custom_call.1} parent=1 // loop_header_branch
      %20 = sbr.rel (%p18) target = $region8
    $region5: #{tpu_custom_call.1} parent=1 // loop_body
      %s22 = ssub.s32 %s17, 1
      %s23 = ssub.s32 %s17, 2
      %s30 = sadd.s32 1, %s25
      %p31 = scmp.ge.s32.totalorder %s30, 2
      %s32 = scalar_select %p31, 0, %s30
      %s33 = sadd.s32 1, %s24
      %s34 = scalar_select %p31, %s33, %s24
      %p35 = scmp.ge.s32.totalorder %s34, 2
      %s36 = scalar_select %p35, 0, %s34
      %s37 = ssub.s32 %s24, %s36
      %s38 = ssub.s32 %s25, %s32
      %s39 = sor.u32 %s37, %s38
      %p40 = scmp.eq.s32.totalorder %s39, 0
      %s42 = sadd.s32 %s41, 1
      %s43 = scalar_select %p40, %s41, %s42
      %p46 = pneg %p40
      %p47 = scmp.eq.s32.totalorder %s17, 3
      %p48 = por %p46, %p47
      %p49 = scmp.ne.s32.totalorder %s41, %s44
      %p50 = scmp.eq.s32.totalorder %s17, 0
      %p51 = por %p49, %p50
      %p52 = scmp.ne.s32.totalorder %s41, %s44
      %p53 = scmp.eq.s32.totalorder %s22, 3
      %p54 = por %p52, %p53
      %p55 = scmp.ne.s32.totalorder %s44, %s45
      %p56 = scmp.eq.s32.totalorder %s22, 0
      %p57 = por %p55, %p56
      %p58 = scmp.ne.s32.totalorder %s44, %s45
      %p59 = scmp.eq.s32.totalorder %s23, 3
      %p60 = por %p58, %p59
      %p62 = scmp.ne.s32.totalorder %s45, %s61
      %p63 = scmp.eq.s32.totalorder %s23, 0
      %p64 = por %p62, %p63
      %s65 = smul.u32 %s24, 2
      %s66 = sadd.s32 %s65, %s25
      %s67 = smul.u32 %s36, 2
      %s68 = sadd.s32 %s67, %s32
      %s69 = ssub.s32 %s66, %s68
      %p70 = scmp.eq.s32.totalorder %s69, 0
      %s72 = sadd.s32 %s71, 1
      %s73 = scalar_select %p70, %s71, %s72
      %p76 = pneg %p70
      %p77 = scmp.eq.s32.totalorder %s17, 3
      %p78 = por %p76, %p77
      %p79 = scmp.ne.s32.totalorder %s71, %s74
      %p80 = scmp.eq.s32.totalorder %s17, 0
      %p81 = por %p79, %p80
      %p82 = scmp.ne.s32.totalorder %s71, %s74
      %p83 = scmp.eq.s32.totalorder %s22, 3
      %p84 = por %p82, %p83
      %p85 = scmp.ne.s32.totalorder %s74, %s75
      %p86 = scmp.eq.s32.totalorder %s22, 0
      %p87 = por %p85, %p86
      %p88 = scmp.ne.s32.totalorder %s74, %s75
      %p89 = scmp.eq.s32.totalorder %s23, 3
      %p90 = por %p88, %p89
      %p92 = scmp.ne.s32.totalorder %s75, %s91
      %p93 = scmp.eq.s32.totalorder %s23, 0
      %p94 = por %p92, %p93
      %s95 = ssub.s32 %s24, %s36
      %p96 = scmp.eq.s32.totalorder %s95, 0
      %s98 = sadd.s32 %s97, 1
      %s99 = scalar_select %p96, %s97, %s98
      %p102 = pneg %p96
      %p103 = scmp.eq.s32.totalorder %s17, 3
      %p104 = por %p102, %p103
      %p105 = scmp.ne.s32.totalorder %s97, %s100
      %p106 = scmp.eq.s32.totalorder %s17, 0
      %p107 = por %p105, %p106
      %p108 = scmp.ne.s32.totalorder %s97, %s100
      %p109 = scmp.eq.s32.totalorder %s22, 3
      %p110 = por %p108, %p109
      %p111 = scmp.ne.s32.totalorder %s100, %s101
      %p112 = scmp.eq.s32.totalorder %s22, 0
      %p113 = por %p111, %p112
      %p114 = scmp.ne.s32.totalorder %s100, %s101
      %p115 = scmp.eq.s32.totalorder %s23, 3
      %p116 = por %p114, %p115
      %p118 = scmp.ne.s32.totalorder %s101, %s117
      %p119 = scmp.eq.s32.totalorder %s23, 0
      %p120 = por %p118, %p119
      %s121 = ssub.s32 %s24, %s36
      %p122 = scmp.eq.s32.totalorder %s121, 0
      %s124 = sadd.s32 %s123, 1
      %s125 = scalar_select %p122, %s123, %s124
      %p128 = pneg %p122
      %p129 = scmp.eq.s32.totalorder %s17, 3
      %p130 = por %p128, %p129
      %p131 = scmp.ne.s32.totalorder %s123, %s126
      %p132 = scmp.eq.s32.totalorder %s17, 0
      %p133 = por %p131, %p132
      %p134 = scmp.ne.s32.totalorder %s123, %s126
      %p135 = scmp.eq.s32.totalorder %s22, 3
      %p136 = por %p134, %p135
      %p137 = scmp.ne.s32.totalorder %s126, %s127
      %p138 = scmp.eq.s32.totalorder %s22, 0
      %p139 = por %p137, %p138
      %p140 = scmp.ne.s32.totalorder %s126, %s127
      %p141 = scmp.eq.s32.totalorder %s23, 3
      %p142 = por %p140, %p141
      %p144 = scmp.ne.s32.totalorder %s127, %s143
      %p145 = scmp.eq.s32.totalorder %s23, 0
      %p146 = por %p144, %p145
      %s148 = sadd.s32 %s147, 1
      %p151 = scmp.eq.s32.totalorder %s17, 3
      %p152 = scmp.ne.s32.totalorder %s147, %s149
      %p153 = scmp.eq.s32.totalorder %s17, 0
      %p154 = por %p152, %p153
      %p155 = scmp.ne.s32.totalorder %s147, %s149
      %p156 = scmp.eq.s32.totalorder %s22, 3
      %p157 = por %p155, %p156
      %p158 = scmp.ne.s32.totalorder %s149, %s150
      %p159 = scmp.eq.s32.totalorder %s22, 0
      %p160 = por %p158, %p159
      %p161 = scmp.ne.s32.totalorder %s149, %s150
      %p162 = scmp.eq.s32.totalorder %s23, 3
      %p163 = por %p161, %p162
      %p165 = scmp.ne.s32.totalorder %s150, %s164
      %p166 = scmp.eq.s32.totalorder %s23, 0
      %p167 = por %p165, %p166
      %s169 = sadd.s32 %s168, 1
      %p172 = scmp.eq.s32.totalorder %s17, 3
      %p173 = scmp.ne.s32.totalorder %s168, %s170
      %p174 = scmp.eq.s32.totalorder %s17, 0
      %p175 = por %p173, %p174
      %p176 = scmp.ne.s32.totalorder %s168, %s170
      %p177 = scmp.eq.s32.totalorder %s22, 3
      %p178 = por %p176, %p177
      %p179 = scmp.ne.s32.totalorder %s170, %s171
      %p180 = scmp.eq.s32.totalorder %s22, 0
      %p181 = por %p179, %p180
      %p182 = scmp.ne.s32.totalorder %s170, %s171
      %p183 = scmp.eq.s32.totalorder %s23, 3
      %p184 = por %p182, %p183
      %p186 = scmp.ne.s32.totalorder %s171, %s185
      %p187 = scmp.eq.s32.totalorder %s23, 0
      %p188 = por %p186, %p187
      %s190 = sadd.s32 %s189, 1
      %p193 = scmp.eq.s32.totalorder %s17, 3
      %p194 = scmp.ne.s32.totalorder %s189, %s191
      %p195 = scmp.eq.s32.totalorder %s17, 0
      %p196 = por %p194, %p195
      %p197 = scmp.ne.s32.totalorder %s189, %s191
      %p198 = scmp.eq.s32.totalorder %s22, 3
      %p199 = por %p197, %p198
      %p200 = scmp.ne.s32.totalorder %s191, %s192
      %p201 = scmp.eq.s32.totalorder %s22, 0
      %p202 = por %p200, %p201
      %p203 = scmp.ne.s32.totalorder %s191, %s192
      %p204 = scmp.eq.s32.totalorder %s23, 3
      %p205 = por %p203, %p204
      %p207 = scmp.ne.s32.totalorder %s192, %s206
      %p208 = scmp.eq.s32.totalorder %s23, 0
      %p209 = por %p207, %p208
      %s211 = sadd.s32 %s210, 1
      %p214 = scmp.eq.s32.totalorder %s17, 3
      %p215 = scmp.ne.s32.totalorder %s210, %s212
      %p216 = scmp.eq.s32.totalorder %s17, 0
      %p217 = por %p215, %p216
      %p218 = scmp.ne.s32.totalorder %s210, %s212
      %p219 = scmp.eq.s32.totalorder %s22, 3
      %p220 = por %p218, %p219
      %p221 = scmp.ne.s32.totalorder %s212, %s213
      %p222 = scmp.eq.s32.totalorder %s22, 0
      %p223 = por %p221, %p222
      %p224 = scmp.ne.s32.totalorder %s212, %s213
      %p225 = scmp.eq.s32.totalorder %s23, 3
      %p226 = por %p224, %p225
      %p228 = scmp.ne.s32.totalorder %s213, %s227
      %p229 = scmp.eq.s32.totalorder %s23, 0
      %p230 = por %p228, %p229
      %s231 = ssub.s32 %s24, %s36
      %s232 = ssub.s32 %s25, %s32
      %s233 = sor.u32 %s231, %s232
      %p234 = scmp.eq.s32.totalorder %s233, 0
      %s236 = sadd.s32 %s235, 1
      %s237 = scalar_select %p234, %s235, %s236
      %p240 = pneg %p234
      %p241 = scmp.eq.s32.totalorder %s17, 3
      %p242 = por %p240, %p241
      %p243 = scmp.ne.s32.totalorder %s235, %s238
      %p244 = scmp.eq.s32.totalorder %s17, 0
      %p245 = por %p243, %p244
      %p246 = scmp.ne.s32.totalorder %s235, %s238
      %p247 = scmp.eq.s32.totalorder %s22, 3
      %p248 = por %p246, %p247
      %p249 = scmp.ne.s32.totalorder %s238, %s239
      %p250 = scmp.eq.s32.totalorder %s22, 0
      %p251 = por %p249, %p250
      %p252 = scmp.ne.s32.totalorder %s238, %s239
      %p253 = scmp.eq.s32.totalorder %s23, 3
      %p254 = por %p252, %p253
      %p256 = scmp.ne.s32.totalorder %s239, %s255
      %p257 = scmp.eq.s32.totalorder %s23, 0
      %p258 = por %p256, %p257
      %p259 = scmp.le.s32.totalorder 1, %s17
      %p260 = scmp.lt.s32.totalorder %s17, 5
      %p261 = pnand %p259, %p260
      %p262 = pneg %p261
      // Predicated region
      $region9: #{tpu_custom_call.1} parent=5 // pred_check
        _
      $region10: #{tpu_custom_call.1} parent=5 // pred_check_branch
        %264 = sbr.rel (%p261) target = $region12
      $region11: #{tpu_custom_call.1} parent=5 // pred_region
        %s265 = ssub.s32 %s17, 1
        // Predicated region
        $region13: #{tpu_custom_call.1} parent=11 // pred_check
          %p266 = pneg %p160
        $region14: #{tpu_custom_call.1} parent=11 // pred_check_branch
          %268 = sbr.rel (%p266) target = $region16
        $region15: #{tpu_custom_call.1} parent=11 // pred_region
          _
        $region16: #{tpu_custom_call.1} parent=11 // pred_fallthru
          _
        // Predicated region
        $region17: #{tpu_custom_call.1} parent=11 // pred_check
          %p269 = pneg %p181
        $region18: #{tpu_custom_call.1} parent=11 // pred_check_branch
          %271 = sbr.rel (%p269) target = $region20
        $region19: #{tpu_custom_call.1} parent=11 // pred_region
          _
        $region20: #{tpu_custom_call.1} parent=11 // pred_fallthru
          _
        // Predicated region
        $region21: #{tpu_custom_call.1} parent=11 // pred_check
          %p272 = pneg %p202
        $region22: #{tpu_custom_call.1} parent=11 // pred_check_branch
          %274 = sbr.rel (%p272) target = $region24
        $region23: #{tpu_custom_call.1} parent=11 // pred_region
          _
        $region24: #{tpu_custom_call.1} parent=11 // pred_fallthru
          _
        // Predicated region
        $region25: #{tpu_custom_call.1} parent=11 // pred_check
          %p275 = pneg %p223
        $region26: #{tpu_custom_call.1} parent=11 // pred_check_branch
          %277 = sbr.rel (%p275) target = $region28
        $region27: #{tpu_custom_call.1} parent=11 // pred_region
          _
        $region28: #{tpu_custom_call.1} parent=11 // pred_fallthru
          _
      $region12: #{tpu_custom_call.1} parent=5 // pred_fallthru
        _
      %p278 = scmp.lt.s32.totalorder %s17, 4
      // Predicated region
      $region29: #{tpu_custom_call.1} parent=5 // pred_check
        %p279 = pneg %p278
      $region30: #{tpu_custom_call.1} parent=5 // pred_check_branch
        %281 = sbr.rel (%p279) target = $region32
      $region31: #{tpu_custom_call.1} parent=5 // pred_region
        // Predicated region
        $region33: #{tpu_custom_call.1} parent=31 // pred_check
          %p282 = pneg %p51
        $region34: #{tpu_custom_call.1} parent=31 // pred_check_branch
          %284 = sbr.rel (%p282) target = $region36
        $region35: #{tpu_custom_call.1} parent=31 // pred_region
          %p285 = scmp.lt.s32.totalorder %s24, 1
          %s286 = scalar_select %p285, %s24, 1
          %p287 = scmp.lt.s32.totalorder %s25, 1
          %s288 = scalar_select %p287, %s25, 1
          %s289 = smul.addr %s286, 2
          %s290 = sadd.s32 %s288, %s289
          %s291 = smul.addr %s290, 8
          %s292 = scalar_lea.vmem %s0, %s291
        $region36: #{tpu_custom_call.1} parent=31 // pred_fallthru
          _
        // Predicated region
        $region37: #{tpu_custom_call.1} parent=31 // pred_check
          %p293 = pneg %p81
        $region38: #{tpu_custom_call.1} parent=31 // pred_check_branch
          %295 = sbr.rel (%p293) target = $region40
        $region39: #{tpu_custom_call.1} parent=31 // pred_region
          %s296 = smul.u32 %s24, 2
          %s297 = sadd.s32 %s296, %s25
          %p298 = scmp.lt.s32.totalorder %s297, 3
          %s299 = scalar_select %p298, %s297, 3
          %s300 = smul.addr %s299, 36
          %s301 = smul.addr %s300, 4
          %s302 = scalar_lea.vmem %s1, %s301
          %s303 = smul.u32 %s24, 2
          %s304 = sadd.s32 %s303, %s25
        $region40: #{tpu_custom_call.1} parent=31 // pred_fallthru
          _
        // Predicated region
        $region41: #{tpu_custom_call.1} parent=31 // pred_check
          %p305 = pneg %p107
        $region42: #{tpu_custom_call.1} parent=31 // pred_check_branch
          %307 = sbr.rel (%p305) target = $region44
        $region43: #{tpu_custom_call.1} parent=31 // pred_region
          %p308 = scmp.lt.s32.totalorder %s24, 1
          %s309 = scalar_select %p308, %s24, 1
          %s310 = smul.addr %s309, 8
          %s311 = scalar_lea.vmem %s2, %s310
        $region44: #{tpu_custom_call.1} parent=31 // pred_fallthru
          _
        // Predicated region
        $region45: #{tpu_custom_call.1} parent=31 // pred_check
          %p312 = pneg %p133
        $region46: #{tpu_custom_call.1} parent=31 // pred_check_branch
          %314 = sbr.rel (%p312) target = $region48
        $region47: #{tpu_custom_call.1} parent=31 // pred_region
          %p315 = scmp.lt.s32.totalorder %s24, 1
          %s316 = scalar_select %p315, %s24, 1
          %s317 = smul.addr %s316, 8
          %s318 = scalar_lea.vmem %s3, %s317
        $region48: #{tpu_custom_call.1} parent=31 // pred_fallthru
          _
      $region32: #{tpu_custom_call.1} parent=5 // pred_fallthru
        _
      %p319 = scmp.le.s32.totalorder 1, %s17
      %p320 = scmp.lt.s32.totalorder %s17, 5
      %p321 = pnand %p319, %p320
      %p322 = pneg %p321
      // Predicated region
      $region49: #{tpu_custom_call.1} parent=5 // pred_check
        _
      $region50: #{tpu_custom_call.1} parent=5 // pred_check_branch
        %324 = sbr.rel (%p321) target = $region52
      $region51: #{tpu_custom_call.1} parent=5 // pred_region
        %s325 = ssub.s32 %s17, 1
        %p326 = scmp.lt.s32.totalorder %s26, 1
        %s327 = scalar_select %p326, %s26, 1
        %p328 = scmp.lt.s32.totalorder %s27, 1
        %s329 = scalar_select %p328, %s27, 1
        %s330 = smul.addr %s327, 2
        %s331 = sadd.s32 %s329, %s330
        %s332 = smul.addr %s331, 8
        %s333 = scalar_lea.vmem %s0, %s332
        %p334 = pneg %p57
        %p335 = pneg %p54
        %s336 = smul.u32 %s26, 2
        %s337 = sadd.s32 %s336, %s27
        %p338 = scmp.lt.s32.totalorder %s337, 3
        %s339 = scalar_select %p338, %s337, 3
        %s340 = smul.addr %s339, 36
        %s341 = smul.addr %s340, 4
        %s342 = scalar_lea.vmem %s1, %s341
        %p343 = pneg %p87
        %p344 = pneg %p84
        %p345 = scmp.lt.s32.totalorder %s26, 1
        %s346 = scalar_select %p345, %s26, 1
        %s347 = smul.addr %s346, 8
        %s348 = scalar_lea.vmem %s2, %s347
        %p349 = pneg %p113
        %p350 = pneg %p110
        %p351 = scmp.lt.s32.totalorder %s26, 1
        %s352 = scalar_select %p351, %s26, 1
        %s353 = smul.addr %s352, 8
        %s354 = scalar_lea.vmem %s3, %s353
        %p355 = pneg %p139
        %p356 = pneg %p136
        %p357 = pneg %p160
        %p358 = pneg %p157
        %p359 = pneg %p181
        %p360 = pneg %p178
        %p361 = pneg %p202
        %p362 = pneg %p199
        %p363 = pneg %p223
        %p364 = pneg %p220
        %p365 = pneg %p251
        %p366 = pneg %p248
        %s367 = sand.u32 %s238, 1
        %s368 = scalar_lea.sflag [#allocation4], %s367
        %s369 = sand.u32 %s238, 1
        %s370 = smul.addr %s369, 8
        %s371 = scalar_lea.vmem [#allocation3], %s370
        %p372 = scmp.lt.s32.totalorder %s26, 1
        %s373 = scalar_select %p372, %s26, 1
        %p374 = scmp.lt.s32.totalorder %s27, 1
        %s375 = scalar_select %p374, %s27, 1
        %s376 = smul.addr %s373, 2
        %s377 = sadd.s32 %s375, %s376
        %s378 = smul.addr %s377, 8
        %s379 = scalar_lea.vmem %s0, %s378
        %s380 = smul.u32 %s26, 2
        %s381 = sadd.s32 %s380, %s27
        %p382 = scmp.lt.s32.totalorder %s381, 3
        %s383 = scalar_select %p382, %s381, 3
        %s384 = smul.addr %s383, 36
        %s385 = smul.addr %s384, 4
        %s386 = scalar_lea.vmem %s1, %s385
        %s387 = smul.u32 %s26, 2
        %s388 = sadd.s32 %s387, %s27
        %p389 = scmp.lt.s32.totalorder %s26, 1
        %s390 = scalar_select %p389, %s26, 1
        %s391 = smul.addr %s390, 8
        %s392 = scalar_lea.vmem %s2, %s391
        %p393 = scmp.lt.s32.totalorder %s26, 1
        %s394 = scalar_select %p393, %s26, 1
        %s395 = smul.addr %s394, 8
        %s396 = scalar_lea.vmem %s3, %s395
        %v398 = vld [vmem:[%s386] sm:$0xf]
        %v399 = vld [vmem:[%s386 + $0x4] sm:$0xf]
        %v400 = vld [vmem:[%s386 + $0x8] sm:$0x1]
        %v401 = vld [vmem:[%s386 + $0xc] sm:$0xf]
        %v402 = vld [vmem:[%s386 + $0x10] sm:$0xf]
        %v403 = vld [vmem:[%s386 + $0x14] sm:$0x1]
        %v404 = vld [vmem:[%s386 + $0x18] sm:$0xf]
        %v405 = vld [vmem:[%s386 + $0x1c] sm:$0xf]
        %v406 = vld [vmem:[%s386 + $0x20] sm:$0x1]
        %v407 = vld [vmem:[%s386 + $0x24] sm:$0xf]
        %v408 = vld [vmem:[%s386 + $0x28] sm:$0xf]
        %v409 = vld [vmem:[%s386 + $0x2c] sm:$0x1]
        %v410 = vld [vmem:[%s386 + $0x30] sm:$0xf]
        %v411 = vld [vmem:[%s386 + $0x34] sm:$0xf]
        %v412 = vld [vmem:[%s386 + $0x38] sm:$0x1]
        %v413 = vld [vmem:[%s386 + $0x3c] sm:$0xf]
        %v414 = vld [vmem:[%s386 + $0x40] sm:$0xf]
        %v415 = vld [vmem:[%s386 + $0x44] sm:$0x1]
        %v416 = vld [vmem:[%s386 + $0x48] sm:$0xf]
        %v417 = vld [vmem:[%s386 + $0x4c] sm:$0xf]
        %v418 = vld [vmem:[%s386 + $0x50] sm:$0x1]
        %v419 = vld [vmem:[%s386 + $0x54] sm:$0xf]
        %v420 = vld [vmem:[%s386 + $0x58] sm:$0xf]
        %v421 = vld [vmem:[%s386 + $0x5c] sm:$0x1]
        %v422 = vld [vmem:[%s386 + $0x60] sm:$0xf]
        %v423 = vld [vmem:[%s386 + $0x64] sm:$0xf]
        %v424 = vld [vmem:[%s386 + $0x68] sm:$0x1]
        %v425 = vld [vmem:[%s386 + $0x6c] sm:$0xf]
        %v426 = vld [vmem:[%s386 + $0x70] sm:$0xf]
        %v427 = vld [vmem:[%s386 + $0x74] sm:$0x1]
        %v428 = vld [vmem:[%s386 + $0x78] sm:$0xf]
        %v429 = vld [vmem:[%s386 + $0x7c] sm:$0xf]
        %v430 = vld [vmem:[%s386 + $0x80] sm:$0x1]
        %v431 = vld [vmem:[%s386 + $0x84] sm:$0xf]
        %v432 = vld [vmem:[%s386 + $0x88] sm:$0xf]
        %v433 = vld [vmem:[%s386 + $0x8c] sm:$0x1]
        %vm434 = vsmask.f32 3328
        %vm435 = vsmask.f32 7440
        %vm436 = vmor %vm434, %vm435
        %v438 = vshrl.u32 %v398, 16
        %v440 = vrot.slane %v438, 4
        %v441 = vshll.u32 %v398, 16
        %v443 = vrot.slane %v441, 5
        %v444 = vor.u32 %v440, %v443
        %v445 = vrot.slane %v444, 4
        %v447 = vshll.u32 %v399, 16
        %v449 = vrot.slane %v447, 5
        %v450 = vsel %vm436, %v445, %v449
        %v451 = vshrl.u32 %v399, 16
        %v453 = vrot.slane %v451, 4
        %v454 = vor.u32 %v453, %v449
        %v455 = vrot.slane %v454, 4
        %v457 = vshll.u32 %v400, 16
        %v459 = vrot.slane %v457, 5
        %v460 = vsel %vm436, %v455, %v459
        %v462 = vshrl.u32 %v401, 16
        %v464 = vrot.slane %v462, 4
        %v465 = vshll.u32 %v401, 16
        %v467 = vrot.slane %v465, 5
        %v468 = vor.u32 %v464, %v467
        %v469 = vrot.slane %v468, 4
        %v471 = vshll.u32 %v402, 16
        %v473 = vrot.slane %v471, 5
        %v474 = vsel %vm436, %v469, %v473
        %v475 = vshrl.u32 %v402, 16
        %v477 = vrot.slane %v475, 4
        %v478 = vor.u32 %v477, %v473
        %v479 = vrot.slane %v478, 4
        %v481 = vshll.u32 %v403, 16
        %v483 = vrot.slane %v481, 5
        %v484 = vsel %vm436, %v479, %v483
        %v486 = vshrl.u32 %v404, 16
        %v488 = vrot.slane %v486, 4
        %v489 = vshll.u32 %v404, 16
        %v491 = vrot.slane %v489, 5
        %v492 = vor.u32 %v488, %v491
        %v493 = vrot.slane %v492, 4
        %v495 = vshll.u32 %v405, 16
        %v497 = vrot.slane %v495, 5
        %v498 = vsel %vm436, %v493, %v497
        %v499 = vshrl.u32 %v405, 16
        %v501 = vrot.slane %v499, 4
        %v502 = vor.u32 %v501, %v497
        %v503 = vrot.slane %v502, 4
        %v505 = vshll.u32 %v406, 16
        %v507 = vrot.slane %v505, 5
        %v508 = vsel %vm436, %v503, %v507
        %v510 = vshrl.u32 %v407, 16
        %v512 = vrot.slane %v510, 4
        %v513 = vshll.u32 %v407, 16
        %v515 = vrot.slane %v513, 5
        %v516 = vor.u32 %v512, %v515
        %v517 = vrot.slane %v516, 4
        %v519 = vshll.u32 %v408, 16
        %v521 = vrot.slane %v519, 5
        %v522 = vsel %vm436, %v517, %v521
        %v523 = vshrl.u32 %v408, 16
        %v525 = vrot.slane %v523, 4
        %v526 = vor.u32 %v525, %v521
        %v527 = vrot.slane %v526, 4
        %v529 = vshll.u32 %v409, 16
        %v531 = vrot.slane %v529, 5
        %v532 = vsel %vm436, %v527, %v531
        %v534 = vshrl.u32 %v410, 16
        %v536 = vrot.slane %v534, 4
        %v537 = vshll.u32 %v410, 16
        %v539 = vrot.slane %v537, 5
        %v540 = vor.u32 %v536, %v539
        %v541 = vrot.slane %v540, 4
        %v543 = vshll.u32 %v411, 16
        %v545 = vrot.slane %v543, 5
        %v546 = vsel %vm436, %v541, %v545
        %v547 = vshrl.u32 %v411, 16
        %v549 = vrot.slane %v547, 4
        %v550 = vor.u32 %v549, %v545
        %v551 = vrot.slane %v550, 4
        %v553 = vshll.u32 %v412, 16
        %v555 = vrot.slane %v553, 5
        %v556 = vsel %vm436, %v551, %v555
        %v558 = vshrl.u32 %v413, 16
        %v560 = vrot.slane %v558, 4
        %v561 = vshll.u32 %v413, 16
        %v563 = vrot.slane %v561, 5
        %v564 = vor.u32 %v560, %v563
        %v565 = vrot.slane %v564, 4
        %v567 = vshll.u32 %v414, 16
        %v569 = vrot.slane %v567, 5
        %v570 = vsel %vm436, %v565, %v569
        %v571 = vshrl.u32 %v414, 16
        %v573 = vrot.slane %v571, 4
        %v574 = vor.u32 %v573, %v569
        %v575 = vrot.slane %v574, 4
        %v577 = vshll.u32 %v415, 16
        %v579 = vrot.slane %v577, 5
        %v580 = vsel %vm436, %v575, %v579
        %v582 = vshrl.u32 %v416, 16
        %v584 = vrot.slane %v582, 4
        %v585 = vshll.u32 %v416, 16
        %v587 = vrot.slane %v585, 5
        %v588 = vor.u32 %v584, %v587
        %v589 = vrot.slane %v588, 4
        %v591 = vshll.u32 %v417, 16
        %v593 = vrot.slane %v591, 5
        %v594 = vsel %vm436, %v589, %v593
        %v595 = vshrl.u32 %v417, 16
        %v597 = vrot.slane %v595, 4
        %v598 = vor.u32 %v597, %v593
        %v599 = vrot.slane %v598, 4
        %v601 = vshll.u32 %v418, 16
        %v603 = vrot.slane %v601, 5
        %v604 = vsel %vm436, %v599, %v603
        %v606 = vshrl.u32 %v419, 16
        %v608 = vrot.slane %v606, 4
        %v609 = vshll.u32 %v419, 16
        %v611 = vrot.slane %v609, 5
        %v612 = vor.u32 %v608, %v611
        %v613 = vrot.slane %v612, 4
        %v615 = vshll.u32 %v420, 16
        %v617 = vrot.slane %v615, 5
        %v618 = vsel %vm436, %v613, %v617
        %v619 = vshrl.u32 %v420, 16
        %v621 = vrot.slane %v619, 4
        %v622 = vor.u32 %v621, %v617
        %v623 = vrot.slane %v622, 4
        %v625 = vshll.u32 %v421, 16
        %v627 = vrot.slane %v625, 5
        %v628 = vsel %vm436, %v623, %v627
        %v630 = vshrl.u32 %v422, 16
        %v632 = vrot.slane %v630, 4
        %v633 = vshll.u32 %v422, 16
        %v635 = vrot.slane %v633, 5
        %v636 = vor.u32 %v632, %v635
        %v637 = vrot.slane %v636, 4
        %v639 = vshll.u32 %v423, 16
        %v641 = vrot.slane %v639, 5
        %v642 = vsel %vm436, %v637, %v641
        %v643 = vshrl.u32 %v423, 16
        %v645 = vrot.slane %v643, 4
        %v646 = vor.u32 %v645, %v641
        %v647 = vrot.slane %v646, 4
        %v649 = vshll.u32 %v424, 16
        %v651 = vrot.slane %v649, 5
        %v652 = vsel %vm436, %v647, %v651
        %v654 = vshrl.u32 %v425, 16
        %v656 = vrot.slane %v654, 4
        %v657 = vshll.u32 %v425, 16
        %v659 = vrot.slane %v657, 5
        %v660 = vor.u32 %v656, %v659
        %v661 = vrot.slane %v660, 4
        %v663 = vshll.u32 %v426, 16
        %v665 = vrot.slane %v663, 5
        %v666 = vsel %vm436, %v661, %v665
        %v667 = vshrl.u32 %v426, 16
        %v669 = vrot.slane %v667, 4
        %v670 = vor.u32 %v669, %v665
        %v671 = vrot.slane %v670, 4
        %v673 = vshll.u32 %v427, 16
        %v675 = vrot.slane %v673, 5
        %v676 = vsel %vm436, %v671, %v675
        %vm707 = vcmask 1042432
        %vm708 = vcmask 1046532
        %vm709 = vmor %vm707, %vm708
        %v710 = vrot.slane %v398, 5
        %v711 = vrot.slane %v710, 4
        %v712 = vrot.slane %v399, 5
        %v713 = vsel %vm709, %v711, %v712
        %v714 = vrot.slane %v712, 4
        %v715 = vrot.slane %v400, 5
        %v716 = vsel %vm709, %v714, %v715
        %v717 = vrot.slane %v401, 5
        %v718 = vrot.slane %v717, 4
        %v719 = vrot.slane %v402, 5
        %v720 = vsel %vm709, %v718, %v719
        %v721 = vrot.slane %v719, 4
        %v722 = vrot.slane %v403, 5
        %v723 = vsel %vm709, %v721, %v722
        %v724 = vrot.slane %v404, 5
        %v725 = vrot.slane %v724, 4
        %v726 = vrot.slane %v405, 5
        %v727 = vsel %vm709, %v725, %v726
        %v728 = vrot.slane %v726, 4
        %v729 = vrot.slane %v406, 5
        %v730 = vsel %vm709, %v728, %v729
        %v731 = vrot.slane %v407, 5
        %v732 = vrot.slane %v731, 4
        %v733 = vrot.slane %v408, 5
        %v734 = vsel %vm709, %v732, %v733
        %v735 = vrot.slane %v733, 4
        %v736 = vrot.slane %v409, 5
        %v737 = vsel %vm709, %v735, %v736
        %v738 = vrot.slane %v410, 5
        %v739 = vrot.slane %v738, 4
        %v740 = vrot.slane %v411, 5
        %v741 = vsel %vm709, %v739, %v740
        %v742 = vrot.slane %v740, 4
        %v743 = vrot.slane %v412, 5
        %v744 = vsel %vm709, %v742, %v743
        %v745 = vrot.slane %v413, 5
        %v746 = vrot.slane %v745, 4
        %v747 = vrot.slane %v414, 5
        %v748 = vsel %vm709, %v746, %v747
        %v749 = vrot.slane %v747, 4
        %v750 = vrot.slane %v415, 5
        %v751 = vsel %vm709, %v749, %v750
        %v752 = vrot.slane %v416, 5
        %v753 = vrot.slane %v752, 4
        %v754 = vrot.slane %v417, 5
        %v755 = vsel %vm709, %v753, %v754
        %v756 = vrot.slane %v754, 4
        %v757 = vrot.slane %v418, 5
        %v758 = vsel %vm709, %v756, %v757
        %v759 = vrot.slane %v419, 5
        %v760 = vrot.slane %v759, 4
        %v761 = vrot.slane %v420, 5
        %v762 = vsel %vm709, %v760, %v761
        %v763 = vrot.slane %v761, 4
        %v764 = vrot.slane %v421, 5
        %v765 = vsel %vm709, %v763, %v764
        %v766 = vrot.slane %v422, 5
        %v767 = vrot.slane %v766, 4
        %v768 = vrot.slane %v423, 5
        %v769 = vsel %vm709, %v767, %v768
        %v770 = vrot.slane %v768, 4
        %v771 = vrot.slane %v424, 5
        %v772 = vsel %vm709, %v770, %v771
        %v773 = vrot.slane %v425, 5
        %v774 = vrot.slane %v773, 4
        %v775 = vrot.slane %v426, 5
        %v776 = vsel %vm709, %v774, %v775
        %v777 = vrot.slane %v775, 4
        %v778 = vrot.slane %v427, 5
        %v779 = vsel %vm709, %v777, %v778
        %v781 = vshrl.u32 %v428, 16
        %v783 = vrot.slane %v781, 4
        %v784 = vshll.u32 %v428, 16
        %v786 = vrot.slane %v784, 5
        %v787 = vor.u32 %v783, %v786
        %v788 = vrot.slane %v787, 4
        %v790 = vshll.u32 %v429, 16
        %v792 = vrot.slane %v790, 5
        %v793 = vsel %vm436, %v788, %v792
        %v794 = vshrl.u32 %v429, 16
        %v796 = vrot.slane %v794, 4
        %v797 = vor.u32 %v796, %v792
        %v798 = vrot.slane %v797, 4
        %v800 = vshll.u32 %v430, 16
        %v802 = vrot.slane %v800, 5
        %v803 = vsel %vm436, %v798, %v802
        %v807 = vrot.slane %v428, 5
        %v808 = vrot.slane %v807, 4
        %v809 = vrot.slane %v429, 5
        %v810 = vsel %vm709, %v808, %v809
        %v811 = vrot.slane %v809, 4
        %v812 = vrot.slane %v430, 5
        %v813 = vsel %vm709, %v811, %v812
        %v815 = vshrl.u32 %v431, 16
        %v817 = vrot.slane %v815, 4
        %v818 = vshll.u32 %v431, 16
        %v820 = vrot.slane %v818, 5
        %v821 = vor.u32 %v817, %v820
        %v822 = vrot.slane %v821, 4
        %v824 = vshll.u32 %v432, 16
        %v826 = vrot.slane %v824, 5
        %v827 = vsel %vm436, %v822, %v826
        %v828 = vshrl.u32 %v432, 16
        %v830 = vrot.slane %v828, 4
        %v831 = vor.u32 %v830, %v826
        %v832 = vrot.slane %v831, 4
        %v834 = vshll.u32 %v433, 16
        %v836 = vrot.slane %v834, 5
        %v837 = vsel %vm436, %v832, %v836
        %v841 = vrot.slane %v431, 5
        %v842 = vrot.slane %v841, 4
        %v843 = vrot.slane %v432, 5
        %v844 = vsel %vm709, %v842, %v843
        %v845 = vrot.slane %v843, 4
        %v846 = vrot.slane %v433, 5
        %v847 = vsel %vm709, %v845, %v846
        %v848 = vunpack.c.l.b16 %v398
        %v849 = vunpack.c.l.b16 %v399
        %v850 = vunpack.c.l.b16 %v401
        %v851 = vunpack.c.l.b16 %v402
        %v852 = vunpack.c.l.b16 %v404
        %v853 = vunpack.c.l.b16 %v405
        %v854 = vunpack.c.l.b16 %v407
        %v855 = vunpack.c.l.b16 %v408
        %v856 = vunpack.c.l.b16 %v410
        %v857 = vunpack.c.l.b16 %v411
        %v858 = vunpack.c.l.b16 %v413
        %v859 = vunpack.c.l.b16 %v414
        %v860 = vunpack.c.l.b16 %v416
        %v861 = vunpack.c.l.b16 %v417
        %v862 = vunpack.c.l.b16 %v419
        %v863 = vunpack.c.l.b16 %v420
        %v864 = vunpack.c.l.b16 %v422
        %v865 = vunpack.c.l.b16 %v423
        %v866 = vunpack.c.l.b16 %v425
        %v867 = vunpack.c.l.b16 %v426
        %v868 = vpack.c.b16 %v849, %v848
        %v869 = vpack.c.b16 %v851, %v850
        %v870 = vpack.c.b16 %v853, %v852
        %v871 = vpack.c.b16 %v855, %v854
        %v872 = vpack.c.b16 %v857, %v856
        %v873 = vpack.c.b16 %v859, %v858
        %v874 = vpack.c.b16 %v861, %v860
        %v875 = vpack.c.b16 %v863, %v862
        %v876 = vpack.c.b16 %v865, %v864
        %v877 = vpack.c.b16 %v867, %v866
        %v878 = vunpack.c.l.b16 %v450
        %v879 = vunpack.c.l.b16 %v460
        %v880 = vunpack.c.l.b16 %v474
        %v881 = vunpack.c.l.b16 %v484
        %v882 = vunpack.c.l.b16 %v498
        %v883 = vunpack.c.l.b16 %v508
        %v884 = vunpack.c.l.b16 %v522
        %v885 = vunpack.c.l.b16 %v532
        %v886 = vunpack.c.l.b16 %v546
        %v887 = vunpack.c.l.b16 %v556
        %v888 = vunpack.c.l.b16 %v570
        %v889 = vunpack.c.l.b16 %v580
        %v890 = vunpack.c.l.b16 %v594
        %v891 = vunpack.c.l.b16 %v604
        %v892 = vunpack.c.l.b16 %v618
        %v893 = vunpack.c.l.b16 %v628
        %v894 = vunpack.c.l.b16 %v642
        %v895 = vunpack.c.l.b16 %v652
        %v896 = vunpack.c.l.b16 %v666
        %v897 = vunpack.c.l.b16 %v676
        %v898 = vpack.c.b16 %v879, %v878
        %v899 = vpack.c.b16 %v881, %v880
        %v900 = vpack.c.b16 %v883, %v882
        %v901 = vpack.c.b16 %v885, %v884
        %v902 = vpack.c.b16 %v887, %v886
        %v903 = vpack.c.b16 %v889, %v888
        %v904 = vpack.c.b16 %v891, %v890
        %v905 = vpack.c.b16 %v893, %v892
        %v906 = vpack.c.b16 %v895, %v894
        %v907 = vpack.c.b16 %v897, %v896
        %908 = vrot.lane.b32.xlu0 %v898, 4
        %v909 = vpop.permute.xlu0 %908
        %910 = vrot.lane.b32.xlu0 %v899, 4
        %v911 = vpop.permute.xlu0 %910
        %912 = vrot.lane.b32.xlu0 %v900, 4
        %v913 = vpop.permute.xlu0 %912
        %914 = vrot.lane.b32.xlu0 %v901, 4
        %v915 = vpop.permute.xlu0 %914
        %916 = vrot.lane.b32.xlu0 %v902, 4
        %v917 = vpop.permute.xlu0 %916
        %918 = vrot.lane.b32.xlu0 %v903, 4
        %v919 = vpop.permute.xlu0 %918
        %920 = vrot.lane.b32.xlu0 %v904, 4
        %v921 = vpop.permute.xlu0 %920
        %922 = vrot.lane.b32.xlu0 %v905, 4
        %v923 = vpop.permute.xlu0 %922
        %924 = vrot.lane.b32.xlu0 %v906, 4
        %v925 = vpop.permute.xlu0 %924
        %926 = vrot.lane.b32.xlu0 %v907, 4
        %v927 = vpop.permute.xlu0 %926
        %v928 = vunpack.c.l.b16 %v713
        %v929 = vunpack.c.l.b16 %v716
        %v930 = vunpack.c.l.b16 %v720
        %v931 = vunpack.c.l.b16 %v723
        %v932 = vunpack.c.l.b16 %v727
        %v933 = vunpack.c.l.b16 %v730
        %v934 = vunpack.c.l.b16 %v734
        %v935 = vunpack.c.l.b16 %v737
        %v936 = vunpack.c.l.b16 %v741
        %v937 = vunpack.c.l.b16 %v744
        %v938 = vunpack.c.l.b16 %v748
        %v939 = vunpack.c.l.b16 %v751
        %v940 = vunpack.c.l.b16 %v755
        %v941 = vunpack.c.l.b16 %v758
        %v942 = vunpack.c.l.b16 %v762
        %v943 = vunpack.c.l.b16 %v765
        %v944 = vunpack.c.l.b16 %v769
        %v945 = vunpack.c.l.b16 %v772
        %v946 = vunpack.c.l.b16 %v776
        %v947 = vunpack.c.l.b16 %v779
        %v948 = vpack.c.b16 %v929, %v928
        %v949 = vpack.c.b16 %v931, %v930
        %v950 = vpack.c.b16 %v933, %v932
        %v951 = vpack.c.b16 %v935, %v934
        %v952 = vpack.c.b16 %v937, %v936
        %v953 = vpack.c.b16 %v939, %v938
        %v954 = vpack.c.b16 %v941, %v940
        %v955 = vpack.c.b16 %v943, %v942
        %v956 = vpack.c.b16 %v945, %v944
        %v957 = vpack.c.b16 %v947, %v946
        %958 = vrot.lane.b32.xlu0 %v948, 8
        %v959 = vpop.permute.xlu0 %958
        %960 = vrot.lane.b32.xlu0 %v949, 8
        %v961 = vpop.permute.xlu0 %960
        %962 = vrot.lane.b32.xlu0 %v950, 8
        %v963 = vpop.permute.xlu0 %962
        %964 = vrot.lane.b32.xlu0 %v951, 8
        %v965 = vpop.permute.xlu0 %964
        %966 = vrot.lane.b32.xlu0 %v952, 8
        %v967 = vpop.permute.xlu0 %966
        %968 = vrot.lane.b32.xlu0 %v953, 8
        %v969 = vpop.permute.xlu0 %968
        %970 = vrot.lane.b32.xlu0 %v954, 8
        %v971 = vpop.permute.xlu0 %970
        %972 = vrot.lane.b32.xlu0 %v955, 8
        %v973 = vpop.permute.xlu0 %972
        %974 = vrot.lane.b32.xlu0 %v956, 8
        %v975 = vpop.permute.xlu0 %974
        %976 = vrot.lane.b32.xlu0 %v957, 8
        %v977 = vpop.permute.xlu0 %976
        %v978 = vunpack.c.l.b16 %v428
        %v979 = vunpack.c.l.b16 %v429
        %v980 = vpack.c.b16 %v979, %v978
        %981 = vrot.lane.b32.xlu0 %v869, 12
        %v982 = vpop.permute.xlu0 %981
        %983 = vrot.lane.b32.xlu0 %v870, 12
        %v984 = vpop.permute.xlu0 %983
        %985 = vrot.lane.b32.xlu0 %v871, 12
        %v986 = vpop.permute.xlu0 %985
        %987 = vrot.lane.b32.xlu0 %v872, 12
        %v988 = vpop.permute.xlu0 %987
        %989 = vrot.lane.b32.xlu0 %v873, 12
        %v990 = vpop.permute.xlu0 %989
        %991 = vrot.lane.b32.xlu0 %v874, 12
        %v992 = vpop.permute.xlu0 %991
        %993 = vrot.lane.b32.xlu0 %v875, 12
        %v994 = vpop.permute.xlu0 %993
        %995 = vrot.lane.b32.xlu0 %v876, 12
        %v996 = vpop.permute.xlu0 %995
        %997 = vrot.lane.b32.xlu0 %v877, 12
        %v998 = vpop.permute.xlu0 %997
        %999 = vrot.lane.b32.xlu0 %v980, 12
        %v1000 = vpop.permute.xlu0 %999
        %v1001 = vunpack.c.l.b16 %v793
        %v1002 = vunpack.c.l.b16 %v803
        %v1003 = vpack.c.b16 %v1002, %v1001
        %1004 = vrot.lane.b32.xlu0 %v899, 16
        %v1005 = vpop.permute.xlu0 %1004
        %1006 = vrot.lane.b32.xlu0 %v900, 16
        %v1007 = vpop.permute.xlu0 %1006
        %1008 = vrot.lane.b32.xlu0 %v901, 16
        %v1009 = vpop.permute.xlu0 %1008
        %1010 = vrot.lane.b32.xlu0 %v902, 16
        %v1011 = vpop.permute.xlu0 %1010
        %1012 = vrot.lane.b32.xlu0 %v903, 16
        %v1013 = vpop.permute.xlu0 %1012
        %1014 = vrot.lane.b32.xlu0 %v904, 16
        %v1015 = vpop.permute.xlu0 %1014
        %1016 = vrot.lane.b32.xlu0 %v905, 16
        %v1017 = vpop.permute.xlu0 %1016
        %1018 = vrot.lane.b32.xlu0 %v906, 16
        %v1019 = vpop.permute.xlu0 %1018
        %1020 = vrot.lane.b32.xlu0 %v907, 16
        %v1021 = vpop.permute.xlu0 %1020
        %1022 = vrot.lane.b32.xlu0 %v1003, 16
        %v1023 = vpop.permute.xlu0 %1022
        %v1024 = vunpack.c.l.b16 %v810
        %v1025 = vunpack.c.l.b16 %v813
        %v1026 = vpack.c.b16 %v1025, %v1024
        %1027 = vrot.lane.b32.xlu0 %v949, 20
        %v1028 = vpop.permute.xlu0 %1027
        %1029 = vrot.lane.b32.xlu0 %v950, 20
        %v1030 = vpop.permute.xlu0 %1029
        %1031 = vrot.lane.b32.xlu0 %v951, 20
        %v1032 = vpop.permute.xlu0 %1031
        %1033 = vrot.lane.b32.xlu0 %v952, 20
        %v1034 = vpop.permute.xlu0 %1033
        %1035 = vrot.lane.b32.xlu0 %v953, 20
        %v1036 = vpop.permute.xlu0 %1035
        %1037 = vrot.lane.b32.xlu0 %v954, 20
        %v1038 = vpop.permute.xlu0 %1037
        %1039 = vrot.lane.b32.xlu0 %v955, 20
        %v1040 = vpop.permute.xlu0 %1039
        %1041 = vrot.lane.b32.xlu0 %v956, 20
        %v1042 = vpop.permute.xlu0 %1041
        %1043 = vrot.lane.b32.xlu0 %v957, 20
        %v1044 = vpop.permute.xlu0 %1043
        %1045 = vrot.lane.b32.xlu0 %v1026, 20
        %v1046 = vpop.permute.xlu0 %1045
        %v1047 = vunpack.c.l.b16 %v431
        %v1048 = vunpack.c.l.b16 %v432
        %v1049 = vpack.c.b16 %v1048, %v1047
        %1050 = vrot.lane.b32.xlu0 %v870, 24
        %v1051 = vpop.permute.xlu0 %1050
        %1052 = vrot.lane.b32.xlu0 %v871, 24
        %v1053 = vpop.permute.xlu0 %1052
        %1054 = vrot.lane.b32.xlu0 %v872, 24
        %v1055 = vpop.permute.xlu0 %1054
        %1056 = vrot.lane.b32.xlu0 %v873, 24
        %v1057 = vpop.permute.xlu0 %1056
        %1058 = vrot.lane.b32.xlu0 %v874, 24
        %v1059 = vpop.permute.xlu0 %1058
        %1060 = vrot.lane.b32.xlu0 %v875, 24
        %v1061 = vpop.permute.xlu0 %1060
        %1062 = vrot.lane.b32.xlu0 %v876, 24
        %v1063 = vpop.permute.xlu0 %1062
        %1064 = vrot.lane.b32.xlu0 %v877, 24
        %v1065 = vpop.permute.xlu0 %1064
        %1066 = vrot.lane.b32.xlu0 %v980, 24
        %v1067 = vpop.permute.xlu0 %1066
        %1068 = vrot.lane.b32.xlu0 %v1049, 24
        %v1069 = vpop.permute.xlu0 %1068
        %v1070 = vunpack.c.l.b16 %v827
        %v1071 = vunpack.c.l.b16 %v837
        %v1072 = vpack.c.b16 %v1071, %v1070
        %1073 = vrot.lane.b32.xlu0 %v900, 28
        %v1074 = vpop.permute.xlu0 %1073
        %1075 = vrot.lane.b32.xlu0 %v901, 28
        %v1076 = vpop.permute.xlu0 %1075
        %1077 = vrot.lane.b32.xlu0 %v902, 28
        %v1078 = vpop.permute.xlu0 %1077
        %1079 = vrot.lane.b32.xlu0 %v903, 28
        %v1080 = vpop.permute.xlu0 %1079
        %1081 = vrot.lane.b32.xlu0 %v904, 28
        %v1082 = vpop.permute.xlu0 %1081
        %1083 = vrot.lane.b32.xlu0 %v905, 28
        %v1084 = vpop.permute.xlu0 %1083
        %1085 = vrot.lane.b32.xlu0 %v906, 28
        %v1086 = vpop.permute.xlu0 %1085
        %1087 = vrot.lane.b32.xlu0 %v907, 28
        %v1088 = vpop.permute.xlu0 %1087
        %1089 = vrot.lane.b32.xlu0 %v1003, 28
        %v1090 = vpop.permute.xlu0 %1089
        %1091 = vrot.lane.b32.xlu0 %v1072, 28
        %v1092 = vpop.permute.xlu0 %1091
        %v1093 = vunpack.c.l.b16 %v844
        %v1094 = vunpack.c.l.b16 %v847
        %v1095 = vpack.c.b16 %v1094, %v1093
        %1096 = vrot.lane.b32.xlu0 %v950, 32
        %v1097 = vpop.permute.xlu0 %1096
        %1098 = vrot.lane.b32.xlu0 %v951, 32
        %v1099 = vpop.permute.xlu0 %1098
        %1100 = vrot.lane.b32.xlu0 %v952, 32
        %v1101 = vpop.permute.xlu0 %1100
        %1102 = vrot.lane.b32.xlu0 %v953, 32
        %v1103 = vpop.permute.xlu0 %1102
        %1104 = vrot.lane.b32.xlu0 %v954, 32
        %v1105 = vpop.permute.xlu0 %1104
        %1106 = vrot.lane.b32.xlu0 %v955, 32
        %v1107 = vpop.permute.xlu0 %1106
        %1108 = vrot.lane.b32.xlu0 %v956, 32
        %v1109 = vpop.permute.xlu0 %1108
        %1110 = vrot.lane.b32.xlu0 %v957, 32
        %v1111 = vpop.permute.xlu0 %1110
        %1112 = vrot.lane.b32.xlu0 %v1026, 32
        %v1113 = vpop.permute.xlu0 %1112
        %1114 = vrot.lane.b32.xlu0 %v1095, 32
        %v1115 = vpop.permute.xlu0 %1114
        %vm1116 = vcmask 31744
        %v1119 = vsel %vm1116, %v868, %v909
        %v1122 = vsel %vm1116, %v869, %v911
        %v1125 = vsel %vm1116, %v870, %v913
        %v1128 = vsel %vm1116, %v871, %v915
        %v1131 = vsel %vm1116, %v872, %v917
        %v1134 = vsel %vm1116, %v873, %v919
        %v1137 = vsel %vm1116, %v874, %v921
        %v1140 = vsel %vm1116, %v875, %v923
        %v1143 = vsel %vm1116, %v876, %v925
        %v1146 = vsel %vm1116, %v877, %v927
        %vm1147 = vcmask 64512
        %v1149 = vsel %vm1147, %v1119, %v959
        %v1151 = vsel %vm1147, %v1122, %v961
        %v1153 = vsel %vm1147, %v1125, %v963
        %v1155 = vsel %vm1147, %v1128, %v965
        %v1157 = vsel %vm1147, %v1131, %v967
        %v1159 = vsel %vm1147, %v1134, %v969
        %v1161 = vsel %vm1147, %v1137, %v971
        %v1163 = vsel %vm1147, %v1140, %v973
        %v1165 = vsel %vm1147, %v1143, %v975
        %v1167 = vsel %vm1147, %v1146, %v977
        %vm1168 = vcmask 97280
        %v1170 = vsel %vm1168, %v1149, %v982
        %v1172 = vsel %vm1168, %v1151, %v984
        %v1174 = vsel %vm1168, %v1153, %v986
        %v1176 = vsel %vm1168, %v1155, %v988
        %v1178 = vsel %vm1168, %v1157, %v990
        %v1180 = vsel %vm1168, %v1159, %v992
        %v1182 = vsel %vm1168, %v1161, %v994
        %v1184 = vsel %vm1168, %v1163, %v996
        %v1186 = vsel %vm1168, %v1165, %v998
        %v1188 = vsel %vm1168, %v1167, %v1000
        %vm1189 = vcmask 130048
        %v1191 = vsel %vm1189, %v1170, %v1005
        %v1193 = vsel %vm1189, %v1172, %v1007
        %v1195 = vsel %vm1189, %v1174, %v1009
        %v1197 = vsel %vm1189, %v1176, %v1011
        %v1199 = vsel %vm1189, %v1178, %v1013
        %v1201 = vsel %vm1189, %v1180, %v1015
        %v1203 = vsel %vm1189, %v1182, %v1017
        %v1205 = vsel %vm1189, %v1184, %v1019
        %v1207 = vsel %vm1189, %v1186, %v1021
        %v1209 = vsel %vm1189, %v1188, %v1023
        %vm1210 = vcmask 162816
        %v1212 = vsel %vm1210, %v1191, %v1028
        %v1214 = vsel %vm1210, %v1193, %v1030
        %v1216 = vsel %vm1210, %v1195, %v1032
        %v1218 = vsel %vm1210, %v1197, %v1034
        %v1220 = vsel %vm1210, %v1199, %v1036
        %v1222 = vsel %vm1210, %v1201, %v1038
        %v1224 = vsel %vm1210, %v1203, %v1040
        %v1226 = vsel %vm1210, %v1205, %v1042
        %v1228 = vsel %vm1210, %v1207, %v1044
        %v1230 = vsel %vm1210, %v1209, %v1046
        %vm1231 = vcmask 195584
        %v1233 = vsel %vm1231, %v1212, %v1051
        %v1235 = vsel %vm1231, %v1214, %v1053
        %v1237 = vsel %vm1231, %v1216, %v1055
        %v1239 = vsel %vm1231, %v1218, %v1057
        %v1241 = vsel %vm1231, %v1220, %v1059
        %v1243 = vsel %vm1231, %v1222, %v1061
        %v1245 = vsel %vm1231, %v1224, %v1063
        %v1247 = vsel %vm1231, %v1226, %v1065
        %v1249 = vsel %vm1231, %v1228, %v1067
        %v1251 = vsel %vm1231, %v1230, %v1069
        %vm1252 = vcmask 228352
        %v1254 = vsel %vm1252, %v1233, %v1074
        %v1256 = vsel %vm1252, %v1235, %v1076
        %v1258 = vsel %vm1252, %v1237, %v1078
        %v1260 = vsel %vm1252, %v1239, %v1080
        %v1262 = vsel %vm1252, %v1241, %v1082
        %v1264 = vsel %vm1252, %v1243, %v1084
        %v1266 = vsel %vm1252, %v1245, %v1086
        %v1268 = vsel %vm1252, %v1247, %v1088
        %v1270 = vsel %vm1252, %v1249, %v1090
        %v1272 = vsel %vm1252, %v1251, %v1092
        %vm1273 = vcmask 261120
        %v1275 = vsel %vm1273, %v1254, %v1097
        %v1277 = vsel %vm1273, %v1256, %v1099
        %v1279 = vsel %vm1273, %v1258, %v1101
        %v1281 = vsel %vm1273, %v1260, %v1103
        %v1283 = vsel %vm1273, %v1262, %v1105
        %v1285 = vsel %vm1273, %v1264, %v1107
        %v1287 = vsel %vm1273, %v1266, %v1109
        %v1289 = vsel %vm1273, %v1268, %v1111
        %v1291 = vsel %vm1273, %v1270, %v1113
        %v1293 = vsel %vm1273, %v1272, %v1115
        %v1294 = vld [vmem:[%s4] sm:$0xf]
        %v1295 = vld [vmem:[%s4 + $0x4] sm:$0xf]
        %v1296 = vld [vmem:[%s4 + $0x8] sm:$0xf]
        %v1297 = vld [vmem:[%s4 + $0xc] sm:$0xf]
        %v1298 = vld [vmem:[%s4 + $0x10] sm:$0x3]
        %v1299 = vld [vmem:[%s5] sm:$0x1]
        %v1301 = vlaneseq
        %v1302 = vshrl.u32 %v1301, 7
        %v1303 = vsub.s32 0, %v1302
        %v1304 = vrot.slane %v1299, %v1303
        %v1311 = vunpack.c.l.b16 %v1294
        %v1312 = vunpack.c.l.b16 %v1295
        %v1313 = vunpack.c.l.b16 %v1296
        %v1314 = vunpack.c.l.b16 %v1297
        %v1315 = vunpack.c.l.b16 %v1298
        %v1316 = vpack.c.b16 %v1312, %v1311
        %v1317 = vpack.c.b16 %v1314, %v1313
        %v1318 = vpack.c.b16 %v1315, %v1315
        %vm1321 = vcmask 293888
        %v1322 = vsel %vm1321, %v1275, 0
        %v1324 = vsel %vm1321, %v1277, 0
        %v1326 = vsel %vm1321, %v1279, 0
        %v1328 = vsel %vm1321, %v1281, 0
        %v1330 = vsel %vm1321, %v1283, 0
        %v1332 = vsel %vm1321, %v1285, 0
        %v1334 = vsel %vm1321, %v1287, 0
        %v1336 = vsel %vm1321, %v1289, 0
        %v1338 = vsel %vm1321, %v1291, 0
        %v1340 = vsel %vm1321, %v1293, 0
        %vm1342 = vcmask 1041408
        %v1344 = vsel %vm1342, %v1318, 0
        %1346 = vmatprep.subr.bf16.mxu0 0
        %1347 = vmatpush1.bf16.msra.mxu0 0
        %1348 = vmatprep.subr.bf16.mxu0 0
        %1349 = vmatpush1.bf16.msra.mxu0 0
        %1350 = vmatprep.subr.bf16.mxu0 0
        %1351 = vmatpush1.bf16.msra.mxu0 0
        %1352 = vmatprep.subr.bf16.mxu0 0
        %1353 = vmatpush1.bf16.msra.mxu0 0
        %1354 = vmatprep.subr.bf16.mxu0 0
        %1355 = vmatpush1.bf16.msra.mxu0 0
        %1356 = vmatprep.subr.bf16.mxu0 0
        %1357 = vmatpush1.bf16.msra.mxu0 %v1344
        %1358 = vmatprep.subr.bf16.mxu0 0
        %1359 = vmatpush1.bf16.msra.mxu0 %v1317
        %1360 = vmatprep.subr.bf16.mxu0 0
        %1361 = vmatpush1.bf16.msra.mxu0 %v1316
        %1362 = vmatprep.subr.bf16.mxu0 0
        %1363 = vmatpush2.bf16.msra.mxu0 0
        %1364 = vmatprep.subr.bf16.mxu0 0
        %1365 = vmatpush2.bf16.msra.mxu0 0
        %1366 = vmatprep.subr.bf16.mxu0 0
        %1367 = vmatpush2.bf16.msra.mxu0 0
        %1368 = vmatprep.subr.bf16.mxu0 0
        %1369 = vmatpush2.bf16.msra.mxu0 0
        %1370 = vmatprep.subr.bf16.mxu0 0
        %1371 = vmatpush2.bf16.msra.mxu0 0
        %1372 = vmatprep.subr.bf16.mxu0 0
        %1373 = vmatpush2.bf16.msra.mxu0 0
        %1374 = vmatprep.subr.bf16.mxu0 0
        %1375 = vmatpush2.bf16.msra.mxu0 0
        %1376 = vmatprep.subr.bf16.mxu0 0
        %1377 = vmatpush2.bf16.msra.mxu0 0
        %1378 = vmatprep.mubr.bf16.mxu0 0
        %1379 = vmatmul.mubr.bf16.gmra.mxu0 %v1322
        %v1380 = vpop.f32.mrf.mxu0
        %v1381 = vadd.f32 %v1304, %v1380
        %v1382 = vpop.f32.mrf.mxu0
        %v1383 = vpop.f32.mrf.mxu0
        %v1384 = vadd.f32 %v1304, %v1383
        %v1385 = vpop.f32.mrf.mxu0
        %1386 = vmatprep.mubr.bf16.mxu0 0
        %1387 = vmatmul.mubr.bf16.gmra.mxu0 %v1324
        %v1388 = vpop.f32.mrf.mxu0
        %v1389 = vadd.f32 %v1304, %v1388
        %v1390 = vpop.f32.mrf.mxu0
        %v1391 = vpop.f32.mrf.mxu0
        %v1392 = vadd.f32 %v1304, %v1391
        %v1393 = vpop.f32.mrf.mxu0
        %1394 = vmatprep.mubr.bf16.mxu0 0
        %1395 = vmatmul.mubr.bf16.gmra.mxu0 %v1326
        %v1396 = vpop.f32.mrf.mxu0
        %v1397 = vadd.f32 %v1304, %v1396
        %v1398 = vpop.f32.mrf.mxu0
        %v1399 = vpop.f32.mrf.mxu0
        %v1400 = vadd.f32 %v1304, %v1399
        %v1401 = vpop.f32.mrf.mxu0
        %1402 = vmatprep.mubr.bf16.mxu0 0
        %1403 = vmatmul.mubr.bf16.gmra.mxu0 %v1328
        %v1404 = vpop.f32.mrf.mxu0
        %v1405 = vadd.f32 %v1304, %v1404
        %v1406 = vpop.f32.mrf.mxu0
        %v1407 = vpop.f32.mrf.mxu0
        %v1408 = vadd.f32 %v1304, %v1407
        %v1409 = vpop.f32.mrf.mxu0
        %1410 = vmatprep.mubr.bf16.mxu0 0
        %1411 = vmatmul.mubr.bf16.gmra.mxu0 %v1330
        %v1412 = vpop.f32.mrf.mxu0
        %v1413 = vadd.f32 %v1304, %v1412
        %v1414 = vpop.f32.mrf.mxu0
        %v1415 = vpop.f32.mrf.mxu0
        %v1416 = vadd.f32 %v1304, %v1415
        %v1417 = vpop.f32.mrf.mxu0
        %1418 = vmatprep.mubr.bf16.mxu0 0
        %1419 = vmatmul.mubr.bf16.gmra.mxu0 %v1332
        %v1420 = vpop.f32.mrf.mxu0
        %v1421 = vadd.f32 %v1304, %v1420
        %v1422 = vpop.f32.mrf.mxu0
        %v1423 = vpop.f32.mrf.mxu0
        %v1424 = vadd.f32 %v1304, %v1423
        %v1425 = vpop.f32.mrf.mxu0
        %1426 = vmatprep.mubr.bf16.mxu0 0
        %1427 = vmatmul.mubr.bf16.gmra.mxu0 %v1334
        %v1428 = vpop.f32.mrf.mxu0
        %v1429 = vadd.f32 %v1304, %v1428
        %v1430 = vpop.f32.mrf.mxu0
        %v1431 = vpop.f32.mrf.mxu0
        %v1432 = vadd.f32 %v1304, %v1431
        %v1433 = vpop.f32.mrf.mxu0
        %1434 = vmatprep.mubr.bf16.mxu0 0
        %1435 = vmatmul.mubr.bf16.gmra.mxu0 %v1336
        %v1436 = vpop.f32.mrf.mxu0
        %v1437 = vadd.f32 %v1304, %v1436
        %v1438 = vpop.f32.mrf.mxu0
        %v1439 = vpop.f32.mrf.mxu0
        %v1440 = vadd.f32 %v1304, %v1439
        %v1441 = vpop.f32.mrf.mxu0
        %1442 = vmatprep.mubr.bf16.mxu0 0
        %1443 = vmatmul.mubr.bf16.gmra.mxu0 %v1338
        %v1444 = vpop.f32.mrf.mxu0
        %v1445 = vadd.f32 %v1304, %v1444
        %v1446 = vpop.f32.mrf.mxu0
        %v1447 = vpop.f32.mrf.mxu0
        %v1448 = vadd.f32 %v1304, %v1447
        %v1449 = vpop.f32.mrf.mxu0
        %1450 = vmatprep.mubr.bf16.mxu0 0
        %1451 = vmatmul.mubr.bf16.gmra.mxu0 %v1340
        %v1452 = vpop.f32.mrf.mxu0
        %v1453 = vadd.f32 %v1304, %v1452
        %v1454 = vpop.f32.mrf.mxu0
        %v1455 = vpop.f32.mrf.mxu0
        %v1456 = vadd.f32 %v1304, %v1455
        %v1457 = vpop.f32.mrf.mxu0
        %1458 = vdwg.mxu0
        %v1459 = vmax.f32 %v1381, 0.0
        %v1460 = vmax.f32 %v1384, 0.0
        %v1461 = vmax.f32 %v1389, 0.0
        %v1462 = vmax.f32 %v1392, 0.0
        %v1463 = vmax.f32 %v1397, 0.0
        %v1464 = vmax.f32 %v1400, 0.0
        %v1465 = vmax.f32 %v1405, 0.0
        %v1466 = vmax.f32 %v1408, 0.0
        %v1467 = vmax.f32 %v1413, 0.0
        %v1468 = vmax.f32 %v1416, 0.0
        %v1469 = vmax.f32 %v1421, 0.0
        %v1470 = vmax.f32 %v1424, 0.0
        %v1471 = vmax.f32 %v1429, 0.0
        %v1472 = vmax.f32 %v1432, 0.0
        %v1473 = vmax.f32 %v1437, 0.0
        %v1474 = vmax.f32 %v1440, 0.0
        %v1475 = vmax.f32 %v1445, 0.0
        %v1476 = vmax.f32 %v1448, 0.0
        %v1477 = vmax.f32 %v1453, 0.0
        %v1478 = vmax.f32 %v1456, 0.0
        %v1479 = vpack.c.bf16 %v1460, %v1459
        %v1480 = vpack.c.bf16 %v1462, %v1461
        %v1481 = vpack.c.bf16 %v1464, %v1463
        %v1482 = vpack.c.bf16 %v1466, %v1465
        %v1483 = vpack.c.bf16 %v1468, %v1467
        %v1484 = vpack.c.bf16 %v1470, %v1469
        %v1485 = vpack.c.bf16 %v1472, %v1471
        %v1486 = vpack.c.bf16 %v1474, %v1473
        %v1487 = vpack.c.bf16 %v1476, %v1475
        %v1488 = vpack.c.bf16 %v1478, %v1477
        %v1499 = vunpack.c.l.b16 %v1479
        %v1500 = vunpack.c.h.b16 %v1479
        %v1501 = vunpack.c.l.b16 %v1480
        %v1502 = vunpack.c.h.b16 %v1480
        %v1503 = vunpack.c.l.b16 %v1481
        %v1504 = vunpack.c.h.b16 %v1481
        %v1505 = vunpack.c.l.b16 %v1482
        %v1506 = vunpack.c.h.b16 %v1482
        %v1507 = vunpack.c.l.b16 %v1483
        %v1508 = vunpack.c.h.b16 %v1483
        %v1509 = vunpack.c.l.b16 %v1484
        %v1510 = vunpack.c.h.b16 %v1484
        %v1511 = vunpack.c.l.b16 %v1485
        %v1512 = vunpack.c.h.b16 %v1485
        %v1513 = vunpack.c.l.b16 %v1486
        %v1514 = vunpack.c.h.b16 %v1486
        %v1515 = vunpack.c.l.b16 %v1487
        %v1516 = vunpack.c.h.b16 %v1487
        %v1517 = vunpack.c.l.b16 %v1488
        %v1518 = vunpack.c.h.b16 %v1488
        %v1519 = vpack.c.b16 %v1499, %v1499
        %v1520 = vpack.c.b16 %v1500, %v1500
        %v1521 = vpack.c.b16 %v1501, %v1501
        %v1522 = vpack.c.b16 %v1502, %v1502
        %v1523 = vpack.c.b16 %v1503, %v1503
        %v1524 = vpack.c.b16 %v1504, %v1504
        %v1525 = vpack.c.b16 %v1505, %v1505
        %v1526 = vpack.c.b16 %v1506, %v1506
        %v1527 = vpack.c.b16 %v1507, %v1507
        %v1528 = vpack.c.b16 %v1508, %v1508
        %v1529 = vpack.c.b16 %v1509, %v1509
        %v1530 = vpack.c.b16 %v1510, %v1510
        %v1531 = vpack.c.b16 %v1511, %v1511
        %v1532 = vpack.c.b16 %v1512, %v1512
        %v1533 = vpack.c.b16 %v1513, %v1513
        %v1534 = vpack.c.b16 %v1514, %v1514
        %v1535 = vpack.c.b16 %v1515, %v1515
        %v1536 = vpack.c.b16 %v1516, %v1516
        %v1537 = vpack.c.b16 %v1517, %v1517
        %v1538 = vpack.c.b16 %v1518, %v1518
        %vm1539 = vsmask.f32 256
        %vm1540 = vsmask.f32 4368
        %vm1541 = vmor %vm1539, %vm1540
        %v1543 = vshrl.u32 %v1519, 16
        %v1545 = vrot.slane %v1543, 7
        %v1546 = vshll.u32 %v1519, 16
        %v1548 = vor.u32 %v1545, %v1546
        %v1549 = vrot.slane %v1545, 4
        %v1551 = vshrl.u32 %v1520, 16
        %v1553 = vrot.slane %v1551, 7
        %v1554 = vshll.u32 %v1520, 16
        %v1556 = vor.u32 %v1553, %v1554
        %v1557 = vsel %vm1541, %v1549, %v1556
        %v1558 = vrot.slane %v1553, 4
        %v1560 = vshrl.u32 %v1521, 16
        %v1562 = vrot.slane %v1560, 7
        %v1563 = vshll.u32 %v1521, 16
        %v1565 = vor.u32 %v1562, %v1563
        %v1566 = vrot.slane %v1562, 4
        %v1568 = vshrl.u32 %v1522, 16
        %v1570 = vrot.slane %v1568, 7
        %v1571 = vshll.u32 %v1522, 16
        %v1573 = vor.u32 %v1570, %v1571
        %v1574 = vsel %vm1541, %v1566, %v1573
        %v1575 = vrot.slane %v1570, 4
        %v1577 = vshrl.u32 %v1523, 16
        %v1579 = vrot.slane %v1577, 7
        %v1580 = vshll.u32 %v1523, 16
        %v1582 = vor.u32 %v1579, %v1580
        %v1583 = vrot.slane %v1579, 4
        %v1585 = vshrl.u32 %v1524, 16
        %v1587 = vrot.slane %v1585, 7
        %v1588 = vshll.u32 %v1524, 16
        %v1590 = vor.u32 %v1587, %v1588
        %v1591 = vsel %vm1541, %v1583, %v1590
        %v1592 = vrot.slane %v1587, 4
        %v1594 = vshrl.u32 %v1525, 16
        %v1596 = vrot.slane %v1594, 7
        %v1597 = vshll.u32 %v1525, 16
        %v1599 = vor.u32 %v1596, %v1597
        %v1600 = vrot.slane %v1596, 4
        %v1602 = vshrl.u32 %v1526, 16
        %v1604 = vrot.slane %v1602, 7
        %v1605 = vshll.u32 %v1526, 16
        %v1607 = vor.u32 %v1604, %v1605
        %v1608 = vsel %vm1541, %v1600, %v1607
        %v1609 = vrot.slane %v1604, 4
        %v1611 = vshrl.u32 %v1527, 16
        %v1613 = vrot.slane %v1611, 7
        %v1614 = vshll.u32 %v1527, 16
        %v1616 = vor.u32 %v1613, %v1614
        %v1617 = vrot.slane %v1613, 4
        %v1619 = vshrl.u32 %v1528, 16
        %v1621 = vrot.slane %v1619, 7
        %v1622 = vshll.u32 %v1528, 16
        %v1624 = vor.u32 %v1621, %v1622
        %v1625 = vsel %vm1541, %v1617, %v1624
        %v1626 = vrot.slane %v1621, 4
        %v1628 = vshrl.u32 %v1529, 16
        %v1630 = vrot.slane %v1628, 7
        %v1631 = vshll.u32 %v1529, 16
        %v1633 = vor.u32 %v1630, %v1631
        %v1634 = vrot.slane %v1630, 4
        %v1636 = vshrl.u32 %v1530, 16
        %v1638 = vrot.slane %v1636, 7
        %v1639 = vshll.u32 %v1530, 16
        %v1641 = vor.u32 %v1638, %v1639
        %v1642 = vsel %vm1541, %v1634, %v1641
        %v1643 = vrot.slane %v1638, 4
        %v1645 = vshrl.u32 %v1531, 16
        %v1647 = vrot.slane %v1645, 7
        %v1648 = vshll.u32 %v1531, 16
        %v1650 = vor.u32 %v1647, %v1648
        %v1651 = vrot.slane %v1647, 4
        %v1653 = vshrl.u32 %v1532, 16
        %v1655 = vrot.slane %v1653, 7
        %v1656 = vshll.u32 %v1532, 16
        %v1658 = vor.u32 %v1655, %v1656
        %v1659 = vsel %vm1541, %v1651, %v1658
        %v1660 = vrot.slane %v1655, 4
        %v1662 = vshrl.u32 %v1533, 16
        %v1664 = vrot.slane %v1662, 7
        %v1665 = vshll.u32 %v1533, 16
        %v1667 = vor.u32 %v1664, %v1665
        %v1668 = vrot.slane %v1664, 4
        %v1670 = vshrl.u32 %v1534, 16
        %v1672 = vrot.slane %v1670, 7
        %v1673 = vshll.u32 %v1534, 16
        %v1675 = vor.u32 %v1672, %v1673
        %v1676 = vsel %vm1541, %v1668, %v1675
        %v1677 = vrot.slane %v1672, 4
        %v1679 = vshrl.u32 %v1535, 16
        %v1681 = vrot.slane %v1679, 7
        %v1682 = vshll.u32 %v1535, 16
        %v1684 = vor.u32 %v1681, %v1682
        %v1685 = vrot.slane %v1681, 4
        %v1687 = vshrl.u32 %v1536, 16
        %v1689 = vrot.slane %v1687, 7
        %v1690 = vshll.u32 %v1536, 16
        %v1692 = vor.u32 %v1689, %v1690
        %v1693 = vsel %vm1541, %v1685, %v1692
        %v1694 = vrot.slane %v1689, 4
        %v1696 = vshrl.u32 %v1537, 16
        %v1698 = vrot.slane %v1696, 7
        %v1699 = vshll.u32 %v1537, 16
        %v1701 = vor.u32 %v1698, %v1699
        %v1702 = vrot.slane %v1698, 4
        %v1704 = vshrl.u32 %v1538, 16
        %v1706 = vrot.slane %v1704, 7
        %v1707 = vshll.u32 %v1538, 16
        %v1709 = vor.u32 %v1706, %v1707
        %v1710 = vsel %vm1541, %v1702, %v1709
        %v1711 = vrot.slane %v1706, 4
        %vm1742 = vcmask 1043456
        %vm1743 = vsmask.f32 7938
        %vm1744 = vmand %vm1742, %vm1743
        %v1745 = vld [vmem:[#allocation2] sm:$0xf]
        %v1746 = vsel %vm1744, %v1548, %v1745
        %1747 = vst [vmem:[#allocation2] sm:$0xf] %v1746
        %1748 = vst [vmem:[#allocation2 + $0x4] sm:$0xf] %v1557
        %vm1749 = vcmask 1040384
        %vm1750 = vmand %vm1749, %vm1539
        %v1751 = vld [vmem:[#allocation2 + $0x8] sm:$0x1]
        %v1752 = vsel %vm1750, %v1558, %v1751
        %1753 = vst [vmem:[#allocation2 + $0x8] sm:$0x1] %v1752
        %v1754 = vld [vmem:[#allocation2 + $0xc] sm:$0xf]
        %v1755 = vsel %vm1744, %v1565, %v1754
        %1756 = vst [vmem:[#allocation2 + $0xc] sm:$0xf] %v1755
        %1757 = vst [vmem:[#allocation2 + $0x10] sm:$0xf] %v1574
        %v1758 = vld [vmem:[#allocation2 + $0x14] sm:$0x1]
        %v1759 = vsel %vm1750, %v1575, %v1758
        %1760 = vst [vmem:[#allocation2 + $0x14] sm:$0x1] %v1759
        %v1761 = vld [vmem:[#allocation2 + $0x18] sm:$0xf]
        %v1762 = vsel %vm1744, %v1582, %v1761
        %1763 = vst [vmem:[#allocation2 + $0x18] sm:$0xf] %v1762
        %1764 = vst [vmem:[#allocation2 + $0x1c] sm:$0xf] %v1591
        %v1765 = vld [vmem:[#allocation2 + $0x20] sm:$0x1]
        %v1766 = vsel %vm1750, %v1592, %v1765
        %1767 = vst [vmem:[#allocation2 + $0x20] sm:$0x1] %v1766
        %v1768 = vld [vmem:[#allocation2 + $0x24] sm:$0xf]
        %v1769 = vsel %vm1744, %v1599, %v1768
        %1770 = vst [vmem:[#allocation2 + $0x24] sm:$0xf] %v1769
        %1771 = vst [vmem:[#allocation2 + $0x28] sm:$0xf] %v1608
        %v1772 = vld [vmem:[#allocation2 + $0x2c] sm:$0x1]
        %v1773 = vsel %vm1750, %v1609, %v1772
        %1774 = vst [vmem:[#allocation2 + $0x2c] sm:$0x1] %v1773
        %v1775 = vld [vmem:[#allocation2 + $0x30] sm:$0xf]
        %v1776 = vsel %vm1744, %v1616, %v1775
        %1777 = vst [vmem:[#allocation2 + $0x30] sm:$0xf] %v1776
        %1778 = vst [vmem:[#allocation2 + $0x34] sm:$0xf] %v1625
        %v1779 = vld [vmem:[#allocation2 + $0x38] sm:$0x1]
        %v1780 = vsel %vm1750, %v1626, %v1779
        %1781 = vst [vmem:[#allocation2 + $0x38] sm:$0x1] %v1780
        %v1782 = vld [vmem:[#allocation2 + $0x3c] sm:$0xf]
        %v1783 = vsel %vm1744, %v1633, %v1782
        %1784 = vst [vmem:[#allocation2 + $0x3c] sm:$0xf] %v1783
        %1785 = vst [vmem:[#allocation2 + $0x40] sm:$0xf] %v1642
        %v1786 = vld [vmem:[#allocation2 + $0x44] sm:$0x1]
        %v1787 = vsel %vm1750, %v1643, %v1786
        %1788 = vst [vmem:[#allocation2 + $0x44] sm:$0x1] %v1787
        %v1789 = vld [vmem:[#allocation2 + $0x48] sm:$0xf]
        %v1790 = vsel %vm1744, %v1650, %v1789
        %1791 = vst [vmem:[#allocation2 + $0x48] sm:$0xf] %v1790
        %1792 = vst [vmem:[#allocation2 + $0x4c] sm:$0xf] %v1659
        %v1793 = vld [vmem:[#allocation2 + $0x50] sm:$0x1]
        %v1794 = vsel %vm1750, %v1660, %v1793
        %1795 = vst [vmem:[#allocation2 + $0x50] sm:$0x1] %v1794
        %v1796 = vld [vmem:[#allocation2 + $0x54] sm:$0xf]
        %v1797 = vsel %vm1744, %v1667, %v1796
        %1798 = vst [vmem:[#allocation2 + $0x54] sm:$0xf] %v1797
        %1799 = vst [vmem:[#allocation2 + $0x58] sm:$0xf] %v1676
        %v1800 = vld [vmem:[#allocation2 + $0x5c] sm:$0x1]
        %v1801 = vsel %vm1750, %v1677, %v1800
        %1802 = vst [vmem:[#allocation2 + $0x5c] sm:$0x1] %v1801
        %v1803 = vld [vmem:[#allocation2 + $0x60] sm:$0xf]
        %v1804 = vsel %vm1744, %v1684, %v1803
        %1805 = vst [vmem:[#allocation2 + $0x60] sm:$0xf] %v1804
        %1806 = vst [vmem:[#allocation2 + $0x64] sm:$0xf] %v1693
        %v1807 = vld [vmem:[#allocation2 + $0x68] sm:$0x1]
        %v1808 = vsel %vm1750, %v1694, %v1807
        %1809 = vst [vmem:[#allocation2 + $0x68] sm:$0x1] %v1808
        %v1810 = vld [vmem:[#allocation2 + $0x6c] sm:$0xf]
        %v1811 = vsel %vm1744, %v1701, %v1810
        %1812 = vst [vmem:[#allocation2 + $0x6c] sm:$0xf] %v1811
        %1813 = vst [vmem:[#allocation2 + $0x70] sm:$0xf] %v1710
        %v1814 = vld [vmem:[#allocation2 + $0x74] sm:$0x1]
        %v1815 = vsel %vm1750, %v1711, %v1814
        %1816 = vst [vmem:[#allocation2 + $0x74] sm:$0x1] %v1815
        %v1817 = vld [vmem:[#allocation2] sm:$0x1]
        %v1818 = vsel %vm1750, 0, %v1817
        %1819 = vst [vmem:[#allocation2] sm:$0x1] %v1818
        %v1820 = vld [vmem:[#allocation2 + $0xc] sm:$0x1]
        %v1821 = vsel %vm1750, 0, %v1820
        %1822 = vst [vmem:[#allocation2 + $0xc] sm:$0x1] %v1821
        %v1823 = vld [vmem:[#allocation2 + $0x18] sm:$0x1]
        %v1824 = vsel %vm1750, 0, %v1823
        %1825 = vst [vmem:[#allocation2 + $0x18] sm:$0x1] %v1824
        %v1826 = vld [vmem:[#allocation2 + $0x24] sm:$0x1]
        %v1827 = vsel %vm1750, 0, %v1826
        %1828 = vst [vmem:[#allocation2 + $0x24] sm:$0x1] %v1827
        %v1829 = vld [vmem:[#allocation2 + $0x30] sm:$0x1]
        %v1830 = vsel %vm1750, 0, %v1829
        %1831 = vst [vmem:[#allocation2 + $0x30] sm:$0x1] %v1830
        %v1832 = vld [vmem:[#allocation2 + $0x3c] sm:$0x1]
        %v1833 = vsel %vm1750, 0, %v1832
        %1834 = vst [vmem:[#allocation2 + $0x3c] sm:$0x1] %v1833
        %v1835 = vld [vmem:[#allocation2 + $0x48] sm:$0x1]
        %v1836 = vsel %vm1750, 0, %v1835
        %1837 = vst [vmem:[#allocation2 + $0x48] sm:$0x1] %v1836
        %v1838 = vld [vmem:[#allocation2 + $0x54] sm:$0x1]
        %v1839 = vsel %vm1750, 0, %v1838
        %1840 = vst [vmem:[#allocation2 + $0x54] sm:$0x1] %v1839
        %v1841 = vld [vmem:[#allocation2 + $0x60] sm:$0x1]
        %v1842 = vsel %vm1750, 0, %v1841
        %1843 = vst [vmem:[#allocation2 + $0x60] sm:$0x1] %v1842
        %v1844 = vld [vmem:[#allocation2 + $0x6c] sm:$0x1]
        %v1845 = vsel %vm1750, 0, %v1844
        %1846 = vst [vmem:[#allocation2 + $0x6c] sm:$0x1] %v1845
        %vm1847 = vmand %vm1749, %vm1743
        %v1848 = vld [vmem:[#allocation2 + $0x8] sm:$0x1]
        %v1849 = vsel %vm1847, 0, %v1848
        %1850 = vst [vmem:[#allocation2 + $0x8] sm:$0x1] %v1849
        %v1851 = vld [vmem:[#allocation2 + $0x14] sm:$0x1]
        %v1852 = vsel %vm1847, 0, %v1851
        %1853 = vst [vmem:[#allocation2 + $0x14] sm:$0x1] %v1852
        %v1854 = vld [vmem:[#allocation2 + $0x20] sm:$0x1]
        %v1855 = vsel %vm1847, 0, %v1854
        %1856 = vst [vmem:[#allocation2 + $0x20] sm:$0x1] %v1855
        %v1857 = vld [vmem:[#allocation2 + $0x2c] sm:$0x1]
        %v1858 = vsel %vm1847, 0, %v1857
        %1859 = vst [vmem:[#allocation2 + $0x2c] sm:$0x1] %v1858
        %v1860 = vld [vmem:[#allocation2 + $0x38] sm:$0x1]
        %v1861 = vsel %vm1847, 0, %v1860
        %1862 = vst [vmem:[#allocation2 + $0x38] sm:$0x1] %v1861
        %v1863 = vld [vmem:[#allocation2 + $0x44] sm:$0x1]
        %v1864 = vsel %vm1847, 0, %v1863
        %1865 = vst [vmem:[#allocation2 + $0x44] sm:$0x1] %v1864
        %v1866 = vld [vmem:[#allocation2 + $0x50] sm:$0x1]
        %v1867 = vsel %vm1847, 0, %v1866
        %1868 = vst [vmem:[#allocation2 + $0x50] sm:$0x1] %v1867
        %v1869 = vld [vmem:[#allocation2 + $0x5c] sm:$0x1]
        %v1870 = vsel %vm1847, 0, %v1869
        %1871 = vst [vmem:[#allocation2 + $0x5c] sm:$0x1] %v1870
        %v1872 = vld [vmem:[#allocation2 + $0x68] sm:$0x1]
        %v1873 = vsel %vm1847, 0, %v1872
        %1874 = vst [vmem:[#allocation2 + $0x68] sm:$0x1] %v1873
        %v1875 = vld [vmem:[#allocation2 + $0x74] sm:$0x1]
        %v1876 = vsel %vm1847, 0, %v1875
        %1877 = vst [vmem:[#allocation2 + $0x74] sm:$0x1] %v1876
        %p1878 = scmp.eq.s32.totalorder %s27, 0
        // Predicated region
        $region53: #{tpu_custom_call.1} parent=51 // pred_check
          %p1879 = pneg %p1878
        $region54: #{tpu_custom_call.1} parent=51 // pred_check_branch
          %1881 = sbr.rel (%p1879) target = $region56
        $region55: #{tpu_custom_call.1} parent=51 // pred_region
          %1882 = vst [vmem:[#allocation2] sm:$0xf] 0
          %1883 = vst [vmem:[#allocation2 + $0x4] sm:$0xf] 0
          %1884 = vst [vmem:[#allocation2 + $0x8] sm:$0x1] 0
        $region56: #{tpu_custom_call.1} parent=51 // pred_fallthru
          _
        %p1885 = scmp.eq.s32.totalorder %s27, 1
        // Predicated region
        $region57: #{tpu_custom_call.1} parent=51 // pred_check
          %p1886 = pneg %p1885
        $region58: #{tpu_custom_call.1} parent=51 // pred_check_branch
          %1888 = sbr.rel (%p1886) target = $region60
        $region59: #{tpu_custom_call.1} parent=51 // pred_region
          %s1889 = scalar_lea.vmem [#allocation2], 108
          %1890 = vst [vmem:[%s1889] sm:$0xf] 0
          %1891 = vst [vmem:[%s1889 + $0x4] sm:$0xf] 0
          %1892 = vst [vmem:[%s1889 + $0x8] sm:$0x1] 0
        $region60: #{tpu_custom_call.1} parent=51 // pred_fallthru
          _
        %v1893 = vld [vmem:[%s7] sm:$0xff]
        %v1894 = vld [vmem:[%s7 + $0x8] sm:$0xff]
        %1896 = vset.pattern.permute.xlu0 0
        %1897 = vperm.xlu0 %1896, %v1893
        %v1898 = vpop.permute.xlu0 %1897
        %1901 = vset.pattern.permute.xlu0 0
        %1902 = vperm.xlu0 %1901, %v1894
        %v1903 = vpop.permute.xlu0 %1902
        %v1905 = vld [vmem:[#allocation2] sm:$0xf]
        %v1906 = vld [vmem:[#allocation2 + $0x4] sm:$0xf]
        %v1907 = vld [vmem:[#allocation2 + $0xc] sm:$0xf]
        %v1908 = vld [vmem:[#allocation2 + $0x10] sm:$0xf]
        %v1909 = vld [vmem:[#allocation2 + $0x18] sm:$0xf]
        %v1910 = vld [vmem:[#allocation2 + $0x1c] sm:$0xf]
        %v1911 = vld [vmem:[#allocation2 + $0x24] sm:$0xf]
        %v1912 = vld [vmem:[#allocation2 + $0x28] sm:$0xf]
        %v1913 = vld [vmem:[#allocation2 + $0x30] sm:$0xf]
        %v1914 = vld [vmem:[#allocation2 + $0x34] sm:$0xf]
        %v1915 = vld [vmem:[#allocation2 + $0x3c] sm:$0xf]
        %v1916 = vld [vmem:[#allocation2 + $0x40] sm:$0xf]
        %v1917 = vld [vmem:[#allocation2 + $0x48] sm:$0xf]
        %v1918 = vld [vmem:[#allocation2 + $0x4c] sm:$0xf]
        %v1919 = vld [vmem:[#allocation2 + $0x54] sm:$0xf]
        %v1920 = vld [vmem:[#allocation2 + $0x58] sm:$0xf]
        %v1921 = vld [vmem:[#allocation2 + $0x8] sm:$0x1]
        %v1922 = vld [vmem:[#allocation2 + $0x14] sm:$0x1]
        %v1923 = vld [vmem:[#allocation2 + $0x20] sm:$0x1]
        %v1924 = vld [vmem:[#allocation2 + $0x2c] sm:$0x1]
        %v1925 = vld [vmem:[#allocation2 + $0x38] sm:$0x1]
        %v1926 = vld [vmem:[#allocation2 + $0x44] sm:$0x1]
        %v1927 = vld [vmem:[#allocation2 + $0x50] sm:$0x1]
        %v1928 = vld [vmem:[#allocation2 + $0x5c] sm:$0x1]
        %v1930 = vshrl.u32 %v1905, 16
        %v1932 = vrot.slane %v1930, 4
        %v1933 = vshll.u32 %v1905, 16
        %v1935 = vrot.slane %v1933, 5
        %v1936 = vor.u32 %v1932, %v1935
        %v1937 = vrot.slane %v1936, 4
        %v1939 = vshll.u32 %v1906, 16
        %v1941 = vrot.slane %v1939, 5
        %v1942 = vsel %vm436, %v1937, %v1941
        %v1943 = vshrl.u32 %v1906, 16
        %v1945 = vrot.slane %v1943, 4
        %v1946 = vor.u32 %v1945, %v1941
        %v1947 = vrot.slane %v1946, 4
        %v1949 = vshll.u32 %v1921, 16
        %v1951 = vrot.slane %v1949, 5
        %v1952 = vsel %vm436, %v1947, %v1951
        %v1954 = vshrl.u32 %v1907, 16
        %v1956 = vrot.slane %v1954, 4
        %v1957 = vshll.u32 %v1907, 16
        %v1959 = vrot.slane %v1957, 5
        %v1960 = vor.u32 %v1956, %v1959
        %v1961 = vrot.slane %v1960, 4
        %v1963 = vshll.u32 %v1908, 16
        %v1965 = vrot.slane %v1963, 5
        %v1966 = vsel %vm436, %v1961, %v1965
        %v1967 = vshrl.u32 %v1908, 16
        %v1969 = vrot.slane %v1967, 4
        %v1970 = vor.u32 %v1969, %v1965
        %v1971 = vrot.slane %v1970, 4
        %v1973 = vshll.u32 %v1922, 16
        %v1975 = vrot.slane %v1973, 5
        %v1976 = vsel %vm436, %v1971, %v1975
        %v1978 = vshrl.u32 %v1909, 16
        %v1980 = vrot.slane %v1978, 4
        %v1981 = vshll.u32 %v1909, 16
        %v1983 = vrot.slane %v1981, 5
        %v1984 = vor.u32 %v1980, %v1983
        %v1985 = vrot.slane %v1984, 4
        %v1987 = vshll.u32 %v1910, 16
        %v1989 = vrot.slane %v1987, 5
        %v1990 = vsel %vm436, %v1985, %v1989
        %v1991 = vshrl.u32 %v1910, 16
        %v1993 = vrot.slane %v1991, 4
        %v1994 = vor.u32 %v1993, %v1989
        %v1995 = vrot.slane %v1994, 4
        %v1997 = vshll.u32 %v1923, 16
        %v1999 = vrot.slane %v1997, 5
        %v2000 = vsel %vm436, %v1995, %v1999
        %v2002 = vshrl.u32 %v1911, 16
        %v2004 = vrot.slane %v2002, 4
        %v2005 = vshll.u32 %v1911, 16
        %v2007 = vrot.slane %v2005, 5
        %v2008 = vor.u32 %v2004, %v2007
        %v2009 = vrot.slane %v2008, 4
        %v2011 = vshll.u32 %v1912, 16
        %v2013 = vrot.slane %v2011, 5
        %v2014 = vsel %vm436, %v2009, %v2013
        %v2015 = vshrl.u32 %v1912, 16
        %v2017 = vrot.slane %v2015, 4
        %v2018 = vor.u32 %v2017, %v2013
        %v2019 = vrot.slane %v2018, 4
        %v2021 = vshll.u32 %v1924, 16
        %v2023 = vrot.slane %v2021, 5
        %v2024 = vsel %vm436, %v2019, %v2023
        %v2026 = vshrl.u32 %v1913, 16
        %v2028 = vrot.slane %v2026, 4
        %v2029 = vshll.u32 %v1913, 16
        %v2031 = vrot.slane %v2029, 5
        %v2032 = vor.u32 %v2028, %v2031
        %v2033 = vrot.slane %v2032, 4
        %v2035 = vshll.u32 %v1914, 16
        %v2037 = vrot.slane %v2035, 5
        %v2038 = vsel %vm436, %v2033, %v2037
        %v2039 = vshrl.u32 %v1914, 16
        %v2041 = vrot.slane %v2039, 4
        %v2042 = vor.u32 %v2041, %v2037
        %v2043 = vrot.slane %v2042, 4
        %v2045 = vshll.u32 %v1925, 16
        %v2047 = vrot.slane %v2045, 5
        %v2048 = vsel %vm436, %v2043, %v2047
        %v2050 = vshrl.u32 %v1915, 16
        %v2052 = vrot.slane %v2050, 4
        %v2053 = vshll.u32 %v1915, 16
        %v2055 = vrot.slane %v2053, 5
        %v2056 = vor.u32 %v2052, %v2055
        %v2057 = vrot.slane %v2056, 4
        %v2059 = vshll.u32 %v1916, 16
        %v2061 = vrot.slane %v2059, 5
        %v2062 = vsel %vm436, %v2057, %v2061
        %v2063 = vshrl.u32 %v1916, 16
        %v2065 = vrot.slane %v2063, 4
        %v2066 = vor.u32 %v2065, %v2061
        %v2067 = vrot.slane %v2066, 4
        %v2069 = vshll.u32 %v1926, 16
        %v2071 = vrot.slane %v2069, 5
        %v2072 = vsel %vm436, %v2067, %v2071
        %v2074 = vshrl.u32 %v1917, 16
        %v2076 = vrot.slane %v2074, 4
        %v2077 = vshll.u32 %v1917, 16
        %v2079 = vrot.slane %v2077, 5
        %v2080 = vor.u32 %v2076, %v2079
        %v2081 = vrot.slane %v2080, 4
        %v2083 = vshll.u32 %v1918, 16
        %v2085 = vrot.slane %v2083, 5
        %v2086 = vsel %vm436, %v2081, %v2085
        %v2087 = vshrl.u32 %v1918, 16
        %v2089 = vrot.slane %v2087, 4
        %v2090 = vor.u32 %v2089, %v2085
        %v2091 = vrot.slane %v2090, 4
        %v2093 = vshll.u32 %v1927, 16
        %v2095 = vrot.slane %v2093, 5
        %v2096 = vsel %vm436, %v2091, %v2095
        %v2098 = vshrl.u32 %v1919, 16
        %v2100 = vrot.slane %v2098, 4
        %v2101 = vshll.u32 %v1919, 16
        %v2103 = vrot.slane %v2101, 5
        %v2104 = vor.u32 %v2100, %v2103
        %v2105 = vrot.slane %v2104, 4
        %v2107 = vshll.u32 %v1920, 16
        %v2109 = vrot.slane %v2107, 5
        %v2110 = vsel %vm436, %v2105, %v2109
        %v2111 = vshrl.u32 %v1920, 16
        %v2113 = vrot.slane %v2111, 4
        %v2114 = vor.u32 %v2113, %v2109
        %v2115 = vrot.slane %v2114, 4
        %v2117 = vshll.u32 %v1928, 16
        %v2119 = vrot.slane %v2117, 5
        %v2120 = vsel %vm436, %v2115, %v2119
        %v2121 = vld [vmem:[#allocation2] sm:$0xe]
        %v2122 = vld [vmem:[#allocation2 + $0xc] sm:$0xe]
        %v2123 = vld [vmem:[#allocation2 + $0x18] sm:$0xe]
        %v2124 = vld [vmem:[#allocation2 + $0x24] sm:$0xe]
        %v2125 = vld [vmem:[#allocation2 + $0x30] sm:$0xe]
        %v2126 = vld [vmem:[#allocation2 + $0x3c] sm:$0xe]
        %v2127 = vld [vmem:[#allocation2 + $0x48] sm:$0xe]
        %v2128 = vld [vmem:[#allocation2 + $0x54] sm:$0xe]
        %v2153 = vrot.slane %v2121, 5
        %v2154 = vrot.slane %v2153, 4
        %v2155 = vrot.slane %v1906, 5
        %v2156 = vsel %vm709, %v2154, %v2155
        %v2157 = vrot.slane %v2155, 4
        %v2158 = vrot.slane %v1921, 5
        %v2159 = vsel %vm709, %v2157, %v2158
        %v2160 = vrot.slane %v2122, 5
        %v2161 = vrot.slane %v2160, 4
        %v2162 = vrot.slane %v1908, 5
        %v2163 = vsel %vm709, %v2161, %v2162
        %v2164 = vrot.slane %v2162, 4
        %v2165 = vrot.slane %v1922, 5
        %v2166 = vsel %vm709, %v2164, %v2165
        %v2167 = vrot.slane %v2123, 5
        %v2168 = vrot.slane %v2167, 4
        %v2169 = vrot.slane %v1910, 5
        %v2170 = vsel %vm709, %v2168, %v2169
        %v2171 = vrot.slane %v2169, 4
        %v2172 = vrot.slane %v1923, 5
        %v2173 = vsel %vm709, %v2171, %v2172
        %v2174 = vrot.slane %v2124, 5
        %v2175 = vrot.slane %v2174, 4
        %v2176 = vrot.slane %v1912, 5
        %v2177 = vsel %vm709, %v2175, %v2176
        %v2178 = vrot.slane %v2176, 4
        %v2179 = vrot.slane %v1924, 5
        %v2180 = vsel %vm709, %v2178, %v2179
        %v2181 = vrot.slane %v2125, 5
        %v2182 = vrot.slane %v2181, 4
        %v2183 = vrot.slane %v1914, 5
        %v2184 = vsel %vm709, %v2182, %v2183
        %v2185 = vrot.slane %v2183, 4
        %v2186 = vrot.slane %v1925, 5
        %v2187 = vsel %vm709, %v2185, %v2186
        %v2188 = vrot.slane %v2126, 5
        %v2189 = vrot.slane %v2188, 4
        %v2190 = vrot.slane %v1916, 5
        %v2191 = vsel %vm709, %v2189, %v2190
        %v2192 = vrot.slane %v2190, 4
        %v2193 = vrot.slane %v1926, 5
        %v2194 = vsel %vm709, %v2192, %v2193
        %v2195 = vrot.slane %v2127, 5
        %v2196 = vrot.slane %v2195, 4
        %v2197 = vrot.slane %v1918, 5
        %v2198 = vsel %vm709, %v2196, %v2197
        %v2199 = vrot.slane %v2197, 4
        %v2200 = vrot.slane %v1927, 5
        %v2201 = vsel %vm709, %v2199, %v2200
        %v2202 = vrot.slane %v2128, 5
        %v2203 = vrot.slane %v2202, 4
        %v2204 = vrot.slane %v1920, 5
        %v2205 = vsel %vm709, %v2203, %v2204
        %v2206 = vrot.slane %v2204, 4
        %v2207 = vrot.slane %v1928, 5
        %v2208 = vsel %vm709, %v2206, %v2207
        %v2217 = vunpack.c.l.b16 %v1905
        %v2218 = vunpack.c.l.b16 %v1906
        %v2219 = vunpack.c.l.b16 %v1907
        %v2220 = vunpack.c.l.b16 %v1908
        %v2221 = vunpack.c.l.b16 %v1909
        %v2222 = vunpack.c.l.b16 %v1910
        %v2223 = vunpack.c.l.b16 %v1911
        %v2224 = vunpack.c.l.b16 %v1912
        %v2225 = vunpack.c.l.b16 %v1913
        %v2226 = vunpack.c.l.b16 %v1914
        %v2227 = vunpack.c.l.b16 %v1915
        %v2228 = vunpack.c.l.b16 %v1916
        %v2229 = vunpack.c.l.b16 %v1917
        %v2230 = vunpack.c.l.b16 %v1918
        %v2231 = vunpack.c.l.b16 %v1919
        %v2232 = vunpack.c.l.b16 %v1920
        %v2233 = vpack.c.b16 %v2218, %v2217
        %v2234 = vpack.c.b16 %v2220, %v2219
        %v2235 = vpack.c.b16 %v2222, %v2221
        %v2236 = vpack.c.b16 %v2224, %v2223
        %v2237 = vpack.c.b16 %v2226, %v2225
        %v2238 = vpack.c.b16 %v2228, %v2227
        %v2239 = vpack.c.b16 %v2230, %v2229
        %v2240 = vpack.c.b16 %v2232, %v2231
        %v2249 = vunpack.c.l.b16 %v1942
        %v2250 = vunpack.c.l.b16 %v1952
        %v2251 = vunpack.c.l.b16 %v1966
        %v2252 = vunpack.c.l.b16 %v1976
        %v2253 = vunpack.c.l.b16 %v1990
        %v2254 = vunpack.c.l.b16 %v2000
        %v2255 = vunpack.c.l.b16 %v2014
        %v2256 = vunpack.c.l.b16 %v2024
        %v2257 = vunpack.c.l.b16 %v2038
        %v2258 = vunpack.c.l.b16 %v2048
        %v2259 = vunpack.c.l.b16 %v2062
        %v2260 = vunpack.c.l.b16 %v2072
        %v2261 = vunpack.c.l.b16 %v2086
        %v2262 = vunpack.c.l.b16 %v2096
        %v2263 = vunpack.c.l.b16 %v2110
        %v2264 = vunpack.c.l.b16 %v2120
        %v2265 = vpack.c.b16 %v2250, %v2249
        %v2266 = vpack.c.b16 %v2252, %v2251
        %v2267 = vpack.c.b16 %v2254, %v2253
        %v2268 = vpack.c.b16 %v2256, %v2255
        %v2269 = vpack.c.b16 %v2258, %v2257
        %v2270 = vpack.c.b16 %v2260, %v2259
        %v2271 = vpack.c.b16 %v2262, %v2261
        %v2272 = vpack.c.b16 %v2264, %v2263
        %v2281 = vunpack.c.l.b16 %v2156
        %v2282 = vunpack.c.l.b16 %v2159
        %v2283 = vunpack.c.l.b16 %v2163
        %v2284 = vunpack.c.l.b16 %v2166
        %v2285 = vunpack.c.l.b16 %v2170
        %v2286 = vunpack.c.l.b16 %v2173
        %v2287 = vunpack.c.l.b16 %v2177
        %v2288 = vunpack.c.l.b16 %v2180
        %v2289 = vunpack.c.l.b16 %v2184
        %v2290 = vunpack.c.l.b16 %v2187
        %v2291 = vunpack.c.l.b16 %v2191
        %v2292 = vunpack.c.l.b16 %v2194
        %v2293 = vunpack.c.l.b16 %v2198
        %v2294 = vunpack.c.l.b16 %v2201
        %v2295 = vunpack.c.l.b16 %v2205
        %v2296 = vunpack.c.l.b16 %v2208
        %v2297 = vpack.c.b16 %v2282, %v2281
        %v2298 = vpack.c.b16 %v2284, %v2283
        %v2299 = vpack.c.b16 %v2286, %v2285
        %v2300 = vpack.c.b16 %v2288, %v2287
        %v2301 = vpack.c.b16 %v2290, %v2289
        %v2302 = vpack.c.b16 %v2292, %v2291
        %v2303 = vpack.c.b16 %v2294, %v2293
        %v2304 = vpack.c.b16 %v2296, %v2295
        %v2313 = vld [vmem:[%s6] sm:$0xff]
        %v2314 = vld [vmem:[%s6 + $0x8] sm:$0xf]
        %v2315 = vld [vmem:[%s6 + $0xc] sm:$0xff]
        %v2316 = vld [vmem:[%s6 + $0x14] sm:$0xf]
        %v2321 = vunpack.c.l.b16 %v2313
        %v2322 = vunpack.c.h.b16 %v2313
        %v2323 = vunpack.c.l.b16 %v2314
        %v2324 = vunpack.c.l.b16 %v2315
        %v2325 = vunpack.c.h.b16 %v2315
        %v2326 = vunpack.c.l.b16 %v2316
        %v2327 = vpack.c.b16 %v2324, %v2321
        %v2328 = vpack.c.b16 %v2325, %v2322
        %v2329 = vpack.c.b16 %v2326, %v2323
        %2333 = vmatprep.subr.bf16.mxu0 %v2272
        %2334 = vmatpush1.bf16.xpose.msra.mxu0 %v2240
        %2335 = vmatprep.subr.bf16.mxu0 %v2271
        %2336 = vmatpush1.bf16.xpose.msra.mxu0 %v2239
        %2337 = vmatprep.subr.bf16.mxu0 %v2270
        %2338 = vmatpush1.bf16.xpose.msra.mxu0 %v2238
        %2339 = vmatprep.subr.bf16.mxu0 %v2269
        %2340 = vmatpush1.bf16.xpose.msra.mxu0 %v2237
        %2341 = vmatprep.subr.bf16.mxu0 %v2268
        %2342 = vmatpush1.bf16.xpose.msra.mxu0 %v2236
        %2343 = vmatprep.subr.bf16.mxu0 %v2267
        %2344 = vmatpush1.bf16.xpose.msra.mxu0 %v2235
        %2345 = vmatprep.subr.bf16.mxu0 %v2266
        %2346 = vmatpush1.bf16.xpose.msra.mxu0 %v2234
        %2347 = vmatprep.subr.bf16.mxu0 %v2265
        %2348 = vmatpush1.bf16.xpose.msra.mxu0 %v2233
        %2349 = vmatprep.subr.bf16.mxu0 0
        %2350 = vmatpush2.bf16.xpose.msra.mxu0 0
        %2351 = vmatprep.subr.bf16.mxu0 0
        %2352 = vmatpush2.bf16.xpose.msra.mxu0 0
        %2353 = vmatprep.subr.bf16.mxu0 0
        %2354 = vmatpush2.bf16.xpose.msra.mxu0 0
        %2355 = vmatprep.subr.bf16.mxu0 0
        %2356 = vmatpush2.bf16.xpose.msra.mxu0 0
        %2357 = vmatprep.subr.bf16.mxu0 0
        %2358 = vmatpush2.bf16.xpose.msra.mxu0 0
        %2359 = vmatprep.subr.bf16.mxu0 0
        %2360 = vmatpush2.bf16.xpose.msra.mxu0 0
        %2361 = vmatprep.subr.bf16.mxu0 0
        %2362 = vmatpush2.bf16.xpose.msra.mxu0 0
        %2363 = vmatprep.subr.bf16.mxu0 0
        %2364 = vmatpush2.bf16.xpose.msra.mxu0 0
        %2365 = vmatprep.mubr.bf16.mxu0 %v2328
        %2366 = vmatmul.mubr.bf16.gmra.mxu0 %v2327
        %v2367 = vpop.f32.mrf.mxu0
        %v2368 = vadd.f32 0.0, %v2367
        %v2369 = vpop.f32.mrf.mxu0
        %v2370 = vpop.f32.mrf.mxu0
        %v2371 = vadd.f32 0.0, %v2370
        %v2372 = vpop.f32.mrf.mxu0
        %2373 = vdwg.mxu0
        %2374 = vmatprep.subr.bf16.mxu0 0
        %2375 = vmatpush1.bf16.xpose.msra.mxu0 %v2304
        %2376 = vmatprep.subr.bf16.mxu0 0
        %2377 = vmatpush1.bf16.xpose.msra.mxu0 %v2303
        %2378 = vmatprep.subr.bf16.mxu0 0
        %2379 = vmatpush1.bf16.xpose.msra.mxu0 %v2302
        %2380 = vmatprep.subr.bf16.mxu0 0
        %2381 = vmatpush1.bf16.xpose.msra.mxu0 %v2301
        %2382 = vmatprep.subr.bf16.mxu0 0
        %2383 = vmatpush1.bf16.xpose.msra.mxu0 %v2300
        %2384 = vmatprep.subr.bf16.mxu0 0
        %2385 = vmatpush1.bf16.xpose.msra.mxu0 %v2299
        %2386 = vmatprep.subr.bf16.mxu0 0
        %2387 = vmatpush1.bf16.xpose.msra.mxu0 %v2298
        %2388 = vmatprep.subr.bf16.mxu0 0
        %2389 = vmatpush1.bf16.xpose.msra.mxu0 %v2297
        %2390 = vmatprep.subr.bf16.mxu0 0
        %2391 = vmatpush2.bf16.xpose.msra.mxu0 0
        %2392 = vmatprep.subr.bf16.mxu0 0
        %2393 = vmatpush2.bf16.xpose.msra.mxu0 0
        %2394 = vmatprep.subr.bf16.mxu0 0
        %2395 = vmatpush2.bf16.xpose.msra.mxu0 0
        %2396 = vmatprep.subr.bf16.mxu0 0
        %2397 = vmatpush2.bf16.xpose.msra.mxu0 0
        %2398 = vmatprep.subr.bf16.mxu0 0
        %2399 = vmatpush2.bf16.xpose.msra.mxu0 0
        %2400 = vmatprep.subr.bf16.mxu0 0
        %2401 = vmatpush2.bf16.xpose.msra.mxu0 0
        %2402 = vmatprep.subr.bf16.mxu0 0
        %2403 = vmatpush2.bf16.xpose.msra.mxu0 0
        %2404 = vmatprep.subr.bf16.mxu0 0
        %2405 = vmatpush2.bf16.xpose.msra.mxu0 0
        %2406 = vmatprep.mubr.bf16.mxu0 0
        %2407 = vmatmul.mubr.bf16.gmra.mxu0 %v2329
        %v2408 = vpop.f32.mrf.mxu0
        %v2409 = vadd.f32 %v2368, %v2408
        %v2410 = vpop.f32.mrf.mxu0
        %v2411 = vpop.f32.mrf.mxu0
        %v2412 = vadd.f32 %v2371, %v2411
        %v2413 = vpop.f32.mrf.mxu0
        %2414 = vdwg.mxu0
        %v2415 = vadd.f32 %v1898, %v2409
        %v2416 = vadd.f32 %v1903, %v2412
        %s2417 = scalar_lea.vmem [#allocation2], 12
        %v2418 = vld [vmem:[%s2417] sm:$0xf]
        %v2419 = vld [vmem:[%s2417 + $0x4] sm:$0xf]
        %v2420 = vld [vmem:[%s2417 + $0xc] sm:$0xf]
        %v2421 = vld [vmem:[%s2417 + $0x10] sm:$0xf]
        %v2422 = vld [vmem:[%s2417 + $0x18] sm:$0xf]
        %v2423 = vld [vmem:[%s2417 + $0x1c] sm:$0xf]
        %v2424 = vld [vmem:[%s2417 + $0x24] sm:$0xf]
        %v2425 = vld [vmem:[%s2417 + $0x28] sm:$0xf]
        %v2426 = vld [vmem:[%s2417 + $0x30] sm:$0xf]
        %v2427 = vld [vmem:[%s2417 + $0x34] sm:$0xf]
        %v2428 = vld [vmem:[%s2417 + $0x3c] sm:$0xf]
        %v2429 = vld [vmem:[%s2417 + $0x40] sm:$0xf]
        %v2430 = vld [vmem:[%s2417 + $0x48] sm:$0xf]
        %v2431 = vld [vmem:[%s2417 + $0x4c] sm:$0xf]
        %v2432 = vld [vmem:[%s2417 + $0x54] sm:$0xf]
        %v2433 = vld [vmem:[%s2417 + $0x58] sm:$0xf]
        %v2434 = vld [vmem:[%s2417 + $0x8] sm:$0x1]
        %v2435 = vld [vmem:[%s2417 + $0x14] sm:$0x1]
        %v2436 = vld [vmem:[%s2417 + $0x20] sm:$0x1]
        %v2437 = vld [vmem:[%s2417 + $0x2c] sm:$0x1]
        %v2438 = vld [vmem:[%s2417 + $0x38] sm:$0x1]
        %v2439 = vld [vmem:[%s2417 + $0x44] sm:$0x1]
        %v2440 = vld [vmem:[%s2417 + $0x50] sm:$0x1]
        %v2441 = vld [vmem:[%s2417 + $0x5c] sm:$0x1]
        %v2443 = vshrl.u32 %v2418, 16
        %v2445 = vrot.slane %v2443, 4
        %v2446 = vshll.u32 %v2418, 16
        %v2448 = vrot.slane %v2446, 5
        %v2449 = vor.u32 %v2445, %v2448
        %v2450 = vrot.slane %v2449, 4
        %v2452 = vshll.u32 %v2419, 16
        %v2454 = vrot.slane %v2452, 5
        %v2455 = vsel %vm436, %v2450, %v2454
        %v2456 = vshrl.u32 %v2419, 16
        %v2458 = vrot.slane %v2456, 4
        %v2459 = vor.u32 %v2458, %v2454
        %v2460 = vrot.slane %v2459, 4
        %v2462 = vshll.u32 %v2434, 16
        %v2464 = vrot.slane %v2462, 5
        %v2465 = vsel %vm436, %v2460, %v2464
        %v2467 = vshrl.u32 %v2420, 16
        %v2469 = vrot.slane %v2467, 4
        %v2470 = vshll.u32 %v2420, 16
        %v2472 = vrot.slane %v2470, 5
        %v2473 = vor.u32 %v2469, %v2472
        %v2474 = vrot.slane %v2473, 4
        %v2476 = vshll.u32 %v2421, 16
        %v2478 = vrot.slane %v2476, 5
        %v2479 = vsel %vm436, %v2474, %v2478
        %v2480 = vshrl.u32 %v2421, 16
        %v2482 = vrot.slane %v2480, 4
        %v2483 = vor.u32 %v2482, %v2478
        %v2484 = vrot.slane %v2483, 4
        %v2486 = vshll.u32 %v2435, 16
        %v2488 = vrot.slane %v2486, 5
        %v2489 = vsel %vm436, %v2484, %v2488
        %v2491 = vshrl.u32 %v2422, 16
        %v2493 = vrot.slane %v2491, 4
        %v2494 = vshll.u32 %v2422, 16
        %v2496 = vrot.slane %v2494, 5
        %v2497 = vor.u32 %v2493, %v2496
        %v2498 = vrot.slane %v2497, 4
        %v2500 = vshll.u32 %v2423, 16
        %v2502 = vrot.slane %v2500, 5
        %v2503 = vsel %vm436, %v2498, %v2502
        %v2504 = vshrl.u32 %v2423, 16
        %v2506 = vrot.slane %v2504, 4
        %v2507 = vor.u32 %v2506, %v2502
        %v2508 = vrot.slane %v2507, 4
        %v2510 = vshll.u32 %v2436, 16
        %v2512 = vrot.slane %v2510, 5
        %v2513 = vsel %vm436, %v2508, %v2512
        %v2515 = vshrl.u32 %v2424, 16
        %v2517 = vrot.slane %v2515, 4
        %v2518 = vshll.u32 %v2424, 16
        %v2520 = vrot.slane %v2518, 5
        %v2521 = vor.u32 %v2517, %v2520
        %v2522 = vrot.slane %v2521, 4
        %v2524 = vshll.u32 %v2425, 16
        %v2526 = vrot.slane %v2524, 5
        %v2527 = vsel %vm436, %v2522, %v2526
        %v2528 = vshrl.u32 %v2425, 16
        %v2530 = vrot.slane %v2528, 4
        %v2531 = vor.u32 %v2530, %v2526
        %v2532 = vrot.slane %v2531, 4
        %v2534 = vshll.u32 %v2437, 16
        %v2536 = vrot.slane %v2534, 5
        %v2537 = vsel %vm436, %v2532, %v2536
        %v2539 = vshrl.u32 %v2426, 16
        %v2541 = vrot.slane %v2539, 4
        %v2542 = vshll.u32 %v2426, 16
        %v2544 = vrot.slane %v2542, 5
        %v2545 = vor.u32 %v2541, %v2544
        %v2546 = vrot.slane %v2545, 4
        %v2548 = vshll.u32 %v2427, 16
        %v2550 = vrot.slane %v2548, 5
        %v2551 = vsel %vm436, %v2546, %v2550
        %v2552 = vshrl.u32 %v2427, 16
        %v2554 = vrot.slane %v2552, 4
        %v2555 = vor.u32 %v2554, %v2550
        %v2556 = vrot.slane %v2555, 4
        %v2558 = vshll.u32 %v2438, 16
        %v2560 = vrot.slane %v2558, 5
        %v2561 = vsel %vm436, %v2556, %v2560
        %v2563 = vshrl.u32 %v2428, 16
        %v2565 = vrot.slane %v2563, 4
        %v2566 = vshll.u32 %v2428, 16
        %v2568 = vrot.slane %v2566, 5
        %v2569 = vor.u32 %v2565, %v2568
        %v2570 = vrot.slane %v2569, 4
        %v2572 = vshll.u32 %v2429, 16
        %v2574 = vrot.slane %v2572, 5
        %v2575 = vsel %vm436, %v2570, %v2574
        %v2576 = vshrl.u32 %v2429, 16
        %v2578 = vrot.slane %v2576, 4
        %v2579 = vor.u32 %v2578, %v2574
        %v2580 = vrot.slane %v2579, 4
        %v2582 = vshll.u32 %v2439, 16
        %v2584 = vrot.slane %v2582, 5
        %v2585 = vsel %vm436, %v2580, %v2584
        %v2587 = vshrl.u32 %v2430, 16
        %v2589 = vrot.slane %v2587, 4
        %v2590 = vshll.u32 %v2430, 16
        %v2592 = vrot.slane %v2590, 5
        %v2593 = vor.u32 %v2589, %v2592
        %v2594 = vrot.slane %v2593, 4
        %v2596 = vshll.u32 %v2431, 16
        %v2598 = vrot.slane %v2596, 5
        %v2599 = vsel %vm436, %v2594, %v2598
        %v2600 = vshrl.u32 %v2431, 16
        %v2602 = vrot.slane %v2600, 4
        %v2603 = vor.u32 %v2602, %v2598
        %v2604 = vrot.slane %v2603, 4
        %v2606 = vshll.u32 %v2440, 16
        %v2608 = vrot.slane %v2606, 5
        %v2609 = vsel %vm436, %v2604, %v2608
        %v2611 = vshrl.u32 %v2432, 16
        %v2613 = vrot.slane %v2611, 4
        %v2614 = vshll.u32 %v2432, 16
        %v2616 = vrot.slane %v2614, 5
        %v2617 = vor.u32 %v2613, %v2616
        %v2618 = vrot.slane %v2617, 4
        %v2620 = vshll.u32 %v2433, 16
        %v2622 = vrot.slane %v2620, 5
        %v2623 = vsel %vm436, %v2618, %v2622
        %v2624 = vshrl.u32 %v2433, 16
        %v2626 = vrot.slane %v2624, 4
        %v2627 = vor.u32 %v2626, %v2622
        %v2628 = vrot.slane %v2627, 4
        %v2630 = vshll.u32 %v2441, 16
        %v2632 = vrot.slane %v2630, 5
        %v2633 = vsel %vm436, %v2628, %v2632
        %v2634 = vld [vmem:[%s2417] sm:$0xe]
        %v2635 = vld [vmem:[%s2417 + $0xc] sm:$0xe]
        %v2636 = vld [vmem:[%s2417 + $0x18] sm:$0xe]
        %v2637 = vld [vmem:[%s2417 + $0x24] sm:$0xe]
        %v2638 = vld [vmem:[%s2417 + $0x30] sm:$0xe]
        %v2639 = vld [vmem:[%s2417 + $0x3c] sm:$0xe]
        %v2640 = vld [vmem:[%s2417 + $0x48] sm:$0xe]
        %v2641 = vld [vmem:[%s2417 + $0x54] sm:$0xe]
        %v2666 = vrot.slane %v2634, 5
        %v2667 = vrot.slane %v2666, 4
        %v2668 = vrot.slane %v2419, 5
        %v2669 = vsel %vm709, %v2667, %v2668
        %v2670 = vrot.slane %v2668, 4
        %v2671 = vrot.slane %v2434, 5
        %v2672 = vsel %vm709, %v2670, %v2671
        %v2673 = vrot.slane %v2635, 5
        %v2674 = vrot.slane %v2673, 4
        %v2675 = vrot.slane %v2421, 5
        %v2676 = vsel %vm709, %v2674, %v2675
        %v2677 = vrot.slane %v2675, 4
        %v2678 = vrot.slane %v2435, 5
        %v2679 = vsel %vm709, %v2677, %v2678
        %v2680 = vrot.slane %v2636, 5
        %v2681 = vrot.slane %v2680, 4
        %v2682 = vrot.slane %v2423, 5
        %v2683 = vsel %vm709, %v2681, %v2682
        %v2684 = vrot.slane %v2682, 4
        %v2685 = vrot.slane %v2436, 5
        %v2686 = vsel %vm709, %v2684, %v2685
        %v2687 = vrot.slane %v2637, 5
        %v2688 = vrot.slane %v2687, 4
        %v2689 = vrot.slane %v2425, 5
        %v2690 = vsel %vm709, %v2688, %v2689
        %v2691 = vrot.slane %v2689, 4
        %v2692 = vrot.slane %v2437, 5
        %v2693 = vsel %vm709, %v2691, %v2692
        %v2694 = vrot.slane %v2638, 5
        %v2695 = vrot.slane %v2694, 4
        %v2696 = vrot.slane %v2427, 5
        %v2697 = vsel %vm709, %v2695, %v2696
        %v2698 = vrot.slane %v2696, 4
        %v2699 = vrot.slane %v2438, 5
        %v2700 = vsel %vm709, %v2698, %v2699
        %v2701 = vrot.slane %v2639, 5
        %v2702 = vrot.slane %v2701, 4
        %v2703 = vrot.slane %v2429, 5
        %v2704 = vsel %vm709, %v2702, %v2703
        %v2705 = vrot.slane %v2703, 4
        %v2706 = vrot.slane %v2439, 5
        %v2707 = vsel %vm709, %v2705, %v2706
        %v2708 = vrot.slane %v2640, 5
        %v2709 = vrot.slane %v2708, 4
        %v2710 = vrot.slane %v2431, 5
        %v2711 = vsel %vm709, %v2709, %v2710
        %v2712 = vrot.slane %v2710, 4
        %v2713 = vrot.slane %v2440, 5
        %v2714 = vsel %vm709, %v2712, %v2713
        %v2715 = vrot.slane %v2641, 5
        %v2716 = vrot.slane %v2715, 4
        %v2717 = vrot.slane %v2433, 5
        %v2718 = vsel %vm709, %v2716, %v2717
        %v2719 = vrot.slane %v2717, 4
        %v2720 = vrot.slane %v2441, 5
        %v2721 = vsel %vm709, %v2719, %v2720
        %v2730 = vunpack.c.l.b16 %v2418
        %v2731 = vunpack.c.l.b16 %v2419
        %v2732 = vunpack.c.l.b16 %v2420
        %v2733 = vunpack.c.l.b16 %v2421
        %v2734 = vunpack.c.l.b16 %v2422
        %v2735 = vunpack.c.l.b16 %v2423
        %v2736 = vunpack.c.l.b16 %v2424
        %v2737 = vunpack.c.l.b16 %v2425
        %v2738 = vunpack.c.l.b16 %v2426
        %v2739 = vunpack.c.l.b16 %v2427
        %v2740 = vunpack.c.l.b16 %v2428
        %v2741 = vunpack.c.l.b16 %v2429
        %v2742 = vunpack.c.l.b16 %v2430
        %v2743 = vunpack.c.l.b16 %v2431
        %v2744 = vunpack.c.l.b16 %v2432
        %v2745 = vunpack.c.l.b16 %v2433
        %v2746 = vpack.c.b16 %v2731, %v2730
        %v2747 = vpack.c.b16 %v2733, %v2732
        %v2748 = vpack.c.b16 %v2735, %v2734
        %v2749 = vpack.c.b16 %v2737, %v2736
        %v2750 = vpack.c.b16 %v2739, %v2738
        %v2751 = vpack.c.b16 %v2741, %v2740
        %v2752 = vpack.c.b16 %v2743, %v2742
        %v2753 = vpack.c.b16 %v2745, %v2744
        %v2762 = vunpack.c.l.b16 %v2455
        %v2763 = vunpack.c.l.b16 %v2465
        %v2764 = vunpack.c.l.b16 %v2479
        %v2765 = vunpack.c.l.b16 %v2489
        %v2766 = vunpack.c.l.b16 %v2503
        %v2767 = vunpack.c.l.b16 %v2513
        %v2768 = vunpack.c.l.b16 %v2527
        %v2769 = vunpack.c.l.b16 %v2537
        %v2770 = vunpack.c.l.b16 %v2551
        %v2771 = vunpack.c.l.b16 %v2561
        %v2772 = vunpack.c.l.b16 %v2575
        %v2773 = vunpack.c.l.b16 %v2585
        %v2774 = vunpack.c.l.b16 %v2599
        %v2775 = vunpack.c.l.b16 %v2609
        %v2776 = vunpack.c.l.b16 %v2623
        %v2777 = vunpack.c.l.b16 %v2633
        %v2778 = vpack.c.b16 %v2763, %v2762
        %v2779 = vpack.c.b16 %v2765, %v2764
        %v2780 = vpack.c.b16 %v2767, %v2766
        %v2781 = vpack.c.b16 %v2769, %v2768
        %v2782 = vpack.c.b16 %v2771, %v2770
        %v2783 = vpack.c.b16 %v2773, %v2772
        %v2784 = vpack.c.b16 %v2775, %v2774
        %v2785 = vpack.c.b16 %v2777, %v2776
        %v2794 = vunpack.c.l.b16 %v2669
        %v2795 = vunpack.c.l.b16 %v2672
        %v2796 = vunpack.c.l.b16 %v2676
        %v2797 = vunpack.c.l.b16 %v2679
        %v2798 = vunpack.c.l.b16 %v2683
        %v2799 = vunpack.c.l.b16 %v2686
        %v2800 = vunpack.c.l.b16 %v2690
        %v2801 = vunpack.c.l.b16 %v2693
        %v2802 = vunpack.c.l.b16 %v2697
        %v2803 = vunpack.c.l.b16 %v2700
        %v2804 = vunpack.c.l.b16 %v2704
        %v2805 = vunpack.c.l.b16 %v2707
        %v2806 = vunpack.c.l.b16 %v2711
        %v2807 = vunpack.c.l.b16 %v2714
        %v2808 = vunpack.c.l.b16 %v2718
        %v2809 = vunpack.c.l.b16 %v2721
        %v2810 = vpack.c.b16 %v2795, %v2794
        %v2811 = vpack.c.b16 %v2797, %v2796
        %v2812 = vpack.c.b16 %v2799, %v2798
        %v2813 = vpack.c.b16 %v2801, %v2800
        %v2814 = vpack.c.b16 %v2803, %v2802
        %v2815 = vpack.c.b16 %v2805, %v2804
        %v2816 = vpack.c.b16 %v2807, %v2806
        %v2817 = vpack.c.b16 %v2809, %v2808
        %s2826 = scalar_lea.vmem %s6, 24
        %v2827 = vld [vmem:[%s2826] sm:$0xff]
        %v2828 = vld [vmem:[%s2826 + $0x8] sm:$0xf]
        %v2829 = vld [vmem:[%s2826 + $0xc] sm:$0xff]
        %v2830 = vld [vmem:[%s2826 + $0x14] sm:$0xf]
        %v2835 = vunpack.c.l.b16 %v2827
        %v2836 = vunpack.c.h.b16 %v2827
        %v2837 = vunpack.c.l.b16 %v2828
        %v2838 = vunpack.c.l.b16 %v2829
        %v2839 = vunpack.c.h.b16 %v2829
        %v2840 = vunpack.c.l.b16 %v2830
        %v2841 = vpack.c.b16 %v2838, %v2835
        %v2842 = vpack.c.b16 %v2839, %v2836
        %v2843 = vpack.c.b16 %v2840, %v2837
        %2847 = vmatprep.subr.bf16.mxu0 %v2785
        %2848 = vmatpush1.bf16.xpose.msra.mxu0 %v2753
        %2849 = vmatprep.subr.bf16.mxu0 %v2784
        %2850 = vmatpush1.bf16.xpose.msra.mxu0 %v2752
        %2851 = vmatprep.subr.bf16.mxu0 %v2783
        %2852 = vmatpush1.bf16.xpose.msra.mxu0 %v2751
        %2853 = vmatprep.subr.bf16.mxu0 %v2782
        %2854 = vmatpush1.bf16.xpose.msra.mxu0 %v2750
        %2855 = vmatprep.subr.bf16.mxu0 %v2781
        %2856 = vmatpush1.bf16.xpose.msra.mxu0 %v2749
        %2857 = vmatprep.subr.bf16.mxu0 %v2780
        %2858 = vmatpush1.bf16.xpose.msra.mxu0 %v2748
        %2859 = vmatprep.subr.bf16.mxu0 %v2779
        %2860 = vmatpush1.bf16.xpose.msra.mxu0 %v2747
        %2861 = vmatprep.subr.bf16.mxu0 %v2778
        %2862 = vmatpush1.bf16.xpose.msra.mxu0 %v2746
        %2863 = vmatprep.subr.bf16.mxu0 0
        %2864 = vmatpush2.bf16.xpose.msra.mxu0 0
        %2865 = vmatprep.subr.bf16.mxu0 0
        %2866 = vmatpush2.bf16.xpose.msra.mxu0 0
        %2867 = vmatprep.subr.bf16.mxu0 0
        %2868 = vmatpush2.bf16.xpose.msra.mxu0 0
        %2869 = vmatprep.subr.bf16.mxu0 0
        %2870 = vmatpush2.bf16.xpose.msra.mxu0 0
        %2871 = vmatprep.subr.bf16.mxu0 0
        %2872 = vmatpush2.bf16.xpose.msra.mxu0 0
        %2873 = vmatprep.subr.bf16.mxu0 0
        %2874 = vmatpush2.bf16.xpose.msra.mxu0 0
        %2875 = vmatprep.subr.bf16.mxu0 0
        %2876 = vmatpush2.bf16.xpose.msra.mxu0 0
        %2877 = vmatprep.subr.bf16.mxu0 0
        %2878 = vmatpush2.bf16.xpose.msra.mxu0 0
        %2879 = vmatprep.mubr.bf16.mxu0 %v2842
        %2880 = vmatmul.mubr.bf16.gmra.mxu0 %v2841
        %v2881 = vpop.f32.mrf.mxu0
        %v2882 = vadd.f32 0.0, %v2881
        %v2883 = vpop.f32.mrf.mxu0
        %v2884 = vpop.f32.mrf.mxu0
        %v2885 = vadd.f32 0.0, %v2884
        %v2886 = vpop.f32.mrf.mxu0
        %2887 = vdwg.mxu0
        %2888 = vmatprep.subr.bf16.mxu0 0
        %2889 = vmatpush1.bf16.xpose.msra.mxu0 %v2817
        %2890 = vmatprep.subr.bf16.mxu0 0
        %2891 = vmatpush1.bf16.xpose.msra.mxu0 %v2816
        %2892 = vmatprep.subr.bf16.mxu0 0
        %2893 = vmatpush1.bf16.xpose.msra.mxu0 %v2815
        %2894 = vmatprep.subr.bf16.mxu0 0
        %2895 = vmatpush1.bf16.xpose.msra.mxu0 %v2814
        %2896 = vmatprep.subr.bf16.mxu0 0
        %2897 = vmatpush1.bf16.xpose.msra.mxu0 %v2813
        %2898 = vmatprep.subr.bf16.mxu0 0
        %2899 = vmatpush1.bf16.xpose.msra.mxu0 %v2812
        %2900 = vmatprep.subr.bf16.mxu0 0
        %2901 = vmatpush1.bf16.xpose.msra.mxu0 %v2811
        %2902 = vmatprep.subr.bf16.mxu0 0
        %2903 = vmatpush1.bf16.xpose.msra.mxu0 %v2810
        %2904 = vmatprep.subr.bf16.mxu0 0
        %2905 = vmatpush2.bf16.xpose.msra.mxu0 0
        %2906 = vmatprep.subr.bf16.mxu0 0
        %2907 = vmatpush2.bf16.xpose.msra.mxu0 0
        %2908 = vmatprep.subr.bf16.mxu0 0
        %2909 = vmatpush2.bf16.xpose.msra.mxu0 0
        %2910 = vmatprep.subr.bf16.mxu0 0
        %2911 = vmatpush2.bf16.xpose.msra.mxu0 0
        %2912 = vmatprep.subr.bf16.mxu0 0
        %2913 = vmatpush2.bf16.xpose.msra.mxu0 0
        %2914 = vmatprep.subr.bf16.mxu0 0
        %2915 = vmatpush2.bf16.xpose.msra.mxu0 0
        %2916 = vmatprep.subr.bf16.mxu0 0
        %2917 = vmatpush2.bf16.xpose.msra.mxu0 0
        %2918 = vmatprep.subr.bf16.mxu0 0
        %2919 = vmatpush2.bf16.xpose.msra.mxu0 0
        %2920 = vmatprep.mubr.bf16.mxu0 0
        %2921 = vmatmul.mubr.bf16.gmra.mxu0 %v2843
        %v2922 = vpop.f32.mrf.mxu0
        %v2923 = vadd.f32 %v2882, %v2922
        %v2924 = vpop.f32.mrf.mxu0
        %v2925 = vpop.f32.mrf.mxu0
        %v2926 = vadd.f32 %v2885, %v2925
        %v2927 = vpop.f32.mrf.mxu0
        %2928 = vdwg.mxu0
        %v2929 = vadd.f32 %v2415, %v2923
        %v2930 = vadd.f32 %v2416, %v2926
        %s2931 = scalar_lea.vmem [#allocation2], 24
        %v2932 = vld [vmem:[%s2931] sm:$0xf]
        %v2933 = vld [vmem:[%s2931 + $0x4] sm:$0xf]
        %v2934 = vld [vmem:[%s2931 + $0xc] sm:$0xf]
        %v2935 = vld [vmem:[%s2931 + $0x10] sm:$0xf]
        %v2936 = vld [vmem:[%s2931 + $0x18] sm:$0xf]
        %v2937 = vld [vmem:[%s2931 + $0x1c] sm:$0xf]
        %v2938 = vld [vmem:[%s2931 + $0x24] sm:$0xf]
        %v2939 = vld [vmem:[%s2931 + $0x28] sm:$0xf]
        %v2940 = vld [vmem:[%s2931 + $0x30] sm:$0xf]
        %v2941 = vld [vmem:[%s2931 + $0x34] sm:$0xf]
        %v2942 = vld [vmem:[%s2931 + $0x3c] sm:$0xf]
        %v2943 = vld [vmem:[%s2931 + $0x40] sm:$0xf]
        %v2944 = vld [vmem:[%s2931 + $0x48] sm:$0xf]
        %v2945 = vld [vmem:[%s2931 + $0x4c] sm:$0xf]
        %v2946 = vld [vmem:[%s2931 + $0x54] sm:$0xf]
        %v2947 = vld [vmem:[%s2931 + $0x58] sm:$0xf]
        %v2948 = vld [vmem:[%s2931 + $0x8] sm:$0x1]
        %v2949 = vld [vmem:[%s2931 + $0x14] sm:$0x1]
        %v2950 = vld [vmem:[%s2931 + $0x20] sm:$0x1]
        %v2951 = vld [vmem:[%s2931 + $0x2c] sm:$0x1]
        %v2952 = vld [vmem:[%s2931 + $0x38] sm:$0x1]
        %v2953 = vld [vmem:[%s2931 + $0x44] sm:$0x1]
        %v2954 = vld [vmem:[%s2931 + $0x50] sm:$0x1]
        %v2955 = vld [vmem:[%s2931 + $0x5c] sm:$0x1]
        %v2957 = vshrl.u32 %v2932, 16
        %v2959 = vrot.slane %v2957, 4
        %v2960 = vshll.u32 %v2932, 16
        %v2962 = vrot.slane %v2960, 5
        %v2963 = vor.u32 %v2959, %v2962
        %v2964 = vrot.slane %v2963, 4
        %v2966 = vshll.u32 %v2933, 16
        %v2968 = vrot.slane %v2966, 5
        %v2969 = vsel %vm436, %v2964, %v2968
        %v2970 = vshrl.u32 %v2933, 16
        %v2972 = vrot.slane %v2970, 4
        %v2973 = vor.u32 %v2972, %v2968
        %v2974 = vrot.slane %v2973, 4
        %v2976 = vshll.u32 %v2948, 16
        %v2978 = vrot.slane %v2976, 5
        %v2979 = vsel %vm436, %v2974, %v2978
        %v2981 = vshrl.u32 %v2934, 16
        %v2983 = vrot.slane %v2981, 4
        %v2984 = vshll.u32 %v2934, 16
        %v2986 = vrot.slane %v2984, 5
        %v2987 = vor.u32 %v2983, %v2986
        %v2988 = vrot.slane %v2987, 4
        %v2990 = vshll.u32 %v2935, 16
        %v2992 = vrot.slane %v2990, 5
        %v2993 = vsel %vm436, %v2988, %v2992
        %v2994 = vshrl.u32 %v2935, 16
        %v2996 = vrot.slane %v2994, 4
        %v2997 = vor.u32 %v2996, %v2992
        %v2998 = vrot.slane %v2997, 4
        %v3000 = vshll.u32 %v2949, 16
        %v3002 = vrot.slane %v3000, 5
        %v3003 = vsel %vm436, %v2998, %v3002
        %v3005 = vshrl.u32 %v2936, 16
        %v3007 = vrot.slane %v3005, 4
        %v3008 = vshll.u32 %v2936, 16
        %v3010 = vrot.slane %v3008, 5
        %v3011 = vor.u32 %v3007, %v3010
        %v3012 = vrot.slane %v3011, 4
        %v3014 = vshll.u32 %v2937, 16
        %v3016 = vrot.slane %v3014, 5
        %v3017 = vsel %vm436, %v3012, %v3016
        %v3018 = vshrl.u32 %v2937, 16
        %v3020 = vrot.slane %v3018, 4
        %v3021 = vor.u32 %v3020, %v3016
        %v3022 = vrot.slane %v3021, 4
        %v3024 = vshll.u32 %v2950, 16
        %v3026 = vrot.slane %v3024, 5
        %v3027 = vsel %vm436, %v3022, %v3026
        %v3029 = vshrl.u32 %v2938, 16
        %v3031 = vrot.slane %v3029, 4
        %v3032 = vshll.u32 %v2938, 16
        %v3034 = vrot.slane %v3032, 5
        %v3035 = vor.u32 %v3031, %v3034
        %v3036 = vrot.slane %v3035, 4
        %v3038 = vshll.u32 %v2939, 16
        %v3040 = vrot.slane %v3038, 5
        %v3041 = vsel %vm436, %v3036, %v3040
        %v3042 = vshrl.u32 %v2939, 16
        %v3044 = vrot.slane %v3042, 4
        %v3045 = vor.u32 %v3044, %v3040
        %v3046 = vrot.slane %v3045, 4
        %v3048 = vshll.u32 %v2951, 16
        %v3050 = vrot.slane %v3048, 5
        %v3051 = vsel %vm436, %v3046, %v3050
        %v3053 = vshrl.u32 %v2940, 16
        %v3055 = vrot.slane %v3053, 4
        %v3056 = vshll.u32 %v2940, 16
        %v3058 = vrot.slane %v3056, 5
        %v3059 = vor.u32 %v3055, %v3058
        %v3060 = vrot.slane %v3059, 4
        %v3062 = vshll.u32 %v2941, 16
        %v3064 = vrot.slane %v3062, 5
        %v3065 = vsel %vm436, %v3060, %v3064
        %v3066 = vshrl.u32 %v2941, 16
        %v3068 = vrot.slane %v3066, 4
        %v3069 = vor.u32 %v3068, %v3064
        %v3070 = vrot.slane %v3069, 4
        %v3072 = vshll.u32 %v2952, 16
        %v3074 = vrot.slane %v3072, 5
        %v3075 = vsel %vm436, %v3070, %v3074
        %v3077 = vshrl.u32 %v2942, 16
        %v3079 = vrot.slane %v3077, 4
        %v3080 = vshll.u32 %v2942, 16
        %v3082 = vrot.slane %v3080, 5
        %v3083 = vor.u32 %v3079, %v3082
        %v3084 = vrot.slane %v3083, 4
        %v3086 = vshll.u32 %v2943, 16
        %v3088 = vrot.slane %v3086, 5
        %v3089 = vsel %vm436, %v3084, %v3088
        %v3090 = vshrl.u32 %v2943, 16
        %v3092 = vrot.slane %v3090, 4
        %v3093 = vor.u32 %v3092, %v3088
        %v3094 = vrot.slane %v3093, 4
        %v3096 = vshll.u32 %v2953, 16
        %v3098 = vrot.slane %v3096, 5
        %v3099 = vsel %vm436, %v3094, %v3098
        %v3101 = vshrl.u32 %v2944, 16
        %v3103 = vrot.slane %v3101, 4
        %v3104 = vshll.u32 %v2944, 16
        %v3106 = vrot.slane %v3104, 5
        %v3107 = vor.u32 %v3103, %v3106
        %v3108 = vrot.slane %v3107, 4
        %v3110 = vshll.u32 %v2945, 16
        %v3112 = vrot.slane %v3110, 5
        %v3113 = vsel %vm436, %v3108, %v3112
        %v3114 = vshrl.u32 %v2945, 16
        %v3116 = vrot.slane %v3114, 4
        %v3117 = vor.u32 %v3116, %v3112
        %v3118 = vrot.slane %v3117, 4
        %v3120 = vshll.u32 %v2954, 16
        %v3122 = vrot.slane %v3120, 5
        %v3123 = vsel %vm436, %v3118, %v3122
        %v3125 = vshrl.u32 %v2946, 16
        %v3127 = vrot.slane %v3125, 4
        %v3128 = vshll.u32 %v2946, 16
        %v3130 = vrot.slane %v3128, 5
        %v3131 = vor.u32 %v3127, %v3130
        %v3132 = vrot.slane %v3131, 4
        %v3134 = vshll.u32 %v2947, 16
        %v3136 = vrot.slane %v3134, 5
        %v3137 = vsel %vm436, %v3132, %v3136
        %v3138 = vshrl.u32 %v2947, 16
        %v3140 = vrot.slane %v3138, 4
        %v3141 = vor.u32 %v3140, %v3136
        %v3142 = vrot.slane %v3141, 4
        %v3144 = vshll.u32 %v2955, 16
        %v3146 = vrot.slane %v3144, 5
        %v3147 = vsel %vm436, %v3142, %v3146
        %v3148 = vld [vmem:[%s2931] sm:$0xe]
        %v3149 = vld [vmem:[%s2931 + $0xc] sm:$0xe]
        %v3150 = vld [vmem:[%s2931 + $0x18] sm:$0xe]
        %v3151 = vld [vmem:[%s2931 + $0x24] sm:$0xe]
        %v3152 = vld [vmem:[%s2931 + $0x30] sm:$0xe]
        %v3153 = vld [vmem:[%s2931 + $0x3c] sm:$0xe]
        %v3154 = vld [vmem:[%s2931 + $0x48] sm:$0xe]
        %v3155 = vld [vmem:[%s2931 + $0x54] sm:$0xe]
        %v3180 = vrot.slane %v3148, 5
        %v3181 = vrot.slane %v3180, 4
        %v3182 = vrot.slane %v2933, 5
        %v3183 = vsel %vm709, %v3181, %v3182
        %v3184 = vrot.slane %v3182, 4
        %v3185 = vrot.slane %v2948, 5
        %v3186 = vsel %vm709, %v3184, %v3185
        %v3187 = vrot.slane %v3149, 5
        %v3188 = vrot.slane %v3187, 4
        %v3189 = vrot.slane %v2935, 5
        %v3190 = vsel %vm709, %v3188, %v3189
        %v3191 = vrot.slane %v3189, 4
        %v3192 = vrot.slane %v2949, 5
        %v3193 = vsel %vm709, %v3191, %v3192
        %v3194 = vrot.slane %v3150, 5
        %v3195 = vrot.slane %v3194, 4
        %v3196 = vrot.slane %v2937, 5
        %v3197 = vsel %vm709, %v3195, %v3196
        %v3198 = vrot.slane %v3196, 4
        %v3199 = vrot.slane %v2950, 5
        %v3200 = vsel %vm709, %v3198, %v3199
        %v3201 = vrot.slane %v3151, 5
        %v3202 = vrot.slane %v3201, 4
        %v3203 = vrot.slane %v2939, 5
        %v3204 = vsel %vm709, %v3202, %v3203
        %v3205 = vrot.slane %v3203, 4
        %v3206 = vrot.slane %v2951, 5
        %v3207 = vsel %vm709, %v3205, %v3206
        %v3208 = vrot.slane %v3152, 5
        %v3209 = vrot.slane %v3208, 4
        %v3210 = vrot.slane %v2941, 5
        %v3211 = vsel %vm709, %v3209, %v3210
        %v3212 = vrot.slane %v3210, 4
        %v3213 = vrot.slane %v2952, 5
        %v3214 = vsel %vm709, %v3212, %v3213
        %v3215 = vrot.slane %v3153, 5
        %v3216 = vrot.slane %v3215, 4
        %v3217 = vrot.slane %v2943, 5
        %v3218 = vsel %vm709, %v3216, %v3217
        %v3219 = vrot.slane %v3217, 4
        %v3220 = vrot.slane %v2953, 5
        %v3221 = vsel %vm709, %v3219, %v3220
        %v3222 = vrot.slane %v3154, 5
        %v3223 = vrot.slane %v3222, 4
        %v3224 = vrot.slane %v2945, 5
        %v3225 = vsel %vm709, %v3223, %v3224
        %v3226 = vrot.slane %v3224, 4
        %v3227 = vrot.slane %v2954, 5
        %v3228 = vsel %vm709, %v3226, %v3227
        %v3229 = vrot.slane %v3155, 5
        %v3230 = vrot.slane %v3229, 4
        %v3231 = vrot.slane %v2947, 5
        %v3232 = vsel %vm709, %v3230, %v3231
        %v3233 = vrot.slane %v3231, 4
        %v3234 = vrot.slane %v2955, 5
        %v3235 = vsel %vm709, %v3233, %v3234
        %v3244 = vunpack.c.l.b16 %v2932
        %v3245 = vunpack.c.l.b16 %v2933
        %v3246 = vunpack.c.l.b16 %v2934
        %v3247 = vunpack.c.l.b16 %v2935
        %v3248 = vunpack.c.l.b16 %v2936
        %v3249 = vunpack.c.l.b16 %v2937
        %v3250 = vunpack.c.l.b16 %v2938
        %v3251 = vunpack.c.l.b16 %v2939
        %v3252 = vunpack.c.l.b16 %v2940
        %v3253 = vunpack.c.l.b16 %v2941
        %v3254 = vunpack.c.l.b16 %v2942
        %v3255 = vunpack.c.l.b16 %v2943
        %v3256 = vunpack.c.l.b16 %v2944
        %v3257 = vunpack.c.l.b16 %v2945
        %v3258 = vunpack.c.l.b16 %v2946
        %v3259 = vunpack.c.l.b16 %v2947
        %v3260 = vpack.c.b16 %v3245, %v3244
        %v3261 = vpack.c.b16 %v3247, %v3246
        %v3262 = vpack.c.b16 %v3249, %v3248
        %v3263 = vpack.c.b16 %v3251, %v3250
        %v3264 = vpack.c.b16 %v3253, %v3252
        %v3265 = vpack.c.b16 %v3255, %v3254
        %v3266 = vpack.c.b16 %v3257, %v3256
        %v3267 = vpack.c.b16 %v3259, %v3258
        %v3276 = vunpack.c.l.b16 %v2969
        %v3277 = vunpack.c.l.b16 %v2979
        %v3278 = vunpack.c.l.b16 %v2993
        %v3279 = vunpack.c.l.b16 %v3003
        %v3280 = vunpack.c.l.b16 %v3017
        %v3281 = vunpack.c.l.b16 %v3027
        %v3282 = vunpack.c.l.b16 %v3041
        %v3283 = vunpack.c.l.b16 %v3051
        %v3284 = vunpack.c.l.b16 %v3065
        %v3285 = vunpack.c.l.b16 %v3075
        %v3286 = vunpack.c.l.b16 %v3089
        %v3287 = vunpack.c.l.b16 %v3099
        %v3288 = vunpack.c.l.b16 %v3113
        %v3289 = vunpack.c.l.b16 %v3123
        %v3290 = vunpack.c.l.b16 %v3137
        %v3291 = vunpack.c.l.b16 %v3147
        %v3292 = vpack.c.b16 %v3277, %v3276
        %v3293 = vpack.c.b16 %v3279, %v3278
        %v3294 = vpack.c.b16 %v3281, %v3280
        %v3295 = vpack.c.b16 %v3283, %v3282
        %v3296 = vpack.c.b16 %v3285, %v3284
        %v3297 = vpack.c.b16 %v3287, %v3286
        %v3298 = vpack.c.b16 %v3289, %v3288
        %v3299 = vpack.c.b16 %v3291, %v3290
        %v3308 = vunpack.c.l.b16 %v3183
        %v3309 = vunpack.c.l.b16 %v3186
        %v3310 = vunpack.c.l.b16 %v3190
        %v3311 = vunpack.c.l.b16 %v3193
        %v3312 = vunpack.c.l.b16 %v3197
        %v3313 = vunpack.c.l.b16 %v3200
        %v3314 = vunpack.c.l.b16 %v3204
        %v3315 = vunpack.c.l.b16 %v3207
        %v3316 = vunpack.c.l.b16 %v3211
        %v3317 = vunpack.c.l.b16 %v3214
        %v3318 = vunpack.c.l.b16 %v3218
        %v3319 = vunpack.c.l.b16 %v3221
        %v3320 = vunpack.c.l.b16 %v3225
        %v3321 = vunpack.c.l.b16 %v3228
        %v3322 = vunpack.c.l.b16 %v3232
        %v3323 = vunpack.c.l.b16 %v3235
        %v3324 = vpack.c.b16 %v3309, %v3308
        %v3325 = vpack.c.b16 %v3311, %v3310
        %v3326 = vpack.c.b16 %v3313, %v3312
        %v3327 = vpack.c.b16 %v3315, %v3314
        %v3328 = vpack.c.b16 %v3317, %v3316
        %v3329 = vpack.c.b16 %v3319, %v3318
        %v3330 = vpack.c.b16 %v3321, %v3320
        %v3331 = vpack.c.b16 %v3323, %v3322
        %s3340 = scalar_lea.vmem %s6, 48
        %v3341 = vld [vmem:[%s3340] sm:$0xff]
        %v3342 = vld [vmem:[%s3340 + $0x8] sm:$0xf]
        %v3343 = vld [vmem:[%s3340 + $0xc] sm:$0xff]
        %v3344 = vld [vmem:[%s3340 + $0x14] sm:$0xf]
        %v3349 = vunpack.c.l.b16 %v3341
        %v3350 = vunpack.c.h.b16 %v3341
        %v3351 = vunpack.c.l.b16 %v3342
        %v3352 = vunpack.c.l.b16 %v3343
        %v3353 = vunpack.c.h.b16 %v3343
        %v3354 = vunpack.c.l.b16 %v3344
        %v3355 = vpack.c.b16 %v3352, %v3349
        %v3356 = vpack.c.b16 %v3353, %v3350
        %v3357 = vpack.c.b16 %v3354, %v3351
        %3361 = vmatprep.subr.bf16.mxu0 %v3299
        %3362 = vmatpush1.bf16.xpose.msra.mxu0 %v3267
        %3363 = vmatprep.subr.bf16.mxu0 %v3298
        %3364 = vmatpush1.bf16.xpose.msra.mxu0 %v3266
        %3365 = vmatprep.subr.bf16.mxu0 %v3297
        %3366 = vmatpush1.bf16.xpose.msra.mxu0 %v3265
        %3367 = vmatprep.subr.bf16.mxu0 %v3296
        %3368 = vmatpush1.bf16.xpose.msra.mxu0 %v3264
        %3369 = vmatprep.subr.bf16.mxu0 %v3295
        %3370 = vmatpush1.bf16.xpose.msra.mxu0 %v3263
        %3371 = vmatprep.subr.bf16.mxu0 %v3294
        %3372 = vmatpush1.bf16.xpose.msra.mxu0 %v3262
        %3373 = vmatprep.subr.bf16.mxu0 %v3293
        %3374 = vmatpush1.bf16.xpose.msra.mxu0 %v3261
        %3375 = vmatprep.subr.bf16.mxu0 %v3292
        %3376 = vmatpush1.bf16.xpose.msra.mxu0 %v3260
        %3377 = vmatprep.subr.bf16.mxu0 0
        %3378 = vmatpush2.bf16.xpose.msra.mxu0 0
        %3379 = vmatprep.subr.bf16.mxu0 0
        %3380 = vmatpush2.bf16.xpose.msra.mxu0 0
        %3381 = vmatprep.subr.bf16.mxu0 0
        %3382 = vmatpush2.bf16.xpose.msra.mxu0 0
        %3383 = vmatprep.subr.bf16.mxu0 0
        %3384 = vmatpush2.bf16.xpose.msra.mxu0 0
        %3385 = vmatprep.subr.bf16.mxu0 0
        %3386 = vmatpush2.bf16.xpose.msra.mxu0 0
        %3387 = vmatprep.subr.bf16.mxu0 0
        %3388 = vmatpush2.bf16.xpose.msra.mxu0 0
        %3389 = vmatprep.subr.bf16.mxu0 0
        %3390 = vmatpush2.bf16.xpose.msra.mxu0 0
        %3391 = vmatprep.subr.bf16.mxu0 0
        %3392 = vmatpush2.bf16.xpose.msra.mxu0 0
        %3393 = vmatprep.mubr.bf16.mxu0 %v3356
        %3394 = vmatmul.mubr.bf16.gmra.mxu0 %v3355
        %v3395 = vpop.f32.mrf.mxu0
        %v3396 = vadd.f32 0.0, %v3395
        %v3397 = vpop.f32.mrf.mxu0
        %v3398 = vpop.f32.mrf.mxu0
        %v3399 = vadd.f32 0.0, %v3398
        %v3400 = vpop.f32.mrf.mxu0
        %3401 = vdwg.mxu0
        %3402 = vmatprep.subr.bf16.mxu0 0
        %3403 = vmatpush1.bf16.xpose.msra.mxu0 %v3331
        %3404 = vmatprep.subr.bf16.mxu0 0
        %3405 = vmatpush1.bf16.xpose.msra.mxu0 %v3330
        %3406 = vmatprep.subr.bf16.mxu0 0
        %3407 = vmatpush1.bf16.xpose.msra.mxu0 %v3329
        %3408 = vmatprep.subr.bf16.mxu0 0
        %3409 = vmatpush1.bf16.xpose.msra.mxu0 %v3328
        %3410 = vmatprep.subr.bf16.mxu0 0
        %3411 = vmatpush1.bf16.xpose.msra.mxu0 %v3327
        %3412 = vmatprep.subr.bf16.mxu0 0
        %3413 = vmatpush1.bf16.xpose.msra.mxu0 %v3326
        %3414 = vmatprep.subr.bf16.mxu0 0
        %3415 = vmatpush1.bf16.xpose.msra.mxu0 %v3325
        %3416 = vmatprep.subr.bf16.mxu0 0
        %3417 = vmatpush1.bf16.xpose.msra.mxu0 %v3324
        %3418 = vmatprep.subr.bf16.mxu0 0
        %3419 = vmatpush2.bf16.xpose.msra.mxu0 0
        %3420 = vmatprep.subr.bf16.mxu0 0
        %3421 = vmatpush2.bf16.xpose.msra.mxu0 0
        %3422 = vmatprep.subr.bf16.mxu0 0
        %3423 = vmatpush2.bf16.xpose.msra.mxu0 0
        %3424 = vmatprep.subr.bf16.mxu0 0
        %3425 = vmatpush2.bf16.xpose.msra.mxu0 0
        %3426 = vmatprep.subr.bf16.mxu0 0
        %3427 = vmatpush2.bf16.xpose.msra.mxu0 0
        %3428 = vmatprep.subr.bf16.mxu0 0
        %3429 = vmatpush2.bf16.xpose.msra.mxu0 0
        %3430 = vmatprep.subr.bf16.mxu0 0
        %3431 = vmatpush2.bf16.xpose.msra.mxu0 0
        %3432 = vmatprep.subr.bf16.mxu0 0
        %3433 = vmatpush2.bf16.xpose.msra.mxu0 0
        %3434 = vmatprep.mubr.bf16.mxu0 0
        %3435 = vmatmul.mubr.bf16.gmra.mxu0 %v3357
        %v3436 = vpop.f32.mrf.mxu0
        %v3437 = vadd.f32 %v3396, %v3436
        %v3438 = vpop.f32.mrf.mxu0
        %v3439 = vpop.f32.mrf.mxu0
        %v3440 = vadd.f32 %v3399, %v3439
        %v3441 = vpop.f32.mrf.mxu0
        %3442 = vdwg.mxu0
        %v3443 = vadd.f32 %v2929, %v3437
        %v3444 = vadd.f32 %v2930, %v3440
        %v3445 = vld [vmem:[%s379] sm:$0xff]
        %v3446 = vld [vmem:[%s392] sm:$0xff]
        %3448 = vset.pattern.permute.xlu0 0
        %3449 = vperm.xlu0 %3448, %v3446
        %v3450 = vpop.permute.xlu0 %3449
        %v3452 = vsub.f32 %v3445, %v3450
        %v3453 = vld [vmem:[%s396] sm:$0xff]
        %3455 = vset.pattern.permute.xlu0 0
        %3456 = vperm.xlu0 %3455, %v3453
        %v3457 = vpop.permute.xlu0 %3456
        %v3459 = vmul.f32 %v3452, %v3457
        %v3460 = vadd.f32 %v3443, 1.0
        %v3461 = vmul.f32 %v3459, %v3460
        %v3462 = vadd.f32 %v3461, %v3444
        %3463 = vst [vmem:[%s371] sm:$0xff] %v3462
        %s3464 = sand.u32 %s238, 1
        %s3465 = scalar_lea.sflag [#allocation4], %s3464
        %s3466 = sand.u32 %s238, 1
        %s3467 = smul.addr %s3466, 8
        %s3468 = scalar_lea.vmem [#allocation3], %s3467
        // Predicated region
        $region61: #{tpu_custom_call.1} parent=51 // pred_check
          %p3469 = pneg %p248
        $region62: #{tpu_custom_call.1} parent=51 // pred_check_branch
          %3471 = sbr.rel (%p3469) target = $region64
        $region63: #{tpu_custom_call.1} parent=51 // pred_region
          %s3473 = ssub.s32 128, 128
          %3474 = vsyncadd %s3465, %s3473
          %s3475 = smul.addr %s26, 2
          %s3476 = sadd.s32 %s27, %s3475
          %s3477 = smul.addr %s3476, 128
          %s3478 = scalar_lea.hbm %s8, %s3477
          %s3480 = sshll.u32 %s3468, 4
          %s3481 = int_to_ptr.vmem [resolvable:$true] %s3480
          %3483 = dma.vmem_to_hbm [thread:$0]  %s3481, 128, %s3478, %s3465
        $region64: #{tpu_custom_call.1} parent=51 // pred_fallthru
          _
      $region52: #{tpu_custom_call.1} parent=5 // pred_fallthru
        _
      %p3484 = scmp.le.s32.totalorder 2, %s17
      // Predicated region
      $region65: #{tpu_custom_call.1} parent=5 // pred_check
        %p3485 = pneg %p3484
      $region66: #{tpu_custom_call.1} parent=5 // pred_check_branch
        %3487 = sbr.rel (%p3485) target = $region68
      $region67: #{tpu_custom_call.1} parent=5 // pred_region
        %s3488 = ssub.s32 %s17, 2
        // Predicated region
        $region69: #{tpu_custom_call.1} parent=67 // pred_check
          %p3489 = pneg %p254
        $region70: #{tpu_custom_call.1} parent=67 // pred_check_branch
          %3491 = sbr.rel (%p3489) target = $region72
        $region71: #{tpu_custom_call.1} parent=67 // pred_region
          %s3492 = sand.u32 %s239, 1
          %s3493 = scalar_lea.sflag [#allocation4], %s3492
          %s3494 = sand.u32 %s239, 1
          %s3495 = smul.addr %s3494, 8
          %s3496 = scalar_lea.vmem [#allocation3], %s3495
          %3497 = dma.done %s3493, 128
        $region72: #{tpu_custom_call.1} parent=67 // pred_fallthru
          _
      $region68: #{tpu_custom_call.1} parent=5 // pred_fallthru
        _
    $region6: #{tpu_custom_call.1} parent=1 // loop_footer
      %s21 = sadd.s32 1, %s17
    $region7: #{tpu_custom_call.1} parent=1 // loop_footer_branch
      %16 = sbr.rel target = $region3
    $region8: #{tpu_custom_call.1} parent=1 // loop_exit
      _
    %3498 = vsyncpa [#allocation4], 1
    %s3499 = scalar_lea.sflag [#allocation4], 1
    %3500 = vsyncpa %s3499, 1

</llo_original>
